<compile_context>
chip_gen: v5e
topology: v5e:2x2
jax: 0.10.0
libtpu: 0.0.40
codegen_flags: <defaults>
</compile_context>

<pallas_src>
import functools
import math

import jax
import jax.numpy as jnp
from jax.experimental import pallas as pl
from jax.experimental.pallas import tpu as pltpu  # noqa: F401  (TPU backend)

# ----------------------------- hyper-parameters -----------------------------
PATCH_SIZE = 4
MODEL_DIM = 32
NUM_CLASS = 10
NHEAD = 8
NUM_LAYERS = 2          # constructor arg (kept small for the example)
MAX_TOKEN = 32          # must cover seq_len = 1 + n_patches
D_FF = 2048             # nn.TransformerEncoderLayer default dim_feedforward
HEAD_DIM = MODEL_DIM // NHEAD
LN_EPS = 1e-5
ATTN_SCALE = 1.0 / math.sqrt(HEAD_DIM)

REFS_PER_LAYER = 12


# ------------------------------ fused kernel --------------------------------
def _layernorm(x, g, b):
    mu = jnp.mean(x, axis=-1, keepdims=True)
    xc = x - mu
    var = jnp.mean(xc * xc, axis=-1, keepdims=True)
    return xc * jax.lax.rsqrt(var + LN_EPS) * g + b


def _vit_kernel(*refs, bs, seq, num_layers):
    """Entire ViT forward; every intermediate stays in VMEM."""
    patches_ref, conv_w_ref, emb_add_ref, g2_ref, gt2_ref, gt_ref = refs[:6]
    n_lr = REFS_PER_LAYER * num_layers
    layer_refs = refs[6:6 + n_lr]
    head_g_ref, head_b_ref, head_w_ref, head_bias_ref = refs[6 + n_lr:10 + n_lr]
    out_ref = refs[10 + n_lr]

    f32 = jnp.float32
    bf16 = jnp.bfloat16
    E = MODEL_DIM
    H = NHEAD

    G2 = g2_ref[...]     # (bs*E, bs*H) block-diag head-sum, attn scale folded in
    GT2 = gt2_ref[...]   # (bs*H, bs*E) block-diag head-expand
    GT = gt_ref[...]     # (H, E)       head-expand (for 1/denom broadcast)

    # ---- patch embedding: one (bs*seq, 3*P*P) x (3*P*P, E) matmul.  Row 0 of
    #      each image block is a zero pseudo-patch for the CLS position;
    #      emb_add supplies conv bias + cls token + positional embedding. -----
    x = (jnp.dot(patches_ref[...], conv_w_ref[...], preferred_element_type=f32)
         + emb_add_ref[...])                                    # (bs*seq, E)

    # ---- transformer encoder (batch_first=False: attention over L=bs) -------
    for li in range(num_layers):
        (wqkv_r, bqkv_r, wo_r, bo_r, ln1g_r, ln1b_r,
         w1_r, fb1_r, w2_r, fb2_r, ln2g_r, ln2b_r) = \
            layer_refs[REFS_PER_LAYER * li:REFS_PER_LAYER * (li + 1)]

        # Fused QKV projection over the whole activation slab.
        qkv = jnp.dot(x, wqkv_r[...], preferred_element_type=f32) + bqkv_r[...]
        q = qkv[:, 0:E]
        k = qkv[:, E:2 * E]
        v = qkv[:, 2 * E:3 * E]

        # Lane-pack all (l1, l2) score pairs: one matmul against block-diagonal
        # G2 gives a single (bs*seq, bs*H) score tile; max / exp / sum /
        # reciprocal each run once on the packed tile.
        qk_blocks = []
        v_blocks = []
        for l2 in range(bs):
            k_l2 = jnp.concatenate([k[l2 * seq:(l2 + 1) * seq, :]] * bs, axis=0)
            v_l2 = jnp.concatenate([v[l2 * seq:(l2 + 1) * seq, :]] * bs, axis=0)
            qk_blocks.append(q * k_l2)
            v_blocks.append(v_l2)
        qk_packed = jnp.concatenate(qk_blocks, axis=1)          # (bs*seq, bs*E)
        scores = jnp.dot(qk_packed, G2,
                         preferred_element_type=f32)            # (bs*seq, bs*H)

        m = scores[:, 0:H]
        for l2 in range(1, bs):
            m = jnp.maximum(m, scores[:, l2 * H:(l2 + 1) * H])
        m_tiled = jnp.concatenate([m] * bs, axis=1)
        exp_s = jnp.exp(scores - m_tiled)                       # one EUP pass
        denom = exp_s[:, 0:H]
        for l2 in range(1, bs):
            denom = denom + exp_s[:, l2 * H:(l2 + 1) * H]
        inv = pl.reciprocal(denom, approx=True)                 # (bs*seq, H)

        # Expand per-head probabilities back to E lanes with one matmul, then
        # combine with the packed V blocks and normalize once.
        p_full = jnp.dot(exp_s, GT2, preferred_element_type=f32)  # (bs*seq, bs*E)
        attn = p_full[:, 0:E] * v_blocks[0]
        for l2 in range(1, bs):
            attn = attn + p_full[:, l2 * E:(l2 + 1) * E] * v_blocks[l2]
        inv_full = jnp.dot(inv, GT, preferred_element_type=f32)   # (bs*seq, E)
        attn = attn * inv_full

        ao = jnp.dot(attn, wo_r[...], preferred_element_type=f32) + bo_r[...]
        h1 = _layernorm(x + ao, ln1g_r[...], ln1b_r[...])         # norm1(x+attn)

        # FFN: bf16 matmuls on the MXU, f32 accumulation / residual.
        ff = jnp.dot(h1.astype(bf16), w1_r[...],
                     preferred_element_type=f32) + fb1_r[...]
        ff = jnp.maximum(ff, 0.0)
        ff = jnp.dot(ff.astype(bf16), w2_r[...],
                     preferred_element_type=f32) + fb2_r[...]
        x = _layernorm(h1 + ff, ln2g_r[...], ln2b_r[...])         # norm2(h1+ff)

    # ---- classifier: batched over the bs CLS rows, single full-block store --
    cls_rows = jnp.concatenate(
        [x[l * seq:l * seq + 1, :] for l in range(bs)], axis=0)   # (bs, E)
    y = _layernorm(cls_rows, head_g_ref[...], head_b_ref[...])
    logits = (jnp.dot(y, head_w_ref[...], preferred_element_type=f32)
              + head_bias_ref[...])
    out_ref[...] = logits.astype(out_ref.dtype)


# ------------------------------ model (glue) --------------------------------
def init_params(key):
    def nrm(k, shape, scale=0.02):
        return scale * jax.random.normal(k, shape, dtype=jnp.float32)

    keys = iter(jax.random.split(key, 4 + 6 * NUM_LAYERS))
    params = {
        # Conv2d(3, model_dim, kernel=patch, stride=patch) flattened to matmul
        "conv_w": nrm(next(keys), (3 * PATCH_SIZE * PATCH_SIZE, MODEL_DIM)),
        "conv_b": jnp.zeros((MODEL_DIM,), jnp.float32),
        "cls": nrm(next(keys), (1, 1, MODEL_DIM), scale=1.0),
        "pos": nrm(next(keys), (MAX_TOKEN, MODEL_DIM), scale=1.0),
        "head_ln_g": jnp.ones((MODEL_DIM,), jnp.float32),
        "head_ln_b": jnp.zeros((MODEL_DIM,), jnp.float32),
        "head_w": nrm(next(keys), (MODEL_DIM, NUM_CLASS)),
        "head_b": jnp.zeros((NUM_CLASS,), jnp.float32),
        "layers": [],
    }
    for _ in range(NUM_LAYERS):
        params["layers"].append({
            "wq": nrm(next(keys), (MODEL_DIM, MODEL_DIM)),
            "wk": nrm(next(keys), (MODEL_DIM, MODEL_DIM)),
            "wv": nrm(next(keys), (MODEL_DIM, MODEL_DIM)),
            "bq": jnp.zeros((MODEL_DIM,), jnp.float32),
            "bk": jnp.zeros((MODEL_DIM,), jnp.float32),
            "bv": jnp.zeros((MODEL_DIM,), jnp.float32),
            "out_w": nrm(next(keys), (MODEL_DIM, MODEL_DIM)),
            "out_b": jnp.zeros((MODEL_DIM,), jnp.float32),
            "ln1_g": jnp.ones((MODEL_DIM,), jnp.float32),
            "ln1_b": jnp.zeros((MODEL_DIM,), jnp.float32),
            # bf16 FFN weights: half the HBM/DMA bytes; bf16 MXU matmuls
            # with f32 accumulation in-kernel.
            "ff1_w": nrm(next(keys), (MODEL_DIM, D_FF)).astype(jnp.bfloat16),
            "ff1_b": jnp.zeros((D_FF,), jnp.float32),
            "ff2_w": nrm(next(keys), (D_FF, MODEL_DIM)).astype(jnp.bfloat16),
            "ff2_b": jnp.zeros((MODEL_DIM,), jnp.float32),
            "ln2_g": jnp.ones((MODEL_DIM,), jnp.float32),
            "ln2_b": jnp.zeros((MODEL_DIM,), jnp.float32),
        })
    return params


def _block_diag(block, n):
    r, c = block.shape
    out = jnp.zeros((n * r, n * c), block.dtype)
    for i in range(n):
        out = out.at[i * r:(i + 1) * r, i * c:(i + 1) * c].set(block)
    return out


def vit_forward(params, x):
    # x: (bs, 3, H, W)  NCHW (PyTorch Conv2d convention)
    bs, c, Hh, Ww = x.shape
    p = PATCH_SIZE
    hp, wp = Hh // p, Ww // p
    n_patch = hp * wp
    seq = n_patch + 1
    E = MODEL_DIM
    cpp = c * p * p

    # Patch extraction: strided conv == matmul over flattened patches (layout
    # glue, stays in XLA).  Row 0 of each image block is a zero pseudo-patch
    # for the CLS position, so the kernel never concatenates tokens.
    patches = (x.reshape(bs, c, hp, p, wp, p)
                 .transpose(0, 2, 4, 1, 3, 5)
                 .reshape(bs, n_patch, cpp))
    patches = jnp.concatenate(
        [jnp.zeros((bs, 1, cpp), x.dtype), patches], axis=1)
    patches = patches.reshape(bs * seq, cpp)                    # (bs*seq, cpp)

    # Fold conv bias + cls token + positional embedding into one additive term,
    # pre-tiled over the batch so the kernel does a single broadcast add.
    cls_row = params["cls"].reshape(1, E) + params["pos"][0:1]
    patch_rows = params["pos"][1:seq] + params["conv_b"].reshape(1, E)
    emb_add = jnp.concatenate([cls_row, patch_rows], axis=0)    # (seq, E)
    emb_add = jnp.tile(emb_add, (bs, 1))                        # (bs*seq, E)

    # Head-sum / head-expand matrices; attention scale folded into G2.
    G = (jnp.arange(E)[:, None] // HEAD_DIM
         == jnp.arange(NHEAD)[None, :]).astype(jnp.float32)     # (E, H)
    GT = jnp.transpose(G)                                       # (H, E)
    G2 = _block_diag(G * ATTN_SCALE, bs)                        # (bs*E, bs*H)
    GT2 = _block_diag(GT, bs)                                   # (bs*H, bs*E)

    flat = [patches, params["conv_w"], emb_add, G2, GT2, GT]
    for lp in params["layers"]:
        w_qkv = jnp.concatenate([lp["wq"], lp["wk"], lp["wv"]], axis=1)
        b_qkv = jnp.concatenate([lp["bq"], lp["bk"], lp["bv"]]).reshape(1, -1)
        flat += [w_qkv, b_qkv,
                 lp["out_w"], lp["out_b"].reshape(1, -1),
                 lp["ln1_g"].reshape(1, -1), lp["ln1_b"].reshape(1, -1),
                 lp["ff1_w"], lp["ff1_b"].reshape(1, -1),
                 lp["ff2_w"], lp["ff2_b"].reshape(1, -1),
                 lp["ln2_g"].reshape(1, -1), lp["ln2_b"].reshape(1, -1)]
    flat += [params["head_ln_g"].reshape(1, -1),
             params["head_ln_b"].reshape(1, -1),
             params["head_w"], params["head_b"].reshape(1, -1)]

    kernel = functools.partial(_vit_kernel, bs=bs, seq=seq,
                               num_layers=len(params["layers"]))
    # Single fused invocation: no grid; every operand is a whole-array VMEM
    # block, only the (bs, num_class) logits go back to HBM.
    return pl.pallas_call(
        kernel,
        out_shape=jax.ShapeDtypeStruct((bs, NUM_CLASS), jnp.float32),
    )(*flat)


if __name__ == "__main__":
    key = jax.random.PRNGKey(0)
    pkey, xkey = jax.random.split(key)
    params = init_params(pkey)
    x = jax.random.normal(xkey, (2, 3, 16, 16), dtype=jnp.float32)  # NCHW

    out = jax.jit(vit_forward)(params, x)
    out = jax.block_until_ready(out)
    assert out.shape == (2, NUM_CLASS)
    assert bool(jnp.all(jnp.isfinite(out)))
    print("KERNEL_OK")
</pallas_src>

<mosaic_0001>
module attributes {stable_mosaic.version = 11 : i64} {
  func.func @_vit_kernel(%arg0: memref<34x48xf32, #tpu.memory_space<vmem>>, %arg1: memref<48x32xf32, #tpu.memory_space<vmem>>, %arg2: memref<34x32xf32, #tpu.memory_space<vmem>>, %arg3: memref<64x16xf32, #tpu.memory_space<vmem>>, %arg4: memref<16x64xf32, #tpu.memory_space<vmem>>, %arg5: memref<8x32xf32, #tpu.memory_space<vmem>>, %arg6: memref<32x96xf32, #tpu.memory_space<vmem>>, %arg7: memref<1x96xf32, #tpu.memory_space<vmem>>, %arg8: memref<32x32xf32, #tpu.memory_space<vmem>>, %arg9: memref<1x32xf32, #tpu.memory_space<vmem>>, %arg10: memref<1x32xf32, #tpu.memory_space<vmem>>, %arg11: memref<1x32xf32, #tpu.memory_space<vmem>>, %arg12: memref<32x2048xbf16, #tpu.memory_space<vmem>>, %arg13: memref<1x2048xf32, #tpu.memory_space<vmem>>, %arg14: memref<2048x32xbf16, #tpu.memory_space<vmem>>, %arg15: memref<1x32xf32, #tpu.memory_space<vmem>>, %arg16: memref<1x32xf32, #tpu.memory_space<vmem>>, %arg17: memref<1x32xf32, #tpu.memory_space<vmem>>, %arg18: memref<32x96xf32, #tpu.memory_space<vmem>>, %arg19: memref<1x96xf32, #tpu.memory_space<vmem>>, %arg20: memref<32x32xf32, #tpu.memory_space<vmem>>, %arg21: memref<1x32xf32, #tpu.memory_space<vmem>>, %arg22: memref<1x32xf32, #tpu.memory_space<vmem>>, %arg23: memref<1x32xf32, #tpu.memory_space<vmem>>, %arg24: memref<32x2048xbf16, #tpu.memory_space<vmem>>, %arg25: memref<1x2048xf32, #tpu.memory_space<vmem>>, %arg26: memref<2048x32xbf16, #tpu.memory_space<vmem>>, %arg27: memref<1x32xf32, #tpu.memory_space<vmem>>, %arg28: memref<1x32xf32, #tpu.memory_space<vmem>>, %arg29: memref<1x32xf32, #tpu.memory_space<vmem>>, %arg30: memref<1x32xf32, #tpu.memory_space<vmem>>, %arg31: memref<1x32xf32, #tpu.memory_space<vmem>>, %arg32: memref<32x10xf32, #tpu.memory_space<vmem>>, %arg33: memref<1x10xf32, #tpu.memory_space<vmem>>, %arg34: memref<2x10xf32, #tpu.memory_space<vmem>>) attributes {dimension_semantics = [], scalar_prefetch = 0 : i64, scratch_operands = 0 : i64, tpu.core_type = #tpu.core_type<tc>} {
    %c0 = arith.constant 0 : index
    %c0_0 = arith.constant 0 : index
    %0 = vector.load %arg3[%c0, %c0_0] : memref<64x16xf32, #tpu.memory_space<vmem>>, vector<64x16xf32>
    %c0_1 = arith.constant 0 : index
    %c0_2 = arith.constant 0 : index
    %1 = vector.load %arg4[%c0_1, %c0_2] : memref<16x64xf32, #tpu.memory_space<vmem>>, vector<16x64xf32>
    %c0_3 = arith.constant 0 : index
    %c0_4 = arith.constant 0 : index
    %2 = vector.load %arg5[%c0_3, %c0_4] : memref<8x32xf32, #tpu.memory_space<vmem>>, vector<8x32xf32>
    %c0_5 = arith.constant 0 : index
    %c0_6 = arith.constant 0 : index
    %3 = vector.load %arg0[%c0_5, %c0_6] : memref<34x48xf32, #tpu.memory_space<vmem>>, vector<34x48xf32>
    %c0_7 = arith.constant 0 : index
    %c0_8 = arith.constant 0 : index
    %4 = vector.load %arg1[%c0_7, %c0_8] : memref<48x32xf32, #tpu.memory_space<vmem>>, vector<48x32xf32>
    %cst = arith.constant dense<0.000000e+00> : vector<34x32xf32>
    %5 = tpu.matmul %3, %4, %cst {dimension_numbers = #tpu.dot_dimension_numbers<[1], [0], [0], [1], [0, 0, 1, 1], [], []>} : vector<34x48xf32>, vector<48x32xf32>, vector<34x32xf32> -> vector<34x32xf32>
    %c0_9 = arith.constant 0 : index
    %c0_10 = arith.constant 0 : index
    %6 = vector.load %arg2[%c0_9, %c0_10] : memref<34x32xf32, #tpu.memory_space<vmem>>, vector<34x32xf32>
    %7 = arith.addf %5, %6 : vector<34x32xf32>
    %c0_11 = arith.constant 0 : index
    %c0_12 = arith.constant 0 : index
    %8 = vector.load %arg6[%c0_11, %c0_12] : memref<32x96xf32, #tpu.memory_space<vmem>>, vector<32x96xf32>
    %cst_13 = arith.constant dense<0.000000e+00> : vector<34x96xf32>
    %9 = tpu.matmul %7, %8, %cst_13 {dimension_numbers = #tpu.dot_dimension_numbers<[1], [0], [0], [1], [0, 0, 1, 1], [], []>} : vector<34x32xf32>, vector<32x96xf32>, vector<34x96xf32> -> vector<34x96xf32>
    %c0_14 = arith.constant 0 : index
    %c0_15 = arith.constant 0 : index
    %10 = vector.load %arg7[%c0_14, %c0_15] : memref<1x96xf32, #tpu.memory_space<vmem>>, vector<1x96xf32>
    %11 = vector.broadcast %10 : vector<1x96xf32> to vector<34x96xf32>
    %12 = arith.addf %9, %11 : vector<34x96xf32>
    %13 = vector.extract_strided_slice %12 {offsets = [0, 0], sizes = [34, 32], strides = [1, 1]} : vector<34x96xf32> to vector<34x32xf32>
    %14 = vector.extract_strided_slice %12 {offsets = [0, 32], sizes = [34, 32], strides = [1, 1]} : vector<34x96xf32> to vector<34x32xf32>
    %15 = vector.extract_strided_slice %12 {offsets = [0, 64], sizes = [34, 32], strides = [1, 1]} : vector<34x96xf32> to vector<34x32xf32>
    %16 = vector.extract_strided_slice %14 {offsets = [0, 0], sizes = [17, 32], strides = [1, 1]} : vector<34x32xf32> to vector<17x32xf32>
    %17 = tpu.concatenate %16, %16 in 0 : vector<17x32xf32>, vector<17x32xf32> -> vector<34x32xf32>
    %18 = vector.extract_strided_slice %15 {offsets = [0, 0], sizes = [17, 32], strides = [1, 1]} : vector<34x32xf32> to vector<17x32xf32>
    %19 = tpu.concatenate %18, %18 in 0 : vector<17x32xf32>, vector<17x32xf32> -> vector<34x32xf32>
    %20 = arith.mulf %13, %17 : vector<34x32xf32>
    %21 = vector.extract_strided_slice %14 {offsets = [17, 0], sizes = [17, 32], strides = [1, 1]} : vector<34x32xf32> to vector<17x32xf32>
    %22 = tpu.concatenate %21, %21 in 0 : vector<17x32xf32>, vector<17x32xf32> -> vector<34x32xf32>
    %23 = vector.extract_strided_slice %15 {offsets = [17, 0], sizes = [17, 32], strides = [1, 1]} : vector<34x32xf32> to vector<17x32xf32>
    %24 = tpu.concatenate %23, %23 in 0 : vector<17x32xf32>, vector<17x32xf32> -> vector<34x32xf32>
    %25 = arith.mulf %13, %22 : vector<34x32xf32>
    %26 = tpu.concatenate %20, %25 in 1 : vector<34x32xf32>, vector<34x32xf32> -> vector<34x64xf32>
    %cst_16 = arith.constant dense<0.000000e+00> : vector<34x16xf32>
    %27 = tpu.matmul %26, %0, %cst_16 {dimension_numbers = #tpu.dot_dimension_numbers<[1], [0], [0], [1], [0, 0, 1, 1], [], []>} : vector<34x64xf32>, vector<64x16xf32>, vector<34x16xf32> -> vector<34x16xf32>
    %28 = vector.extract_strided_slice %27 {offsets = [0, 0], sizes = [34, 8], strides = [1, 1]} : vector<34x16xf32> to vector<34x8xf32>
    %29 = vector.extract_strided_slice %27 {offsets = [0, 8], sizes = [34, 8], strides = [1, 1]} : vector<34x16xf32> to vector<34x8xf32>
    %30 = arith.maximumf %28, %29 : vector<34x8xf32>
    %31 = tpu.concatenate %30, %30 in 1 : vector<34x8xf32>, vector<34x8xf32> -> vector<34x16xf32>
    %32 = arith.subf %27, %31 : vector<34x16xf32>
    %33 = math.exp %32 : vector<34x16xf32>
    %34 = vector.extract_strided_slice %33 {offsets = [0, 0], sizes = [34, 8], strides = [1, 1]} : vector<34x16xf32> to vector<34x8xf32>
    %35 = vector.extract_strided_slice %33 {offsets = [0, 8], sizes = [34, 8], strides = [1, 1]} : vector<34x16xf32> to vector<34x8xf32>
    %36 = arith.addf %34, %35 : vector<34x8xf32>
    %37 = tpu.reciprocal %36 {approx = true} : vector<34x8xf32> -> vector<34x8xf32>
    %cst_17 = arith.constant dense<0.000000e+00> : vector<34x64xf32>
    %38 = tpu.matmul %33, %1, %cst_17 {dimension_numbers = #tpu.dot_dimension_numbers<[1], [0], [0], [1], [0, 0, 1, 1], [], []>} : vector<34x16xf32>, vector<16x64xf32>, vector<34x64xf32> -> vector<34x64xf32>
    %39 = vector.extract_strided_slice %38 {offsets = [0, 0], sizes = [34, 32], strides = [1, 1]} : vector<34x64xf32> to vector<34x32xf32>
    %40 = arith.mulf %39, %19 : vector<34x32xf32>
    %41 = vector.extract_strided_slice %38 {offsets = [0, 32], sizes = [34, 32], strides = [1, 1]} : vector<34x64xf32> to vector<34x32xf32>
    %42 = arith.mulf %41, %24 : vector<34x32xf32>
    %43 = arith.addf %40, %42 : vector<34x32xf32>
    %cst_18 = arith.constant dense<0.000000e+00> : vector<34x32xf32>
    %44 = tpu.matmul %37, %2, %cst_18 {dimension_numbers = #tpu.dot_dimension_numbers<[1], [0], [0], [1], [0, 0, 1, 1], [], []>} : vector<34x8xf32>, vector<8x32xf32>, vector<34x32xf32> -> vector<34x32xf32>
    %45 = arith.mulf %43, %44 : vector<34x32xf32>
    %c0_19 = arith.constant 0 : index
    %c0_20 = arith.constant 0 : index
    %46 = vector.load %arg8[%c0_19, %c0_20] : memref<32x32xf32, #tpu.memory_space<vmem>>, vector<32x32xf32>
    %cst_21 = arith.constant dense<0.000000e+00> : vector<34x32xf32>
    %47 = tpu.matmul %45, %46, %cst_21 {dimension_numbers = #tpu.dot_dimension_numbers<[1], [0], [0], [1], [0, 0, 1, 1], [], []>} : vector<34x32xf32>, vector<32x32xf32>, vector<34x32xf32> -> vector<34x32xf32>
    %c0_22 = arith.constant 0 : index
    %c0_23 = arith.constant 0 : index
    %48 = vector.load %arg9[%c0_22, %c0_23] : memref<1x32xf32, #tpu.memory_space<vmem>>, vector<1x32xf32>
    %49 = vector.broadcast %48 : vector<1x32xf32> to vector<34x32xf32>
    %50 = arith.addf %47, %49 : vector<34x32xf32>
    %51 = arith.addf %7, %50 : vector<34x32xf32>
    %c0_24 = arith.constant 0 : index
    %c0_25 = arith.constant 0 : index
    %52 = vector.load %arg10[%c0_24, %c0_25] : memref<1x32xf32, #tpu.memory_space<vmem>>, vector<1x32xf32>
    %c0_26 = arith.constant 0 : index
    %c0_27 = arith.constant 0 : index
    %53 = vector.load %arg11[%c0_26, %c0_27] : memref<1x32xf32, #tpu.memory_space<vmem>>, vector<1x32xf32>
    %cst_28 = arith.constant dense<0.000000e+00> : vector<34xf32>
    %54 = vector.multi_reduction <add>, %51, %cst_28 [1] : vector<34x32xf32> to vector<34xf32>
    %55 = vector.shape_cast %54 : vector<34xf32> to vector<34x1xf32>
    %cst_29 = arith.constant 3.200000e+01 : f32
    %56 = vector.broadcast %cst_29 : f32 to vector<34x1xf32>
    %57 = arith.divf %55, %56 : vector<34x1xf32>
    %58 = vector.broadcast %57 : vector<34x1xf32> to vector<34x32xf32>
    %59 = arith.subf %51, %58 : vector<34x32xf32>
    %60 = arith.mulf %59, %59 : vector<34x32xf32>
    %cst_30 = arith.constant dense<0.000000e+00> : vector<34xf32>
    %61 = vector.multi_reduction <add>, %60, %cst_30 [1] : vector<34x32xf32> to vector<34xf32>
    %62 = vector.shape_cast %61 : vector<34xf32> to vector<34x1xf32>
    %cst_31 = arith.constant 3.200000e+01 : f32
    %63 = vector.broadcast %cst_31 : f32 to vector<34x1xf32>
    %64 = arith.divf %62, %63 : vector<34x1xf32>
    %cst_32 = arith.constant 9.99999974E-6 : f32
    %65 = vector.broadcast %cst_32 : f32 to vector<34x1xf32>
    %66 = arith.addf %64, %65 : vector<34x1xf32>
    %67 = math.rsqrt %66 : vector<34x1xf32>
    %68 = vector.broadcast %67 : vector<34x1xf32> to vector<34x32xf32>
    %69 = arith.mulf %59, %68 : vector<34x32xf32>
    %70 = vector.broadcast %52 : vector<1x32xf32> to vector<34x32xf32>
    %71 = arith.mulf %69, %70 : vector<34x32xf32>
    %72 = vector.broadcast %53 : vector<1x32xf32> to vector<34x32xf32>
    %73 = arith.addf %71, %72 : vector<34x32xf32>
    %74 = arith.truncf %73 : vector<34x32xf32> to vector<34x32xbf16>
    %c0_33 = arith.constant 0 : index
    %c0_34 = arith.constant 0 : index
    %75 = vector.load %arg12[%c0_33, %c0_34] : memref<32x2048xbf16, #tpu.memory_space<vmem>>, vector<32x2048xbf16>
    %cst_35 = arith.constant dense<0.000000e+00> : vector<34x2048xf32>
    %76 = tpu.matmul %74, %75, %cst_35 {dimension_numbers = #tpu.dot_dimension_numbers<[1], [0], [0], [1], [0, 0, 1, 1], [], []>} : vector<34x32xbf16>, vector<32x2048xbf16>, vector<34x2048xf32> -> vector<34x2048xf32>
    %c0_36 = arith.constant 0 : index
    %c0_37 = arith.constant 0 : index
    %77 = vector.load %arg13[%c0_36, %c0_37] : memref<1x2048xf32, #tpu.memory_space<vmem>>, vector<1x2048xf32>
    %78 = vector.broadcast %77 : vector<1x2048xf32> to vector<34x2048xf32>
    %79 = arith.addf %76, %78 : vector<34x2048xf32>
    %cst_38 = arith.constant 0.000000e+00 : f32
    %80 = vector.broadcast %cst_38 : f32 to vector<34x2048xf32>
    %81 = arith.maximumf %79, %80 : vector<34x2048xf32>
    %82 = arith.truncf %81 : vector<34x2048xf32> to vector<34x2048xbf16>
    %c0_39 = arith.constant 0 : index
    %c0_40 = arith.constant 0 : index
    %83 = vector.load %arg14[%c0_39, %c0_40] : memref<2048x32xbf16, #tpu.memory_space<vmem>>, vector<2048x32xbf16>
    %cst_41 = arith.constant dense<0.000000e+00> : vector<34x32xf32>
    %84 = tpu.matmul %82, %83, %cst_41 {dimension_numbers = #tpu.dot_dimension_numbers<[1], [0], [0], [1], [0, 0, 1, 1], [], []>} : vector<34x2048xbf16>, vector<2048x32xbf16>, vector<34x32xf32> -> vector<34x32xf32>
    %c0_42 = arith.constant 0 : index
    %c0_43 = arith.constant 0 : index
    %85 = vector.load %arg15[%c0_42, %c0_43] : memref<1x32xf32, #tpu.memory_space<vmem>>, vector<1x32xf32>
    %86 = vector.broadcast %85 : vector<1x32xf32> to vector<34x32xf32>
    %87 = arith.addf %84, %86 : vector<34x32xf32>
    %88 = arith.addf %73, %87 : vector<34x32xf32>
    %c0_44 = arith.constant 0 : index
    %c0_45 = arith.constant 0 : index
    %89 = vector.load %arg16[%c0_44, %c0_45] : memref<1x32xf32, #tpu.memory_space<vmem>>, vector<1x32xf32>
    %c0_46 = arith.constant 0 : index
    %c0_47 = arith.constant 0 : index
    %90 = vector.load %arg17[%c0_46, %c0_47] : memref<1x32xf32, #tpu.memory_space<vmem>>, vector<1x32xf32>
    %cst_48 = arith.constant dense<0.000000e+00> : vector<34xf32>
    %91 = vector.multi_reduction <add>, %88, %cst_48 [1] : vector<34x32xf32> to vector<34xf32>
    %92 = vector.shape_cast %91 : vector<34xf32> to vector<34x1xf32>
    %cst_49 = arith.constant 3.200000e+01 : f32
    %93 = vector.broadcast %cst_49 : f32 to vector<34x1xf32>
    %94 = arith.divf %92, %93 : vector<34x1xf32>
    %95 = vector.broadcast %94 : vector<34x1xf32> to vector<34x32xf32>
    %96 = arith.subf %88, %95 : vector<34x32xf32>
    %97 = arith.mulf %96, %96 : vector<34x32xf32>
    %cst_50 = arith.constant dense<0.000000e+00> : vector<34xf32>
    %98 = vector.multi_reduction <add>, %97, %cst_50 [1] : vector<34x32xf32> to vector<34xf32>
    %99 = vector.shape_cast %98 : vector<34xf32> to vector<34x1xf32>
    %cst_51 = arith.constant 3.200000e+01 : f32
    %100 = vector.broadcast %cst_51 : f32 to vector<34x1xf32>
    %101 = arith.divf %99, %100 : vector<34x1xf32>
    %cst_52 = arith.constant 9.99999974E-6 : f32
    %102 = vector.broadcast %cst_52 : f32 to vector<34x1xf32>
    %103 = arith.addf %101, %102 : vector<34x1xf32>
    %104 = math.rsqrt %103 : vector<34x1xf32>
    %105 = vector.broadcast %104 : vector<34x1xf32> to vector<34x32xf32>
    %106 = arith.mulf %96, %105 : vector<34x32xf32>
    %107 = vector.broadcast %89 : vector<1x32xf32> to vector<34x32xf32>
    %108 = arith.mulf %106, %107 : vector<34x32xf32>
    %109 = vector.broadcast %90 : vector<1x32xf32> to vector<34x32xf32>
    %110 = arith.addf %108, %109 : vector<34x32xf32>
    %c0_53 = arith.constant 0 : index
    %c0_54 = arith.constant 0 : index
    %111 = vector.load %arg18[%c0_53, %c0_54] : memref<32x96xf32, #tpu.memory_space<vmem>>, vector<32x96xf32>
    %cst_55 = arith.constant dense<0.000000e+00> : vector<34x96xf32>
    %112 = tpu.matmul %110, %111, %cst_55 {dimension_numbers = #tpu.dot_dimension_numbers<[1], [0], [0], [1], [0, 0, 1, 1], [], []>} : vector<34x32xf32>, vector<32x96xf32>, vector<34x96xf32> -> vector<34x96xf32>
    %c0_56 = arith.constant 0 : index
    %c0_57 = arith.constant 0 : index
    %113 = vector.load %arg19[%c0_56, %c0_57] : memref<1x96xf32, #tpu.memory_space<vmem>>, vector<1x96xf32>
    %114 = vector.broadcast %113 : vector<1x96xf32> to vector<34x96xf32>
    %115 = arith.addf %112, %114 : vector<34x96xf32>
    %116 = vector.extract_strided_slice %115 {offsets = [0, 0], sizes = [34, 32], strides = [1, 1]} : vector<34x96xf32> to vector<34x32xf32>
    %117 = vector.extract_strided_slice %115 {offsets = [0, 32], sizes = [34, 32], strides = [1, 1]} : vector<34x96xf32> to vector<34x32xf32>
    %118 = vector.extract_strided_slice %115 {offsets = [0, 64], sizes = [34, 32], strides = [1, 1]} : vector<34x96xf32> to vector<34x32xf32>
    %119 = vector.extract_strided_slice %117 {offsets = [0, 0], sizes = [17, 32], strides = [1, 1]} : vector<34x32xf32> to vector<17x32xf32>
    %120 = tpu.concatenate %119, %119 in 0 : vector<17x32xf32>, vector<17x32xf32> -> vector<34x32xf32>
    %121 = vector.extract_strided_slice %118 {offsets = [0, 0], sizes = [17, 32], strides = [1, 1]} : vector<34x32xf32> to vector<17x32xf32>
    %122 = tpu.concatenate %121, %121 in 0 : vector<17x32xf32>, vector<17x32xf32> -> vector<34x32xf32>
    %123 = arith.mulf %116, %120 : vector<34x32xf32>
    %124 = vector.extract_strided_slice %117 {offsets = [17, 0], sizes = [17, 32], strides = [1, 1]} : vector<34x32xf32> to vector<17x32xf32>
    %125 = tpu.concatenate %124, %124 in 0 : vector<17x32xf32>, vector<17x32xf32> -> vector<34x32xf32>
    %126 = vector.extract_strided_slice %118 {offsets = [17, 0], sizes = [17, 32], strides = [1, 1]} : vector<34x32xf32> to vector<17x32xf32>
    %127 = tpu.concatenate %126, %126 in 0 : vector<17x32xf32>, vector<17x32xf32> -> vector<34x32xf32>
    %128 = arith.mulf %116, %125 : vector<34x32xf32>
    %129 = tpu.concatenate %123, %128 in 1 : vector<34x32xf32>, vector<34x32xf32> -> vector<34x64xf32>
    %cst_58 = arith.constant dense<0.000000e+00> : vector<34x16xf32>
    %130 = tpu.matmul %129, %0, %cst_58 {dimension_numbers = #tpu.dot_dimension_numbers<[1], [0], [0], [1], [0, 0, 1, 1], [], []>} : vector<34x64xf32>, vector<64x16xf32>, vector<34x16xf32> -> vector<34x16xf32>
    %131 = vector.extract_strided_slice %130 {offsets = [0, 0], sizes = [34, 8], strides = [1, 1]} : vector<34x16xf32> to vector<34x8xf32>
    %132 = vector.extract_strided_slice %130 {offsets = [0, 8], sizes = [34, 8], strides = [1, 1]} : vector<34x16xf32> to vector<34x8xf32>
    %133 = arith.maximumf %131, %132 : vector<34x8xf32>
    %134 = tpu.concatenate %133, %133 in 1 : vector<34x8xf32>, vector<34x8xf32> -> vector<34x16xf32>
    %135 = arith.subf %130, %134 : vector<34x16xf32>
    %136 = math.exp %135 : vector<34x16xf32>
    %137 = vector.extract_strided_slice %136 {offsets = [0, 0], sizes = [34, 8], strides = [1, 1]} : vector<34x16xf32> to vector<34x8xf32>
    %138 = vector.extract_strided_slice %136 {offsets = [0, 8], sizes = [34, 8], strides = [1, 1]} : vector<34x16xf32> to vector<34x8xf32>
    %139 = arith.addf %137, %138 : vector<34x8xf32>
    %140 = tpu.reciprocal %139 {approx = true} : vector<34x8xf32> -> vector<34x8xf32>
    %cst_59 = arith.constant dense<0.000000e+00> : vector<34x64xf32>
    %141 = tpu.matmul %136, %1, %cst_59 {dimension_numbers = #tpu.dot_dimension_numbers<[1], [0], [0], [1], [0, 0, 1, 1], [], []>} : vector<34x16xf32>, vector<16x64xf32>, vector<34x64xf32> -> vector<34x64xf32>
    %142 = vector.extract_strided_slice %141 {offsets = [0, 0], sizes = [34, 32], strides = [1, 1]} : vector<34x64xf32> to vector<34x32xf32>
    %143 = arith.mulf %142, %122 : vector<34x32xf32>
    %144 = vector.extract_strided_slice %141 {offsets = [0, 32], sizes = [34, 32], strides = [1, 1]} : vector<34x64xf32> to vector<34x32xf32>
    %145 = arith.mulf %144, %127 : vector<34x32xf32>
    %146 = arith.addf %143, %145 : vector<34x32xf32>
    %cst_60 = arith.constant dense<0.000000e+00> : vector<34x32xf32>
    %147 = tpu.matmul %140, %2, %cst_60 {dimension_numbers = #tpu.dot_dimension_numbers<[1], [0], [0], [1], [0, 0, 1, 1], [], []>} : vector<34x8xf32>, vector<8x32xf32>, vector<34x32xf32> -> vector<34x32xf32>
    %148 = arith.mulf %146, %147 : vector<34x32xf32>
    %c0_61 = arith.constant 0 : index
    %c0_62 = arith.constant 0 : index
    %149 = vector.load %arg20[%c0_61, %c0_62] : memref<32x32xf32, #tpu.memory_space<vmem>>, vector<32x32xf32>
    %cst_63 = arith.constant dense<0.000000e+00> : vector<34x32xf32>
    %150 = tpu.matmul %148, %149, %cst_63 {dimension_numbers = #tpu.dot_dimension_numbers<[1], [0], [0], [1], [0, 0, 1, 1], [], []>} : vector<34x32xf32>, vector<32x32xf32>, vector<34x32xf32> -> vector<34x32xf32>
    %c0_64 = arith.constant 0 : index
    %c0_65 = arith.constant 0 : index
    %151 = vector.load %arg21[%c0_64, %c0_65] : memref<1x32xf32, #tpu.memory_space<vmem>>, vector<1x32xf32>
    %152 = vector.broadcast %151 : vector<1x32xf32> to vector<34x32xf32>
    %153 = arith.addf %150, %152 : vector<34x32xf32>
    %154 = arith.addf %110, %153 : vector<34x32xf32>
    %c0_66 = arith.constant 0 : index
    %c0_67 = arith.constant 0 : index
    %155 = vector.load %arg22[%c0_66, %c0_67] : memref<1x32xf32, #tpu.memory_space<vmem>>, vector<1x32xf32>
    %c0_68 = arith.constant 0 : index
    %c0_69 = arith.constant 0 : index
    %156 = vector.load %arg23[%c0_68, %c0_69] : memref<1x32xf32, #tpu.memory_space<vmem>>, vector<1x32xf32>
    %cst_70 = arith.constant dense<0.000000e+00> : vector<34xf32>
    %157 = vector.multi_reduction <add>, %154, %cst_70 [1] : vector<34x32xf32> to vector<34xf32>
    %158 = vector.shape_cast %157 : vector<34xf32> to vector<34x1xf32>
    %cst_71 = arith.constant 3.200000e+01 : f32
    %159 = vector.broadcast %cst_71 : f32 to vector<34x1xf32>
    %160 = arith.divf %158, %159 : vector<34x1xf32>
    %161 = vector.broadcast %160 : vector<34x1xf32> to vector<34x32xf32>
    %162 = arith.subf %154, %161 : vector<34x32xf32>
    %163 = arith.mulf %162, %162 : vector<34x32xf32>
    %cst_72 = arith.constant dense<0.000000e+00> : vector<34xf32>
    %164 = vector.multi_reduction <add>, %163, %cst_72 [1] : vector<34x32xf32> to vector<34xf32>
    %165 = vector.shape_cast %164 : vector<34xf32> to vector<34x1xf32>
    %cst_73 = arith.constant 3.200000e+01 : f32
    %166 = vector.broadcast %cst_73 : f32 to vector<34x1xf32>
    %167 = arith.divf %165, %166 : vector<34x1xf32>
    %cst_74 = arith.constant 9.99999974E-6 : f32
    %168 = vector.broadcast %cst_74 : f32 to vector<34x1xf32>
    %169 = arith.addf %167, %168 : vector<34x1xf32>
    %170 = math.rsqrt %169 : vector<34x1xf32>
    %171 = vector.broadcast %170 : vector<34x1xf32> to vector<34x32xf32>
    %172 = arith.mulf %162, %171 : vector<34x32xf32>
    %173 = vector.broadcast %155 : vector<1x32xf32> to vector<34x32xf32>
    %174 = arith.mulf %172, %173 : vector<34x32xf32>
    %175 = vector.broadcast %156 : vector<1x32xf32> to vector<34x32xf32>
    %176 = arith.addf %174, %175 : vector<34x32xf32>
    %177 = arith.truncf %176 : vector<34x32xf32> to vector<34x32xbf16>
    %c0_75 = arith.constant 0 : index
    %c0_76 = arith.constant 0 : index
    %178 = vector.load %arg24[%c0_75, %c0_76] : memref<32x2048xbf16, #tpu.memory_space<vmem>>, vector<32x2048xbf16>
    %cst_77 = arith.constant dense<0.000000e+00> : vector<34x2048xf32>
    %179 = tpu.matmul %177, %178, %cst_77 {dimension_numbers = #tpu.dot_dimension_numbers<[1], [0], [0], [1], [0, 0, 1, 1], [], []>} : vector<34x32xbf16>, vector<32x2048xbf16>, vector<34x2048xf32> -> vector<34x2048xf32>
    %c0_78 = arith.constant 0 : index
    %c0_79 = arith.constant 0 : index
    %180 = vector.load %arg25[%c0_78, %c0_79] : memref<1x2048xf32, #tpu.memory_space<vmem>>, vector<1x2048xf32>
    %181 = vector.broadcast %180 : vector<1x2048xf32> to vector<34x2048xf32>
    %182 = arith.addf %179, %181 : vector<34x2048xf32>
    %cst_80 = arith.constant 0.000000e+00 : f32
    %183 = vector.broadcast %cst_80 : f32 to vector<34x2048xf32>
    %184 = arith.maximumf %182, %183 : vector<34x2048xf32>
    %185 = arith.truncf %184 : vector<34x2048xf32> to vector<34x2048xbf16>
    %c0_81 = arith.constant 0 : index
    %c0_82 = arith.constant 0 : index
    %186 = vector.load %arg26[%c0_81, %c0_82] : memref<2048x32xbf16, #tpu.memory_space<vmem>>, vector<2048x32xbf16>
    %cst_83 = arith.constant dense<0.000000e+00> : vector<34x32xf32>
    %187 = tpu.matmul %185, %186, %cst_83 {dimension_numbers = #tpu.dot_dimension_numbers<[1], [0], [0], [1], [0, 0, 1, 1], [], []>} : vector<34x2048xbf16>, vector<2048x32xbf16>, vector<34x32xf32> -> vector<34x32xf32>
    %c0_84 = arith.constant 0 : index
    %c0_85 = arith.constant 0 : index
    %188 = vector.load %arg27[%c0_84, %c0_85] : memref<1x32xf32, #tpu.memory_space<vmem>>, vector<1x32xf32>
    %189 = vector.broadcast %188 : vector<1x32xf32> to vector<34x32xf32>
    %190 = arith.addf %187, %189 : vector<34x32xf32>
    %191 = arith.addf %176, %190 : vector<34x32xf32>
    %c0_86 = arith.constant 0 : index
    %c0_87 = arith.constant 0 : index
    %192 = vector.load %arg28[%c0_86, %c0_87] : memref<1x32xf32, #tpu.memory_space<vmem>>, vector<1x32xf32>
    %c0_88 = arith.constant 0 : index
    %c0_89 = arith.constant 0 : index
    %193 = vector.load %arg29[%c0_88, %c0_89] : memref<1x32xf32, #tpu.memory_space<vmem>>, vector<1x32xf32>
    %cst_90 = arith.constant dense<0.000000e+00> : vector<34xf32>
    %194 = vector.multi_reduction <add>, %191, %cst_90 [1] : vector<34x32xf32> to vector<34xf32>
    %195 = vector.shape_cast %194 : vector<34xf32> to vector<34x1xf32>
    %cst_91 = arith.constant 3.200000e+01 : f32
    %196 = vector.broadcast %cst_91 : f32 to vector<34x1xf32>
    %197 = arith.divf %195, %196 : vector<34x1xf32>
    %198 = vector.broadcast %197 : vector<34x1xf32> to vector<34x32xf32>
    %199 = arith.subf %191, %198 : vector<34x32xf32>
    %200 = arith.mulf %199, %199 : vector<34x32xf32>
    %cst_92 = arith.constant dense<0.000000e+00> : vector<34xf32>
    %201 = vector.multi_reduction <add>, %200, %cst_92 [1] : vector<34x32xf32> to vector<34xf32>
    %202 = vector.shape_cast %201 : vector<34xf32> to vector<34x1xf32>
    %cst_93 = arith.constant 3.200000e+01 : f32
    %203 = vector.broadcast %cst_93 : f32 to vector<34x1xf32>
    %204 = arith.divf %202, %203 : vector<34x1xf32>
    %cst_94 = arith.constant 9.99999974E-6 : f32
    %205 = vector.broadcast %cst_94 : f32 to vector<34x1xf32>
    %206 = arith.addf %204, %205 : vector<34x1xf32>
    %207 = math.rsqrt %206 : vector<34x1xf32>
    %208 = vector.broadcast %207 : vector<34x1xf32> to vector<34x32xf32>
    %209 = arith.mulf %199, %208 : vector<34x32xf32>
    %210 = vector.broadcast %192 : vector<1x32xf32> to vector<34x32xf32>
    %211 = arith.mulf %209, %210 : vector<34x32xf32>
    %212 = vector.broadcast %193 : vector<1x32xf32> to vector<34x32xf32>
    %213 = arith.addf %211, %212 : vector<34x32xf32>
    %214 = vector.extract_strided_slice %213 {offsets = [0, 0], sizes = [1, 32], strides = [1, 1]} : vector<34x32xf32> to vector<1x32xf32>
    %215 = vector.extract_strided_slice %213 {offsets = [17, 0], sizes = [1, 32], strides = [1, 1]} : vector<34x32xf32> to vector<1x32xf32>
    %216 = tpu.concatenate %214, %215 in 0 : vector<1x32xf32>, vector<1x32xf32> -> vector<2x32xf32>
    %c0_95 = arith.constant 0 : index
    %c0_96 = arith.constant 0 : index
    %217 = vector.load %arg30[%c0_95, %c0_96] : memref<1x32xf32, #tpu.memory_space<vmem>>, vector<1x32xf32>
    %c0_97 = arith.constant 0 : index
    %c0_98 = arith.constant 0 : index
    %218 = vector.load %arg31[%c0_97, %c0_98] : memref<1x32xf32, #tpu.memory_space<vmem>>, vector<1x32xf32>
    %cst_99 = arith.constant dense<0.000000e+00> : vector<2xf32>
    %219 = vector.multi_reduction <add>, %216, %cst_99 [1] : vector<2x32xf32> to vector<2xf32>
    %220 = vector.shape_cast %219 : vector<2xf32> to vector<2x1xf32>
    %cst_100 = arith.constant 3.200000e+01 : f32
    %221 = vector.broadcast %cst_100 : f32 to vector<2x1xf32>
    %222 = arith.divf %220, %221 : vector<2x1xf32>
    %223 = vector.broadcast %222 : vector<2x1xf32> to vector<2x32xf32>
    %224 = arith.subf %216, %223 : vector<2x32xf32>
    %225 = arith.mulf %224, %224 : vector<2x32xf32>
    %cst_101 = arith.constant dense<0.000000e+00> : vector<2xf32>
    %226 = vector.multi_reduction <add>, %225, %cst_101 [1] : vector<2x32xf32> to vector<2xf32>
    %227 = vector.shape_cast %226 : vector<2xf32> to vector<2x1xf32>
    %cst_102 = arith.constant 3.200000e+01 : f32
    %228 = vector.broadcast %cst_102 : f32 to vector<2x1xf32>
    %229 = arith.divf %227, %228 : vector<2x1xf32>
    %cst_103 = arith.constant 9.99999974E-6 : f32
    %230 = vector.broadcast %cst_103 : f32 to vector<2x1xf32>
    %231 = arith.addf %229, %230 : vector<2x1xf32>
    %232 = math.rsqrt %231 : vector<2x1xf32>
    %233 = vector.broadcast %232 : vector<2x1xf32> to vector<2x32xf32>
    %234 = arith.mulf %224, %233 : vector<2x32xf32>
    %235 = vector.broadcast %217 : vector<1x32xf32> to vector<2x32xf32>
    %236 = arith.mulf %234, %235 : vector<2x32xf32>
    %237 = vector.broadcast %218 : vector<1x32xf32> to vector<2x32xf32>
    %238 = arith.addf %236, %237 : vector<2x32xf32>
    %c0_104 = arith.constant 0 : index
    %c0_105 = arith.constant 0 : index
    %239 = vector.load %arg32[%c0_104, %c0_105] : memref<32x10xf32, #tpu.memory_space<vmem>>, vector<32x10xf32>
    %cst_106 = arith.constant dense<0.000000e+00> : vector<2x10xf32>
    %240 = tpu.matmul %238, %239, %cst_106 {dimension_numbers = #tpu.dot_dimension_numbers<[1], [0], [0], [1], [0, 0, 1, 1], [], []>} : vector<2x32xf32>, vector<32x10xf32>, vector<2x10xf32> -> vector<2x10xf32>
    %c0_107 = arith.constant 0 : index
    %c0_108 = arith.constant 0 : index
    %241 = vector.load %arg33[%c0_107, %c0_108] : memref<1x10xf32, #tpu.memory_space<vmem>>, vector<1x10xf32>
    %242 = vector.broadcast %241 : vector<1x10xf32> to vector<2x10xf32>
    %243 = arith.addf %240, %242 : vector<2x10xf32>
    %c0_109 = arith.constant 0 : index
    %c0_110 = arith.constant 0 : index
    %244 = vector.load %arg34[%c0_109, %c0_110] : memref<2x10xf32, #tpu.memory_space<vmem>>, vector<2x10xf32>
    tpu.vector_store %arg34[%c0_109, %c0_110], %243 {strides = array<i32>} : memref<2x10xf32, #tpu.memory_space<vmem>>, vector<2x10xf32>,
    return
  }
}

</mosaic_0001>

<llo_original>
// kernel: tile.9
$region0: #{tile.9}
  %s0 = inlined_call_operand.vmem [shape: f32[2,17,32], index: 0, kind: input, shape index: {}]
  %s1 = inlined_call_operand.vmem [shape: f32[34,32], index: 1, kind: output, shape index: {}]
  %v2 = vld [vmem:[%s0] sm:$0xff]
  %vm3 = vcmask 261120
  %4 = vst.msk [vmem:[%s1] sm:$0xff] %vm3, %v2
  %s5 = scalar_lea.vmem %s0, 8
  %v6 = vld [vmem:[%s5] sm:$0xff]
  %vm7 = vcmask 261120
  %s8 = scalar_lea.vmem %s1, 8
  %9 = vst.msk [vmem:[%s8] sm:$0xff] %vm7, %v6
  %s10 = scalar_lea.vmem %s0, 16
  %s11 = smov 3
  %v12 = vld [vmem:[%s10] ss:$8 sm:%s11]
  %vm13 = vcmask 261120
  %s14 = scalar_lea.vmem %s1, 16
  %15 = vst.msk [vmem:[%s14] sm:$0x3] %vm13, %v12
  %s16 = scalar_lea.vmem %s0, 25
  %v17 = vld [vmem:[%s16] sm:$0xff]
  %vm18 = vcmask 261120
  %s19 = scalar_lea.vmem %s1, 18
  %20 = vst.msk [vmem:[%s19] sm:$0xff] %vm18, %v17
  %s21 = scalar_lea.vmem %s0, 33
  %v22 = vld [vmem:[%s21] sm:$0xff]
  %vm23 = vcmask 261120
  %s24 = scalar_lea.vmem %s1, 26
  %25 = vst.msk [vmem:[%s24] sm:$0xff] %vm23, %v22

// kernel: vit_forward.1
$region0: #{vit_forward.1}
  #allocation0 [shape = 'u32[]', space=smem, size = 0x4, offset = 0x4, fixed_abs, tag = 'smem constant byte address 0x4 - core index']
  #allocation1 [shape = 'u32[72,128]{1,0:T(1,128)}', space=vmem, size = 0x9000, scoped, tag = 'internal scratch']
  %s0 = inlined_call_operand.smem [shape: u32[35], index: -1, kind: input, shape index: {}]
  %s1 = sld [smem:[%s0]]
  %s2 = scalar_lea.smem %s0, 1
  %s3 = sld [smem:[%s2]]
  %s4 = scalar_lea.smem %s0, 2
  %s5 = sld [smem:[%s4]]
  %s6 = scalar_lea.smem %s0, 3
  %s7 = sld [smem:[%s6]]
  %s8 = scalar_lea.smem %s0, 4
  %s9 = sld [smem:[%s8]]
  %s10 = scalar_lea.smem %s0, 5
  %s11 = sld [smem:[%s10]]
  %s12 = scalar_lea.smem %s0, 6
  %s13 = sld [smem:[%s12]]
  %s14 = scalar_lea.smem %s0, 7
  %s15 = sld [smem:[%s14]]
  %s16 = scalar_lea.smem %s0, 8
  %s17 = sld [smem:[%s16]]
  %s18 = scalar_lea.smem %s0, 9
  %s19 = sld [smem:[%s18]]
  %s20 = scalar_lea.smem %s0, 10
  %s21 = sld [smem:[%s20]]
  %s22 = scalar_lea.smem %s0, 11
  %s23 = sld [smem:[%s22]]
  %s24 = scalar_lea.smem %s0, 12
  %s25 = sld [smem:[%s24]]
  %s26 = scalar_lea.smem %s0, 13
  %s27 = sld [smem:[%s26]]
  %s28 = scalar_lea.smem %s0, 14
  %s29 = sld [smem:[%s28]]
  %s30 = scalar_lea.smem %s0, 15
  %s31 = sld [smem:[%s30]]
  %s32 = scalar_lea.smem %s0, 16
  %s33 = sld [smem:[%s32]]
  %s34 = scalar_lea.smem %s0, 17
  %s35 = sld [smem:[%s34]]
  %s36 = scalar_lea.smem %s0, 18
  %s37 = sld [smem:[%s36]]
  %s38 = scalar_lea.smem %s0, 19
  %s39 = sld [smem:[%s38]]
  %s40 = scalar_lea.smem %s0, 20
  %s41 = sld [smem:[%s40]]
  %s42 = scalar_lea.smem %s0, 21
  %s43 = sld [smem:[%s42]]
  %s44 = scalar_lea.smem %s0, 22
  %s45 = sld [smem:[%s44]]
  %s46 = scalar_lea.smem %s0, 23
  %s47 = sld [smem:[%s46]]
  %s48 = scalar_lea.smem %s0, 24
  %s49 = sld [smem:[%s48]]
  %s50 = scalar_lea.smem %s0, 25
  %s51 = sld [smem:[%s50]]
  %s52 = scalar_lea.smem %s0, 26
  %s53 = sld [smem:[%s52]]
  %s54 = scalar_lea.smem %s0, 27
  %s55 = sld [smem:[%s54]]
  %s56 = scalar_lea.smem %s0, 28
  %s57 = sld [smem:[%s56]]
  %s58 = scalar_lea.smem %s0, 29
  %s59 = sld [smem:[%s58]]
  %s60 = scalar_lea.smem %s0, 30
  %s61 = sld [smem:[%s60]]
  %s62 = scalar_lea.smem %s0, 31
  %s63 = sld [smem:[%s62]]
  %s64 = scalar_lea.smem %s0, 32
  %s65 = sld [smem:[%s64]]
  %s66 = scalar_lea.smem %s0, 33
  %s67 = sld [smem:[%s66]]
  %s68 = scalar_lea.smem %s0, 34
  %s69 = sld [smem:[%s68]]
  %s70 = sld [smem:[#allocation0]]
  $region146: #{vit_forward.1} parent=0
    _
  %s72 = ssub.s32 1, %s70
  %s73 = scalar_select 0, %s72, %s70
  $region1: #{vit_forward.1} parent=0
    #allocation2 [shape = 'u8[1024]{0}', space=vmem, size = 0x400, scoped, tag = 'output window, operand 0, single buffered']
    #allocation3 [shape = 's32[1]{0}', space=sflag, size = 0x4, scoped, tag = 'scoped memory for vit_forward.1']
    %74 = vsyncpa [#allocation3], 0
    // Predicated region
    $region2: #{vit_forward.1} parent=1 // pred_check
      _
    $region3: #{vit_forward.1} parent=1 // pred_check_branch
      %76 = sbr.rel (0) target = $region5
    $region4: #{vit_forward.1} parent=1 // pred_region
      _
    $region5: #{vit_forward.1} parent=1 // pred_fallthru
      _
    // Predicated region
    $region6: #{vit_forward.1} parent=1 // pred_check
      _
    $region7: #{vit_forward.1} parent=1 // pred_check_branch
      %78 = sbr.rel (0) target = $region9
    $region8: #{vit_forward.1} parent=1 // pred_region
      _
    $region9: #{vit_forward.1} parent=1 // pred_fallthru
      _
    // Predicated region
    $region10: #{vit_forward.1} parent=1 // pred_check
      _
    $region11: #{vit_forward.1} parent=1 // pred_check_branch
      %80 = sbr.rel (0) target = $region13
    $region12: #{vit_forward.1} parent=1 // pred_region
      _
    $region13: #{vit_forward.1} parent=1 // pred_fallthru
      _
    // Predicated region
    $region14: #{vit_forward.1} parent=1 // pred_check
      _
    $region15: #{vit_forward.1} parent=1 // pred_check_branch
      %82 = sbr.rel (0) target = $region17
    $region16: #{vit_forward.1} parent=1 // pred_region
      _
    $region17: #{vit_forward.1} parent=1 // pred_fallthru
      _
    // Predicated region
    $region18: #{vit_forward.1} parent=1 // pred_check
      _
    $region19: #{vit_forward.1} parent=1 // pred_check_branch
      %84 = sbr.rel (0) target = $region21
    $region20: #{vit_forward.1} parent=1 // pred_region
      _
    $region21: #{vit_forward.1} parent=1 // pred_fallthru
      _
    // Predicated region
    $region22: #{vit_forward.1} parent=1 // pred_check
      _
    $region23: #{vit_forward.1} parent=1 // pred_check_branch
      %86 = sbr.rel (0) target = $region25
    $region24: #{vit_forward.1} parent=1 // pred_region
      _
    $region25: #{vit_forward.1} parent=1 // pred_fallthru
      _
    // Predicated region
    $region26: #{vit_forward.1} parent=1 // pred_check
      _
    $region27: #{vit_forward.1} parent=1 // pred_check_branch
      %88 = sbr.rel (0) target = $region29
    $region28: #{vit_forward.1} parent=1 // pred_region
      _
    $region29: #{vit_forward.1} parent=1 // pred_fallthru
      _
    // Predicated region
    $region30: #{vit_forward.1} parent=1 // pred_check
      _
    $region31: #{vit_forward.1} parent=1 // pred_check_branch
      %90 = sbr.rel (0) target = $region33
    $region32: #{vit_forward.1} parent=1 // pred_region
      _
    $region33: #{vit_forward.1} parent=1 // pred_fallthru
      _
    // Predicated region
    $region34: #{vit_forward.1} parent=1 // pred_check
      _
    $region35: #{vit_forward.1} parent=1 // pred_check_branch
      %92 = sbr.rel (0) target = $region37
    $region36: #{vit_forward.1} parent=1 // pred_region
      _
    $region37: #{vit_forward.1} parent=1 // pred_fallthru
      _
    // Predicated region
    $region38: #{vit_forward.1} parent=1 // pred_check
      _
    $region39: #{vit_forward.1} parent=1 // pred_check_branch
      %94 = sbr.rel (0) target = $region41
    $region40: #{vit_forward.1} parent=1 // pred_region
      _
    $region41: #{vit_forward.1} parent=1 // pred_fallthru
      _
    // Predicated region
    $region42: #{vit_forward.1} parent=1 // pred_check
      _
    $region43: #{vit_forward.1} parent=1 // pred_check_branch
      %96 = sbr.rel (0) target = $region45
    $region44: #{vit_forward.1} parent=1 // pred_region
      _
    $region45: #{vit_forward.1} parent=1 // pred_fallthru
      _
    // Predicated region
    $region46: #{vit_forward.1} parent=1 // pred_check
      _
    $region47: #{vit_forward.1} parent=1 // pred_check_branch
      %98 = sbr.rel (0) target = $region49
    $region48: #{vit_forward.1} parent=1 // pred_region
      _
    $region49: #{vit_forward.1} parent=1 // pred_fallthru
      _
    // Predicated region
    $region50: #{vit_forward.1} parent=1 // pred_check
      _
    $region51: #{vit_forward.1} parent=1 // pred_check_branch
      %100 = sbr.rel (0) target = $region53
    $region52: #{vit_forward.1} parent=1 // pred_region
      _
    $region53: #{vit_forward.1} parent=1 // pred_fallthru
      _
    // Predicated region
    $region54: #{vit_forward.1} parent=1 // pred_check
      _
    $region55: #{vit_forward.1} parent=1 // pred_check_branch
      %102 = sbr.rel (0) target = $region57
    $region56: #{vit_forward.1} parent=1 // pred_region
      _
    $region57: #{vit_forward.1} parent=1 // pred_fallthru
      _
    // Predicated region
    $region58: #{vit_forward.1} parent=1 // pred_check
      _
    $region59: #{vit_forward.1} parent=1 // pred_check_branch
      %104 = sbr.rel (0) target = $region61
    $region60: #{vit_forward.1} parent=1 // pred_region
      _
    $region61: #{vit_forward.1} parent=1 // pred_fallthru
      _
    // Predicated region
    $region62: #{vit_forward.1} parent=1 // pred_check
      _
    $region63: #{vit_forward.1} parent=1 // pred_check_branch
      %106 = sbr.rel (0) target = $region65
    $region64: #{vit_forward.1} parent=1 // pred_region
      _
    $region65: #{vit_forward.1} parent=1 // pred_fallthru
      _
    // Predicated region
    $region66: #{vit_forward.1} parent=1 // pred_check
      _
    $region67: #{vit_forward.1} parent=1 // pred_check_branch
      %108 = sbr.rel (0) target = $region69
    $region68: #{vit_forward.1} parent=1 // pred_region
      _
    $region69: #{vit_forward.1} parent=1 // pred_fallthru
      _
    // Predicated region
    $region70: #{vit_forward.1} parent=1 // pred_check
      _
    $region71: #{vit_forward.1} parent=1 // pred_check_branch
      %110 = sbr.rel (0) target = $region73
    $region72: #{vit_forward.1} parent=1 // pred_region
      _
    $region73: #{vit_forward.1} parent=1 // pred_fallthru
      _
    // Predicated region
    $region74: #{vit_forward.1} parent=1 // pred_check
      _
    $region75: #{vit_forward.1} parent=1 // pred_check_branch
      %112 = sbr.rel (0) target = $region77
    $region76: #{vit_forward.1} parent=1 // pred_region
      _
    $region77: #{vit_forward.1} parent=1 // pred_fallthru
      _
    // Predicated region
    $region78: #{vit_forward.1} parent=1 // pred_check
      _
    $region79: #{vit_forward.1} parent=1 // pred_check_branch
      %114 = sbr.rel (0) target = $region81
    $region80: #{vit_forward.1} parent=1 // pred_region
      _
    $region81: #{vit_forward.1} parent=1 // pred_fallthru
      _
    // Predicated region
    $region82: #{vit_forward.1} parent=1 // pred_check
      _
    $region83: #{vit_forward.1} parent=1 // pred_check_branch
      %116 = sbr.rel (0) target = $region85
    $region84: #{vit_forward.1} parent=1 // pred_region
      _
    $region85: #{vit_forward.1} parent=1 // pred_fallthru
      _
    // Predicated region
    $region86: #{vit_forward.1} parent=1 // pred_check
      _
    $region87: #{vit_forward.1} parent=1 // pred_check_branch
      %118 = sbr.rel (0) target = $region89
    $region88: #{vit_forward.1} parent=1 // pred_region
      _
    $region89: #{vit_forward.1} parent=1 // pred_fallthru
      _
    // Predicated region
    $region90: #{vit_forward.1} parent=1 // pred_check
      _
    $region91: #{vit_forward.1} parent=1 // pred_check_branch
      %120 = sbr.rel (0) target = $region93
    $region92: #{vit_forward.1} parent=1 // pred_region
      _
    $region93: #{vit_forward.1} parent=1 // pred_fallthru
      _
    // Predicated region
    $region94: #{vit_forward.1} parent=1 // pred_check
      _
    $region95: #{vit_forward.1} parent=1 // pred_check_branch
      %122 = sbr.rel (0) target = $region97
    $region96: #{vit_forward.1} parent=1 // pred_region
      _
    $region97: #{vit_forward.1} parent=1 // pred_fallthru
      _
    // Predicated region
    $region98: #{vit_forward.1} parent=1 // pred_check
      _
    $region99: #{vit_forward.1} parent=1 // pred_check_branch
      %124 = sbr.rel (0) target = $region101
    $region100: #{vit_forward.1} parent=1 // pred_region
      _
    $region101: #{vit_forward.1} parent=1 // pred_fallthru
      _
    // Predicated region
    $region102: #{vit_forward.1} parent=1 // pred_check
      _
    $region103: #{vit_forward.1} parent=1 // pred_check_branch
      %126 = sbr.rel (0) target = $region105
    $region104: #{vit_forward.1} parent=1 // pred_region
      _
    $region105: #{vit_forward.1} parent=1 // pred_fallthru
      _
    // Predicated region
    $region106: #{vit_forward.1} parent=1 // pred_check
      _
    $region107: #{vit_forward.1} parent=1 // pred_check_branch
      %128 = sbr.rel (0) target = $region109
    $region108: #{vit_forward.1} parent=1 // pred_region
      _
    $region109: #{vit_forward.1} parent=1 // pred_fallthru
      _
    // Predicated region
    $region110: #{vit_forward.1} parent=1 // pred_check
      _
    $region111: #{vit_forward.1} parent=1 // pred_check_branch
      %130 = sbr.rel (0) target = $region113
    $region112: #{vit_forward.1} parent=1 // pred_region
      _
    $region113: #{vit_forward.1} parent=1 // pred_fallthru
      _
    // Predicated region
    $region114: #{vit_forward.1} parent=1 // pred_check
      _
    $region115: #{vit_forward.1} parent=1 // pred_check_branch
      %132 = sbr.rel (0) target = $region117
    $region116: #{vit_forward.1} parent=1 // pred_region
      _
    $region117: #{vit_forward.1} parent=1 // pred_fallthru
      _
    // Predicated region
    $region118: #{vit_forward.1} parent=1 // pred_check
      _
    $region119: #{vit_forward.1} parent=1 // pred_check_branch
      %134 = sbr.rel (0) target = $region121
    $region120: #{vit_forward.1} parent=1 // pred_region
      _
    $region121: #{vit_forward.1} parent=1 // pred_fallthru
      _
    // Predicated region
    $region122: #{vit_forward.1} parent=1 // pred_check
      _
    $region123: #{vit_forward.1} parent=1 // pred_check_branch
      %136 = sbr.rel (0) target = $region125
    $region124: #{vit_forward.1} parent=1 // pred_region
      _
    $region125: #{vit_forward.1} parent=1 // pred_fallthru
      _
    // Predicated region
    $region126: #{vit_forward.1} parent=1 // pred_check
      _
    $region127: #{vit_forward.1} parent=1 // pred_check_branch
      %138 = sbr.rel (0) target = $region129
    $region128: #{vit_forward.1} parent=1 // pred_region
      _
    $region129: #{vit_forward.1} parent=1 // pred_fallthru
      _
    // Predicated region
    $region130: #{vit_forward.1} parent=1 // pred_check
      _
    $region131: #{vit_forward.1} parent=1 // pred_check_branch
      %140 = sbr.rel (0) target = $region133
    $region132: #{vit_forward.1} parent=1 // pred_region
      _
    $region133: #{vit_forward.1} parent=1 // pred_fallthru
      _
    // Predicated region
    $region134: #{vit_forward.1} parent=1 // pred_check
      _
    $region135: #{vit_forward.1} parent=1 // pred_check_branch
      %142 = sbr.rel (0) target = $region137
    $region136: #{vit_forward.1} parent=1 // pred_region
      _
    $region137: #{vit_forward.1} parent=1 // pred_fallthru
      _
    %v144 = vld [vmem:[%s7] sm:$0xff]
    %v145 = vld [vmem:[%s7 + $0x8] sm:$0xff]
    %v146 = vld [vmem:[%s7 + $0x10] sm:$0xff]
    %v147 = vld [vmem:[%s7 + $0x18] sm:$0xff]
    %v148 = vld [vmem:[%s7 + $0x20] sm:$0xff]
    %v149 = vld [vmem:[%s7 + $0x28] sm:$0xff]
    %v150 = vld [vmem:[%s7 + $0x30] sm:$0xff]
    %v151 = vld [vmem:[%s7 + $0x38] sm:$0xff]
    %v152 = vld [vmem:[%s9] sm:$0xff]
    %v153 = vld [vmem:[%s9 + $0x8] sm:$0xff]
    %v154 = vld [vmem:[%s11] sm:$0xff]
    %v155 = vld [vmem:[%s1] sm:$0xff]
    %v156 = vld [vmem:[%s1 + $0x8] sm:$0xff]
    %v157 = vld [vmem:[%s1 + $0x10] sm:$0xff]
    %v158 = vld [vmem:[%s1 + $0x18] sm:$0xff]
    %v159 = vld [vmem:[%s1 + $0x20] sm:$0x3]
    %v160 = vld [vmem:[%s3] sm:$0xff]
    %v161 = vld [vmem:[%s3 + $0x8] sm:$0xff]
    %v162 = vld [vmem:[%s3 + $0x10] sm:$0xff]
    %v163 = vld [vmem:[%s3 + $0x18] sm:$0xff]
    %v164 = vld [vmem:[%s3 + $0x20] sm:$0xff]
    %v165 = vld [vmem:[%s3 + $0x28] sm:$0xff]
    %v166 = vld [vmem:[%s5] sm:$0xff]
    %v167 = vld [vmem:[%s5 + $0x8] sm:$0xff]
    %v168 = vld [vmem:[%s5 + $0x10] sm:$0xff]
    %v169 = vld [vmem:[%s5 + $0x18] sm:$0xff]
    %v170 = vld [vmem:[%s5 + $0x20] sm:$0x3]
    %vm171 = vcmask 392192
    %v173 = vsel %vm171, %v155, 0
    %v176 = vsel %vm171, %v156, 0
    %v179 = vsel %vm171, %v157, 0
    %v182 = vsel %vm171, %v158, 0
    %v185 = vsel %vm171, %v159, 0
    %187 = vmatpush.msra.mxu0 0.0
    %188 = vmatpush.msra.mxu0 0.0
    %189 = vmatpush.msra.mxu0 0.0
    %190 = vmatpush.msra.mxu0 0.0
    %191 = vmatpush.msra.mxu0 0.0
    %192 = vmatpush.msra.mxu0 0.0
    %193 = vmatpush.msra.mxu0 0.0
    %194 = vmatpush.msra.mxu0 0.0
    %195 = vmatpush.msra.mxu0 0.0
    %196 = vmatpush.msra.mxu0 0.0
    %197 = vmatpush.msra.mxu0 %v165
    %198 = vmatpush.msra.mxu0 %v164
    %199 = vmatpush.msra.mxu0 %v163
    %200 = vmatpush.msra.mxu0 %v162
    %201 = vmatpush.msra.mxu0 %v161
    %202 = vmatpush.msra.mxu0 %v160
    %203 = vmatmul.f32.gmra.mxu0 %v173
    %v204 = vpop.f32.mrf.mxu0
    %v205 = vadd.f32 %v166, %v204
    %206 = vmatmul.f32.gmra.mxu0 %v176
    %v207 = vpop.f32.mrf.mxu0
    %v208 = vadd.f32 %v167, %v207
    %209 = vmatmul.f32.gmra.mxu0 %v179
    %v210 = vpop.f32.mrf.mxu0
    %v211 = vadd.f32 %v168, %v210
    %212 = vmatmul.f32.gmra.mxu0 %v182
    %v213 = vpop.f32.mrf.mxu0
    %v214 = vadd.f32 %v169, %v213
    %215 = vmatmul.f32.gmra.mxu0 %v185
    %v216 = vpop.f32.mrf.mxu0
    %v217 = vadd.f32 %v170, %v216
    %218 = vdwg.mxu0
    %v219 = vld [vmem:[%s13] sm:$0xff]
    %v220 = vld [vmem:[%s13 + $0x8] sm:$0xff]
    %v221 = vld [vmem:[%s13 + $0x10] sm:$0xff]
    %v222 = vld [vmem:[%s13 + $0x18] sm:$0xff]
    %v223 = vld [vmem:[%s15] sm:$0x1]
    %v225 = vperm.slane %v223, 0
    %vm227 = vcmask 261120
    %v229 = vsel %vm227, %v205, 0
    %v232 = vsel %vm227, %v208, 0
    %v235 = vsel %vm227, %v211, 0
    %v238 = vsel %vm227, %v214, 0
    %v241 = vsel %vm227, %v217, 0
    %243 = vmatpush.msra.mxu0 0.0
    %244 = vmatpush.msra.mxu0 0.0
    %245 = vmatpush.msra.mxu0 0.0
    %246 = vmatpush.msra.mxu0 0.0
    %247 = vmatpush.msra.mxu0 0.0
    %248 = vmatpush.msra.mxu0 0.0
    %249 = vmatpush.msra.mxu0 0.0
    %250 = vmatpush.msra.mxu0 0.0
    %251 = vmatpush.msra.mxu0 0.0
    %252 = vmatpush.msra.mxu0 0.0
    %253 = vmatpush.msra.mxu0 0.0
    %254 = vmatpush.msra.mxu0 0.0
    %255 = vmatpush.msra.mxu0 %v222
    %256 = vmatpush.msra.mxu0 %v221
    %257 = vmatpush.msra.mxu0 %v220
    %258 = vmatpush.msra.mxu0 %v219
    %259 = vmatmul.f32.gmra.mxu0 %v229
    %v260 = vpop.f32.mrf.mxu0
    %v261 = vadd.f32 %v225, %v260
    %262 = vmatmul.f32.gmra.mxu0 %v232
    %v263 = vpop.f32.mrf.mxu0
    %v264 = vadd.f32 %v225, %v263
    %265 = vmatmul.f32.gmra.mxu0 %v235
    %v266 = vpop.f32.mrf.mxu0
    %v267 = vadd.f32 %v225, %v266
    %268 = vmatmul.f32.gmra.mxu0 %v238
    %v269 = vpop.f32.mrf.mxu0
    %v270 = vadd.f32 %v225, %v269
    %271 = vmatmul.f32.gmra.mxu0 %v241
    %v272 = vpop.f32.mrf.mxu0
    %v273 = vadd.f32 %v225, %v272
    %274 = vdwg.mxu0
    %vm278 = vcmask 1040384
    %v279 = vrot.slane %v261, 7
    %v280 = vrot.slane %v264, 7
    %v281 = vsel %vm278, %v279, %v280
    %v282 = vrot.slane %v267, 7
    %v283 = vsel %vm278, %v280, %v282
    %v285 = vsel %vm278, %v267, %v279
    %287 = vrot.lane.b32.xlu0 %v261, 96
    %v288 = vpop.permute.xlu0 %287
    %289 = vrot.lane.b32.xlu0 %v264, 96
    %v290 = vpop.permute.xlu0 %289
    %291 = vrot.lane.b32.xlu0 %v285, 96
    %v292 = vpop.permute.xlu0 %291
    %293 = vrot.lane.b32.xlu0 %v281, 96
    %v294 = vpop.permute.xlu0 %293
    %295 = vrot.lane.b32.xlu0 %v283, 96
    %v296 = vpop.permute.xlu0 %295
    %v302 = vmul.f32 %v261, %v288
    %v303 = vmul.f32 %v264, %v290
    %v304 = vmul.f32 %v267, %v292
    %v305 = vmul.f32 %v270, %v294
    %v306 = vmul.f32 %v273, %v296
    %vm309 = vcmask 1046528
    %v310 = vrot.slane %v267, 1
    %v311 = vrot.slane %v270, 1
    %v312 = vsel %vm309, %v310, %v311
    %v313 = vrot.slane %v273, 1
    %v314 = vsel %vm309, %v311, %v313
    %v316 = vsel %vm278, %v313, %v267
    %318 = vrot.lane.b32.xlu0 %v312, 96
    %v319 = vpop.permute.xlu0 %318
    %320 = vrot.lane.b32.xlu0 %v314, 96
    %v321 = vpop.permute.xlu0 %320
    %322 = vrot.lane.b32.xlu0 %v316, 96
    %v323 = vpop.permute.xlu0 %322
    %324 = vrot.lane.b32.xlu0 %v270, 96
    %v325 = vpop.permute.xlu0 %324
    %326 = vrot.lane.b32.xlu0 %v273, 96
    %v327 = vpop.permute.xlu0 %326
    %v333 = vmul.f32 %v261, %v319
    %v334 = vmul.f32 %v264, %v321
    %v335 = vmul.f32 %v267, %v323
    %v336 = vmul.f32 %v270, %v325
    %v337 = vmul.f32 %v273, %v327
    %343 = vrot.lane.b32.xlu0 %v333, 32
    %v344 = vpop.permute.xlu0 %343
    %345 = vrot.lane.b32.xlu0 %v334, 32
    %v346 = vpop.permute.xlu0 %345
    %347 = vrot.lane.b32.xlu0 %v335, 32
    %v348 = vpop.permute.xlu0 %347
    %349 = vrot.lane.b32.xlu0 %v336, 32
    %v350 = vpop.permute.xlu0 %349
    %351 = vrot.lane.b32.xlu0 %v337, 32
    %v352 = vpop.permute.xlu0 %351
    %v358 = vsel %vm227, %v302, %v344
    %v359 = vsel %vm227, %v303, %v346
    %v360 = vsel %vm227, %v304, %v348
    %v361 = vsel %vm227, %v305, %v350
    %v362 = vsel %vm227, %v306, %v352
    %vm363 = vcmask 523264
    %v365 = vsel %vm363, %v358, 0
    %v368 = vsel %vm363, %v359, 0
    %v371 = vsel %vm363, %v360, 0
    %v374 = vsel %vm363, %v361, 0
    %v377 = vsel %vm363, %v362, 0
    %379 = vmatpush.msra.mxu0 0.0
    %380 = vmatpush.msra.mxu0 0.0
    %381 = vmatpush.msra.mxu0 0.0
    %382 = vmatpush.msra.mxu0 0.0
    %383 = vmatpush.msra.mxu0 0.0
    %384 = vmatpush.msra.mxu0 0.0
    %385 = vmatpush.msra.mxu0 0.0
    %386 = vmatpush.msra.mxu0 0.0
    %387 = vmatpush.msra.mxu0 %v151
    %388 = vmatpush.msra.mxu0 %v150
    %389 = vmatpush.msra.mxu0 %v149
    %390 = vmatpush.msra.mxu0 %v148
    %391 = vmatpush.msra.mxu0 %v147
    %392 = vmatpush.msra.mxu0 %v146
    %393 = vmatpush.msra.mxu0 %v145
    %394 = vmatpush.msra.mxu0 %v144
    %395 = vmatmul.f32.gmra.mxu0 %v365
    %v396 = vpop.f32.mrf.mxu0
    %v397 = vadd.f32 0.0, %v396
    %398 = vmatmul.f32.gmra.mxu0 %v368
    %v399 = vpop.f32.mrf.mxu0
    %v400 = vadd.f32 0.0, %v399
    %401 = vmatmul.f32.gmra.mxu0 %v371
    %v402 = vpop.f32.mrf.mxu0
    %v403 = vadd.f32 0.0, %v402
    %404 = vmatmul.f32.gmra.mxu0 %v374
    %v405 = vpop.f32.mrf.mxu0
    %v406 = vadd.f32 0.0, %v405
    %407 = vmatmul.f32.gmra.mxu0 %v377
    %v408 = vpop.f32.mrf.mxu0
    %v409 = vadd.f32 0.0, %v408
    %410 = vdwg.mxu0
    %416 = vrot.lane.b32.xlu0 %v397, 120
    %v417 = vpop.permute.xlu0 %416
    %418 = vrot.lane.b32.xlu0 %v400, 120
    %v419 = vpop.permute.xlu0 %418
    %420 = vrot.lane.b32.xlu0 %v403, 120
    %v421 = vpop.permute.xlu0 %420
    %422 = vrot.lane.b32.xlu0 %v406, 120
    %v423 = vpop.permute.xlu0 %422
    %424 = vrot.lane.b32.xlu0 %v409, 120
    %v425 = vpop.permute.xlu0 %424
    %v431 = vmax.f32 %v397, %v417
    %v432 = vmax.f32 %v400, %v419
    %v433 = vmax.f32 %v403, %v421
    %v434 = vmax.f32 %v406, %v423
    %v435 = vmax.f32 %v409, %v425
    %441 = vrot.lane.b32.xlu0 %v431, 8
    %v442 = vpop.permute.xlu0 %441
    %443 = vrot.lane.b32.xlu0 %v432, 8
    %v444 = vpop.permute.xlu0 %443
    %445 = vrot.lane.b32.xlu0 %v433, 8
    %v446 = vpop.permute.xlu0 %445
    %447 = vrot.lane.b32.xlu0 %v434, 8
    %v448 = vpop.permute.xlu0 %447
    %449 = vrot.lane.b32.xlu0 %v435, 8
    %v450 = vpop.permute.xlu0 %449
    %vm456 = vcmask 64512
    %v457 = vsel %vm456, %v431, %v442
    %v458 = vsel %vm456, %v432, %v444
    %v459 = vsel %vm456, %v433, %v446
    %v460 = vsel %vm456, %v434, %v448
    %v461 = vsel %vm456, %v435, %v450
    %v462 = vsub.f32 %v397, %v457
    %v463 = vsub.f32 %v400, %v458
    %v464 = vsub.f32 %v403, %v459
    %v465 = vsub.f32 %v406, %v460
    %v466 = vsub.f32 %v409, %v461
    %v467 = vmul.f32 %v462, 1.442695
    %v468 = vpow.pop %v467
    %v469 = vmul.f32 %v463, 1.442695
    %v470 = vpow.pop %v469
    %v471 = vmul.f32 %v464, 1.442695
    %v472 = vpow.pop %v471
    %v473 = vmul.f32 %v465, 1.442695
    %v474 = vpow.pop %v473
    %v475 = vmul.f32 %v466, 1.442695
    %v476 = vpow.pop %v475
    %482 = vrot.lane.b32.xlu0 %v468, 120
    %v483 = vpop.permute.xlu0 %482
    %484 = vrot.lane.b32.xlu0 %v470, 120
    %v485 = vpop.permute.xlu0 %484
    %486 = vrot.lane.b32.xlu0 %v472, 120
    %v487 = vpop.permute.xlu0 %486
    %488 = vrot.lane.b32.xlu0 %v474, 120
    %v489 = vpop.permute.xlu0 %488
    %490 = vrot.lane.b32.xlu0 %v476, 120
    %v491 = vpop.permute.xlu0 %490
    %v497 = vadd.f32 %v468, %v483
    %v498 = vadd.f32 %v470, %v485
    %v499 = vadd.f32 %v472, %v487
    %v500 = vadd.f32 %v474, %v489
    %v501 = vadd.f32 %v476, %v491
    %v502 = vrcp.pop %v497
    %v503 = vrcp.pop %v498
    %v504 = vrcp.pop %v499
    %v505 = vrcp.pop %v500
    %v506 = vrcp.pop %v501
    %vm507 = vcmask 130048
    %v508 = vsel %vm507, %v468, 0
    %v510 = vsel %vm507, %v470, 0
    %v512 = vsel %vm507, %v472, 0
    %v514 = vsel %vm507, %v474, 0
    %v516 = vsel %vm507, %v476, 0
    %518 = vmatpush.msra.mxu0 0.0
    %519 = vmatpush.msra.mxu0 0.0
    %520 = vmatpush.msra.mxu0 0.0
    %521 = vmatpush.msra.mxu0 0.0
    %522 = vmatpush.msra.mxu0 0.0
    %523 = vmatpush.msra.mxu0 0.0
    %524 = vmatpush.msra.mxu0 0.0
    %525 = vmatpush.msra.mxu0 0.0
    %526 = vmatpush.msra.mxu0 0.0
    %527 = vmatpush.msra.mxu0 0.0
    %528 = vmatpush.msra.mxu0 0.0
    %529 = vmatpush.msra.mxu0 0.0
    %530 = vmatpush.msra.mxu0 0.0
    %531 = vmatpush.msra.mxu0 0.0
    %532 = vmatpush.msra.mxu0 %v153
    %533 = vmatpush.msra.mxu0 %v152
    %534 = vmatmul.f32.gmra.mxu0 %v508
    %v535 = vpop.f32.mrf.mxu0
    %v536 = vadd.f32 0.0, %v535
    %537 = vmatmul.f32.gmra.mxu0 %v510
    %v538 = vpop.f32.mrf.mxu0
    %v539 = vadd.f32 0.0, %v538
    %540 = vmatmul.f32.gmra.mxu0 %v512
    %v541 = vpop.f32.mrf.mxu0
    %v542 = vadd.f32 0.0, %v541
    %543 = vmatmul.f32.gmra.mxu0 %v514
    %v544 = vpop.f32.mrf.mxu0
    %v545 = vadd.f32 0.0, %v544
    %546 = vmatmul.f32.gmra.mxu0 %v516
    %v547 = vpop.f32.mrf.mxu0
    %v548 = vadd.f32 0.0, %v547
    %549 = vdwg.mxu0
    %550 = vrot.lane.b32.xlu0 %v261, 64
    %v551 = vpop.permute.xlu0 %550
    %552 = vrot.lane.b32.xlu0 %v264, 64
    %v553 = vpop.permute.xlu0 %552
    %554 = vrot.lane.b32.xlu0 %v285, 64
    %v555 = vpop.permute.xlu0 %554
    %556 = vrot.lane.b32.xlu0 %v281, 64
    %v557 = vpop.permute.xlu0 %556
    %558 = vrot.lane.b32.xlu0 %v283, 64
    %v559 = vpop.permute.xlu0 %558
    %v565 = vmul.f32 %v536, %v551
    %v566 = vmul.f32 %v539, %v553
    %v567 = vmul.f32 %v542, %v555
    %v568 = vmul.f32 %v545, %v557
    %v569 = vmul.f32 %v548, %v559
    %v570 = vmul.f32 %v536, %v319
    %v571 = vmul.f32 %v539, %v321
    %v572 = vmul.f32 %v542, %v323
    %v573 = vmul.f32 %v545, %v325
    %v574 = vmul.f32 %v548, %v327
    %580 = vrot.lane.b32.xlu0 %v570, 96
    %v581 = vpop.permute.xlu0 %580
    %582 = vrot.lane.b32.xlu0 %v571, 96
    %v583 = vpop.permute.xlu0 %582
    %584 = vrot.lane.b32.xlu0 %v572, 96
    %v585 = vpop.permute.xlu0 %584
    %586 = vrot.lane.b32.xlu0 %v573, 96
    %v587 = vpop.permute.xlu0 %586
    %588 = vrot.lane.b32.xlu0 %v574, 96
    %v589 = vpop.permute.xlu0 %588
    %v595 = vadd.f32 %v565, %v581
    %v596 = vadd.f32 %v566, %v583
    %v597 = vadd.f32 %v567, %v585
    %v598 = vadd.f32 %v568, %v587
    %v599 = vadd.f32 %v569, %v589
    %v601 = vsel %vm456, %v502, 0
    %v604 = vsel %vm456, %v503, 0
    %v607 = vsel %vm456, %v504, 0
    %v610 = vsel %vm456, %v505, 0
    %v613 = vsel %vm456, %v506, 0
    %615 = vmatpush.msra.mxu0 0.0
    %616 = vmatpush.msra.mxu0 0.0
    %617 = vmatpush.msra.mxu0 0.0
    %618 = vmatpush.msra.mxu0 0.0
    %619 = vmatpush.msra.mxu0 0.0
    %620 = vmatpush.msra.mxu0 0.0
    %621 = vmatpush.msra.mxu0 0.0
    %622 = vmatpush.msra.mxu0 0.0
    %623 = vmatpush.msra.mxu0 0.0
    %624 = vmatpush.msra.mxu0 0.0
    %625 = vmatpush.msra.mxu0 0.0
    %626 = vmatpush.msra.mxu0 0.0
    %627 = vmatpush.msra.mxu0 0.0
    %628 = vmatpush.msra.mxu0 0.0
    %629 = vmatpush.msra.mxu0 0.0
    %630 = vmatpush.msra.mxu0 %v154
    %631 = vmatmul.f32.gmra.mxu0 %v601
    %v632 = vpop.f32.mrf.mxu0
    %v633 = vadd.f32 0.0, %v632
    %634 = vmatmul.f32.gmra.mxu0 %v604
    %v635 = vpop.f32.mrf.mxu0
    %v636 = vadd.f32 0.0, %v635
    %637 = vmatmul.f32.gmra.mxu0 %v607
    %v638 = vpop.f32.mrf.mxu0
    %v639 = vadd.f32 0.0, %v638
    %640 = vmatmul.f32.gmra.mxu0 %v610
    %v641 = vpop.f32.mrf.mxu0
    %v642 = vadd.f32 0.0, %v641
    %643 = vmatmul.f32.gmra.mxu0 %v613
    %v644 = vpop.f32.mrf.mxu0
    %v645 = vadd.f32 0.0, %v644
    %646 = vdwg.mxu0
    %v647 = vmul.f32 %v595, %v633
    %v648 = vmul.f32 %v596, %v636
    %v649 = vmul.f32 %v597, %v639
    %v650 = vmul.f32 %v598, %v642
    %v651 = vmul.f32 %v599, %v645
    %v652 = vld [vmem:[%s17] sm:$0xff]
    %v653 = vld [vmem:[%s17 + $0x8] sm:$0xff]
    %v654 = vld [vmem:[%s17 + $0x10] sm:$0xff]
    %v655 = vld [vmem:[%s17 + $0x18] sm:$0xff]
    %v656 = vld [vmem:[%s19] sm:$0x1]
    %v658 = vperm.slane %v656, 0
    %v661 = vsel %vm227, %v647, 0
    %v664 = vsel %vm227, %v648, 0
    %v667 = vsel %vm227, %v649, 0
    %v670 = vsel %vm227, %v650, 0
    %v673 = vsel %vm227, %v651, 0
    %675 = vmatpush.msra.mxu0 0.0
    %676 = vmatpush.msra.mxu0 0.0
    %677 = vmatpush.msra.mxu0 0.0
    %678 = vmatpush.msra.mxu0 0.0
    %679 = vmatpush.msra.mxu0 0.0
    %680 = vmatpush.msra.mxu0 0.0
    %681 = vmatpush.msra.mxu0 0.0
    %682 = vmatpush.msra.mxu0 0.0
    %683 = vmatpush.msra.mxu0 0.0
    %684 = vmatpush.msra.mxu0 0.0
    %685 = vmatpush.msra.mxu0 0.0
    %686 = vmatpush.msra.mxu0 0.0
    %687 = vmatpush.msra.mxu0 %v655
    %688 = vmatpush.msra.mxu0 %v654
    %689 = vmatpush.msra.mxu0 %v653
    %690 = vmatpush.msra.mxu0 %v652
    %691 = vmatmul.f32.gmra.mxu0 %v661
    %v692 = vpop.f32.mrf.mxu0
    %v693 = vadd.f32 %v658, %v692
    %694 = vmatmul.f32.gmra.mxu0 %v664
    %v695 = vpop.f32.mrf.mxu0
    %v696 = vadd.f32 %v658, %v695
    %697 = vmatmul.f32.gmra.mxu0 %v667
    %v698 = vpop.f32.mrf.mxu0
    %v699 = vadd.f32 %v658, %v698
    %700 = vmatmul.f32.gmra.mxu0 %v670
    %v701 = vpop.f32.mrf.mxu0
    %v702 = vadd.f32 %v658, %v701
    %703 = vmatmul.f32.gmra.mxu0 %v673
    %v704 = vpop.f32.mrf.mxu0
    %v705 = vadd.f32 %v658, %v704
    %706 = vdwg.mxu0
    %v707 = vadd.f32 %v205, %v693
    %v708 = vadd.f32 %v208, %v696
    %v709 = vadd.f32 %v211, %v699
    %v710 = vadd.f32 %v214, %v702
    %v711 = vadd.f32 %v217, %v705
    %v712 = vld [vmem:[%s21] sm:$0x1]
    %v713 = vld [vmem:[%s23] sm:$0x1]
    %v714 = vsel %vm227, %v707, 0.0
    %715 = vadd.xlane.f32.xlu0 %v714
    %v716 = vpop.xlane.xlu0 %715
    %v717 = vsel %vm227, %v708, 0.0
    %718 = vadd.xlane.f32.xlu0 %v717
    %v719 = vpop.xlane.xlu0 %718
    %v720 = vsel %vm227, %v709, 0.0
    %721 = vadd.xlane.f32.xlu0 %v720
    %v722 = vpop.xlane.xlu0 %721
    %v723 = vsel %vm227, %v710, 0.0
    %724 = vadd.xlane.f32.xlu0 %v723
    %v725 = vpop.xlane.xlu0 %724
    %vm726 = vcmask 254976
    %v727 = vsel %vm726, %v711, 0.0
    %728 = vadd.xlane.f32.xlu0 %v727
    %v729 = vpop.xlane.xlu0 %728
    %v730 = vrcp.pop 32.0
    %v731 = vmul.f32 32.0, %v730
    %v732 = vsub.f32 1.0, %v731
    %v733 = vmul.f32 %v730, %v732
    %v734 = vadd.f32 %v730, %v733
    %vm735 = vweird.f32 %v730
    %v736 = vsel %vm735, %v730, %v734
    %v737 = vmul.f32 %v716, %v736
    %v738 = vmul.f32 %v719, %v736
    %v739 = vmul.f32 %v722, %v736
    %v740 = vmul.f32 %v725, %v736
    %v741 = vmul.f32 %v729, %v736
    %v742 = vsub.f32 %v707, %v737
    %v743 = vsub.f32 %v708, %v738
    %v744 = vsub.f32 %v709, %v739
    %v745 = vsub.f32 %v710, %v740
    %v746 = vsub.f32 %v711, %v741
    %v747 = vmul.f32 %v742, %v742
    %v748 = vmul.f32 %v743, %v743
    %v749 = vmul.f32 %v744, %v744
    %v750 = vmul.f32 %v745, %v745
    %v751 = vmul.f32 %v746, %v746
    %v752 = vsel %vm227, %v747, 0.0
    %753 = vadd.xlane.f32.xlu0 %v752
    %v754 = vpop.xlane.xlu0 %753
    %v755 = vsel %vm227, %v748, 0.0
    %756 = vadd.xlane.f32.xlu0 %v755
    %v757 = vpop.xlane.xlu0 %756
    %v758 = vsel %vm227, %v749, 0.0
    %759 = vadd.xlane.f32.xlu0 %v758
    %v760 = vpop.xlane.xlu0 %759
    %v761 = vsel %vm227, %v750, 0.0
    %762 = vadd.xlane.f32.xlu0 %v761
    %v763 = vpop.xlane.xlu0 %762
    %v764 = vsel %vm726, %v751, 0.0
    %765 = vadd.xlane.f32.xlu0 %v764
    %v766 = vpop.xlane.xlu0 %765
    %v767 = vmul.f32 %v754, %v736
    %v768 = vmul.f32 %v757, %v736
    %v769 = vmul.f32 %v760, %v736
    %v770 = vmul.f32 %v763, %v736
    %v771 = vmul.f32 %v766, %v736
    %v772 = vadd.f32 %v767, 1e-05
    %v773 = vadd.f32 %v768, 1e-05
    %v774 = vadd.f32 %v769, 1e-05
    %v775 = vadd.f32 %v770, 1e-05
    %v776 = vadd.f32 %v771, 1e-05
    %v777 = vrsqrt.pop %v772
    %v778 = vmul.f32 %v777, %v772
    %v779 = vmul.f32 %v778, %v777
    %v780 = vmul.f32 0.5, %v779
    %v781 = vsub.f32 1.5, %v780
    %v782 = vmul.f32 %v777, %v781
    %vm783 = vweird.f32 %v772
    %vm784 = vweird.f32 %v777
    %vm785 = vmor %vm783, %vm784
    %v786 = vsel %vm785, %v777, %v782
    %v787 = vrsqrt.pop %v773
    %v788 = vmul.f32 %v787, %v773
    %v789 = vmul.f32 %v788, %v787
    %v790 = vmul.f32 0.5, %v789
    %v791 = vsub.f32 1.5, %v790
    %v792 = vmul.f32 %v787, %v791
    %vm793 = vweird.f32 %v773
    %vm794 = vweird.f32 %v787
    %vm795 = vmor %vm793, %vm794
    %v796 = vsel %vm795, %v787, %v792
    %v797 = vrsqrt.pop %v774
    %v798 = vmul.f32 %v797, %v774
    %v799 = vmul.f32 %v798, %v797
    %v800 = vmul.f32 0.5, %v799
    %v801 = vsub.f32 1.5, %v800
    %v802 = vmul.f32 %v797, %v801
    %vm803 = vweird.f32 %v774
    %vm804 = vweird.f32 %v797
    %vm805 = vmor %vm803, %vm804
    %v806 = vsel %vm805, %v797, %v802
    %v807 = vrsqrt.pop %v775
    %v808 = vmul.f32 %v807, %v775
    %v809 = vmul.f32 %v808, %v807
    %v810 = vmul.f32 0.5, %v809
    %v811 = vsub.f32 1.5, %v810
    %v812 = vmul.f32 %v807, %v811
    %vm813 = vweird.f32 %v775
    %vm814 = vweird.f32 %v807
    %vm815 = vmor %vm813, %vm814
    %v816 = vsel %vm815, %v807, %v812
    %v817 = vrsqrt.pop %v776
    %v818 = vmul.f32 %v817, %v776
    %v819 = vmul.f32 %v818, %v817
    %v820 = vmul.f32 0.5, %v819
    %v821 = vsub.f32 1.5, %v820
    %v822 = vmul.f32 %v817, %v821
    %vm823 = vweird.f32 %v776
    %vm824 = vweird.f32 %v817
    %vm825 = vmor %vm823, %vm824
    %v826 = vsel %vm825, %v817, %v822
    %v827 = vmul.f32 %v742, %v786
    %v828 = vmul.f32 %v743, %v796
    %v829 = vmul.f32 %v744, %v806
    %v830 = vmul.f32 %v745, %v816
    %v831 = vmul.f32 %v746, %v826
    %v833 = vperm.slane %v712, 0
    %v835 = vmul.f32 %v827, %v833
    %v836 = vmul.f32 %v828, %v833
    %v837 = vmul.f32 %v829, %v833
    %v838 = vmul.f32 %v830, %v833
    %v839 = vmul.f32 %v831, %v833
    %v841 = vperm.slane %v713, 0
    %v843 = vadd.f32 %v835, %v841
    %v844 = vadd.f32 %v836, %v841
    %v845 = vadd.f32 %v837, %v841
    %v846 = vadd.f32 %v838, %v841
    %v847 = vadd.f32 %v839, %v841
    %v848 = vpack.c.bf16 %v844, %v843
    %v849 = vpack.c.bf16 %v846, %v845
    %v850 = vpack.c.bf16 %v847, %v847
    %v851 = vld [vmem:[%s25] sm:$0xff]
    %v852 = vld [vmem:[%s25 + $0x8] sm:$0xff]
    %v853 = vld [vmem:[%s25 + $0x10] sm:$0xff]
    %v854 = vld [vmem:[%s25 + $0x18] sm:$0xff]
    %v855 = vld [vmem:[%s25 + $0x20] sm:$0xff]
    %v856 = vld [vmem:[%s25 + $0x28] sm:$0xff]
    %v857 = vld [vmem:[%s25 + $0x30] sm:$0xff]
    %v858 = vld [vmem:[%s25 + $0x38] sm:$0xff]
    %v859 = vld [vmem:[%s25 + $0x40] sm:$0xff]
    %v860 = vld [vmem:[%s25 + $0x48] sm:$0xff]
    %v861 = vld [vmem:[%s25 + $0x50] sm:$0xff]
    %v862 = vld [vmem:[%s25 + $0x58] sm:$0xff]
    %v863 = vld [vmem:[%s25 + $0x60] sm:$0xff]
    %v864 = vld [vmem:[%s25 + $0x68] sm:$0xff]
    %v865 = vld [vmem:[%s25 + $0x70] sm:$0xff]
    %v866 = vld [vmem:[%s25 + $0x78] sm:$0xff]
    %v867 = vld [vmem:[%s25 + $0x80] sm:$0xff]
    %v868 = vld [vmem:[%s25 + $0x88] sm:$0xff]
    %v869 = vld [vmem:[%s25 + $0x90] sm:$0xff]
    %v870 = vld [vmem:[%s25 + $0x98] sm:$0xff]
    %v871 = vld [vmem:[%s25 + $0xa0] sm:$0xff]
    %v872 = vld [vmem:[%s25 + $0xa8] sm:$0xff]
    %v873 = vld [vmem:[%s25 + $0xb0] sm:$0xff]
    %v874 = vld [vmem:[%s25 + $0xb8] sm:$0xff]
    %v875 = vld [vmem:[%s25 + $0xc0] sm:$0xff]
    %v876 = vld [vmem:[%s25 + $0xc8] sm:$0xff]
    %v877 = vld [vmem:[%s25 + $0xd0] sm:$0xff]
    %v878 = vld [vmem:[%s25 + $0xd8] sm:$0xff]
    %v879 = vld [vmem:[%s25 + $0xe0] sm:$0xff]
    %v880 = vld [vmem:[%s25 + $0xe8] sm:$0xff]
    %v881 = vld [vmem:[%s25 + $0xf0] sm:$0xff]
    %v882 = vld [vmem:[%s25 + $0xf8] sm:$0xff]
    %v883 = vld [vmem:[%s27] sm:$0xff]
    %v884 = vld [vmem:[%s27 + $0x8] sm:$0xff]
    %v887 = vperm.slane %v883, 0
    %v888 = vperm.slane %v883, 1
    %v889 = vperm.slane %v883, 2
    %v890 = vperm.slane %v883, 3
    %v891 = vperm.slane %v883, 4
    %v892 = vperm.slane %v883, 5
    %v893 = vperm.slane %v883, 6
    %v894 = vperm.slane %v883, 7
    %v895 = vperm.slane %v884, 0
    %v896 = vperm.slane %v884, 1
    %v897 = vperm.slane %v884, 2
    %v898 = vperm.slane %v884, 3
    %v899 = vperm.slane %v884, 4
    %v900 = vperm.slane %v884, 5
    %v901 = vperm.slane %v884, 6
    %v902 = vperm.slane %v884, 7
    %v951 = vunpack.c.l.b16 %v851
    %v952 = vunpack.c.h.b16 %v851
    %v953 = vunpack.c.l.b16 %v852
    %v954 = vunpack.c.h.b16 %v852
    %v955 = vunpack.c.l.b16 %v853
    %v956 = vunpack.c.h.b16 %v853
    %v957 = vunpack.c.l.b16 %v854
    %v958 = vunpack.c.h.b16 %v854
    %v959 = vunpack.c.l.b16 %v855
    %v960 = vunpack.c.h.b16 %v855
    %v961 = vunpack.c.l.b16 %v856
    %v962 = vunpack.c.h.b16 %v856
    %v963 = vunpack.c.l.b16 %v857
    %v964 = vunpack.c.h.b16 %v857
    %v965 = vunpack.c.l.b16 %v858
    %v966 = vunpack.c.h.b16 %v858
    %v967 = vunpack.c.l.b16 %v859
    %v968 = vunpack.c.h.b16 %v859
    %v969 = vunpack.c.l.b16 %v860
    %v970 = vunpack.c.h.b16 %v860
    %v971 = vunpack.c.l.b16 %v861
    %v972 = vunpack.c.h.b16 %v861
    %v973 = vunpack.c.l.b16 %v862
    %v974 = vunpack.c.h.b16 %v862
    %v975 = vunpack.c.l.b16 %v863
    %v976 = vunpack.c.h.b16 %v863
    %v977 = vunpack.c.l.b16 %v864
    %v978 = vunpack.c.h.b16 %v864
    %v979 = vunpack.c.l.b16 %v865
    %v980 = vunpack.c.h.b16 %v865
    %v981 = vunpack.c.l.b16 %v866
    %v982 = vunpack.c.h.b16 %v866
    %v983 = vunpack.c.l.b16 %v867
    %v984 = vunpack.c.h.b16 %v867
    %v985 = vunpack.c.l.b16 %v868
    %v986 = vunpack.c.h.b16 %v868
    %v987 = vunpack.c.l.b16 %v869
    %v988 = vunpack.c.h.b16 %v869
    %v989 = vunpack.c.l.b16 %v870
    %v990 = vunpack.c.h.b16 %v870
    %v991 = vunpack.c.l.b16 %v871
    %v992 = vunpack.c.h.b16 %v871
    %v993 = vunpack.c.l.b16 %v872
    %v994 = vunpack.c.h.b16 %v872
    %v995 = vunpack.c.l.b16 %v873
    %v996 = vunpack.c.h.b16 %v873
    %v997 = vunpack.c.l.b16 %v874
    %v998 = vunpack.c.h.b16 %v874
    %v999 = vunpack.c.l.b16 %v875
    %v1000 = vunpack.c.h.b16 %v875
    %v1001 = vunpack.c.l.b16 %v876
    %v1002 = vunpack.c.h.b16 %v876
    %v1003 = vunpack.c.l.b16 %v877
    %v1004 = vunpack.c.h.b16 %v877
    %v1005 = vunpack.c.l.b16 %v878
    %v1006 = vunpack.c.h.b16 %v878
    %v1007 = vunpack.c.l.b16 %v879
    %v1008 = vunpack.c.h.b16 %v879
    %v1009 = vunpack.c.l.b16 %v880
    %v1010 = vunpack.c.h.b16 %v880
    %v1011 = vunpack.c.l.b16 %v881
    %v1012 = vunpack.c.h.b16 %v881
    %v1013 = vunpack.c.l.b16 %v882
    %v1014 = vunpack.c.h.b16 %v882
    %v1015 = vpack.c.b16 %v967, %v951
    %v1016 = vpack.c.b16 %v968, %v952
    %v1017 = vpack.c.b16 %v969, %v953
    %v1018 = vpack.c.b16 %v970, %v954
    %v1019 = vpack.c.b16 %v971, %v955
    %v1020 = vpack.c.b16 %v972, %v956
    %v1021 = vpack.c.b16 %v973, %v957
    %v1022 = vpack.c.b16 %v974, %v958
    %v1023 = vpack.c.b16 %v975, %v959
    %v1024 = vpack.c.b16 %v976, %v960
    %v1025 = vpack.c.b16 %v977, %v961
    %v1026 = vpack.c.b16 %v978, %v962
    %v1027 = vpack.c.b16 %v979, %v963
    %v1028 = vpack.c.b16 %v980, %v964
    %v1029 = vpack.c.b16 %v981, %v965
    %v1030 = vpack.c.b16 %v982, %v966
    %v1031 = vpack.c.b16 %v999, %v983
    %v1032 = vpack.c.b16 %v1000, %v984
    %v1033 = vpack.c.b16 %v1001, %v985
    %v1034 = vpack.c.b16 %v1002, %v986
    %v1035 = vpack.c.b16 %v1003, %v987
    %v1036 = vpack.c.b16 %v1004, %v988
    %v1037 = vpack.c.b16 %v1005, %v989
    %v1038 = vpack.c.b16 %v1006, %v990
    %v1039 = vpack.c.b16 %v1007, %v991
    %v1040 = vpack.c.b16 %v1008, %v992
    %v1041 = vpack.c.b16 %v1009, %v993
    %v1042 = vpack.c.b16 %v1010, %v994
    %v1043 = vpack.c.b16 %v1011, %v995
    %v1044 = vpack.c.b16 %v1012, %v996
    %v1045 = vpack.c.b16 %v1013, %v997
    %v1046 = vpack.c.b16 %v1014, %v998
    %v1080 = vsel %vm227, %v848, 0
    %v1083 = vsel %vm227, %v849, 0
    %v1086 = vsel %vm227, %v850, 0
    %1088 = vmatpush.bf16.msra.mxu0 0
    %1089 = vmatpush.bf16.msra.mxu0 0
    %1090 = vmatpush.bf16.msra.mxu0 0
    %1091 = vmatpush.bf16.msra.mxu0 0
    %1092 = vmatpush.bf16.msra.mxu0 0
    %1093 = vmatpush.bf16.msra.mxu0 0
    %1094 = vmatpush.bf16.msra.mxu0 %v1031
    %1095 = vmatpush.bf16.msra.mxu0 %v1015
    %1096 = vmatmul.bf16.gmra.mxu0 %v1080
    %v1097 = vpop.f32.mrf.mxu0
    %v1098 = vadd.f32 %v887, %v1097
    %v1099 = vpop.f32.mrf.mxu0
    %v1100 = vadd.f32 %v887, %v1099
    %1101 = vmatmul.bf16.gmra.mxu0 %v1083
    %v1102 = vpop.f32.mrf.mxu0
    %v1103 = vadd.f32 %v887, %v1102
    %v1104 = vpop.f32.mrf.mxu0
    %v1105 = vadd.f32 %v887, %v1104
    %1106 = vmatmul.bf16.gmra.mxu0 %v1086
    %v1107 = vpop.f32.mrf.mxu0
    %v1108 = vadd.f32 %v887, %v1107
    %v1109 = vpop.f32.mrf.mxu0
    %1110 = vdwg.mxu0
    %1111 = vmatpush.bf16.msra.mxu0 0
    %1112 = vmatpush.bf16.msra.mxu0 0
    %1113 = vmatpush.bf16.msra.mxu0 0
    %1114 = vmatpush.bf16.msra.mxu0 0
    %1115 = vmatpush.bf16.msra.mxu0 0
    %1116 = vmatpush.bf16.msra.mxu0 0
    %1117 = vmatpush.bf16.msra.mxu0 %v1032
    %1118 = vmatpush.bf16.msra.mxu0 %v1016
    %1119 = vmatmul.bf16.gmra.mxu0 %v1080
    %v1120 = vpop.f32.mrf.mxu0
    %v1121 = vadd.f32 %v888, %v1120
    %v1122 = vpop.f32.mrf.mxu0
    %v1123 = vadd.f32 %v888, %v1122
    %1124 = vmatmul.bf16.gmra.mxu0 %v1083
    %v1125 = vpop.f32.mrf.mxu0
    %v1126 = vadd.f32 %v888, %v1125
    %v1127 = vpop.f32.mrf.mxu0
    %v1128 = vadd.f32 %v888, %v1127
    %1129 = vmatmul.bf16.gmra.mxu0 %v1086
    %v1130 = vpop.f32.mrf.mxu0
    %v1131 = vadd.f32 %v888, %v1130
    %v1132 = vpop.f32.mrf.mxu0
    %1133 = vdwg.mxu0
    %1134 = vmatpush.bf16.msra.mxu0 0
    %1135 = vmatpush.bf16.msra.mxu0 0
    %1136 = vmatpush.bf16.msra.mxu0 0
    %1137 = vmatpush.bf16.msra.mxu0 0
    %1138 = vmatpush.bf16.msra.mxu0 0
    %1139 = vmatpush.bf16.msra.mxu0 0
    %1140 = vmatpush.bf16.msra.mxu0 %v1033
    %1141 = vmatpush.bf16.msra.mxu0 %v1017
    %1142 = vmatmul.bf16.gmra.mxu0 %v1080
    %v1143 = vpop.f32.mrf.mxu0
    %v1144 = vadd.f32 %v889, %v1143
    %v1145 = vpop.f32.mrf.mxu0
    %v1146 = vadd.f32 %v889, %v1145
    %1147 = vmatmul.bf16.gmra.mxu0 %v1083
    %v1148 = vpop.f32.mrf.mxu0
    %v1149 = vadd.f32 %v889, %v1148
    %v1150 = vpop.f32.mrf.mxu0
    %v1151 = vadd.f32 %v889, %v1150
    %1152 = vmatmul.bf16.gmra.mxu0 %v1086
    %v1153 = vpop.f32.mrf.mxu0
    %v1154 = vadd.f32 %v889, %v1153
    %v1155 = vpop.f32.mrf.mxu0
    %1156 = vdwg.mxu0
    %1157 = vmatpush.bf16.msra.mxu0 0
    %1158 = vmatpush.bf16.msra.mxu0 0
    %1159 = vmatpush.bf16.msra.mxu0 0
    %1160 = vmatpush.bf16.msra.mxu0 0
    %1161 = vmatpush.bf16.msra.mxu0 0
    %1162 = vmatpush.bf16.msra.mxu0 0
    %1163 = vmatpush.bf16.msra.mxu0 %v1034
    %1164 = vmatpush.bf16.msra.mxu0 %v1018
    %1165 = vmatmul.bf16.gmra.mxu0 %v1080
    %v1166 = vpop.f32.mrf.mxu0
    %v1167 = vadd.f32 %v890, %v1166
    %v1168 = vpop.f32.mrf.mxu0
    %v1169 = vadd.f32 %v890, %v1168
    %1170 = vmatmul.bf16.gmra.mxu0 %v1083
    %v1171 = vpop.f32.mrf.mxu0
    %v1172 = vadd.f32 %v890, %v1171
    %v1173 = vpop.f32.mrf.mxu0
    %v1174 = vadd.f32 %v890, %v1173
    %1175 = vmatmul.bf16.gmra.mxu0 %v1086
    %v1176 = vpop.f32.mrf.mxu0
    %v1177 = vadd.f32 %v890, %v1176
    %v1178 = vpop.f32.mrf.mxu0
    %1179 = vdwg.mxu0
    %1180 = vmatpush.bf16.msra.mxu0 0
    %1181 = vmatpush.bf16.msra.mxu0 0
    %1182 = vmatpush.bf16.msra.mxu0 0
    %1183 = vmatpush.bf16.msra.mxu0 0
    %1184 = vmatpush.bf16.msra.mxu0 0
    %1185 = vmatpush.bf16.msra.mxu0 0
    %1186 = vmatpush.bf16.msra.mxu0 %v1035
    %1187 = vmatpush.bf16.msra.mxu0 %v1019
    %1188 = vmatmul.bf16.gmra.mxu0 %v1080
    %v1189 = vpop.f32.mrf.mxu0
    %v1190 = vadd.f32 %v891, %v1189
    %v1191 = vpop.f32.mrf.mxu0
    %v1192 = vadd.f32 %v891, %v1191
    %1193 = vmatmul.bf16.gmra.mxu0 %v1083
    %v1194 = vpop.f32.mrf.mxu0
    %v1195 = vadd.f32 %v891, %v1194
    %v1196 = vpop.f32.mrf.mxu0
    %v1197 = vadd.f32 %v891, %v1196
    %1198 = vmatmul.bf16.gmra.mxu0 %v1086
    %v1199 = vpop.f32.mrf.mxu0
    %v1200 = vadd.f32 %v891, %v1199
    %v1201 = vpop.f32.mrf.mxu0
    %1202 = vdwg.mxu0
    %1203 = vmatpush.bf16.msra.mxu0 0
    %1204 = vmatpush.bf16.msra.mxu0 0
    %1205 = vmatpush.bf16.msra.mxu0 0
    %1206 = vmatpush.bf16.msra.mxu0 0
    %1207 = vmatpush.bf16.msra.mxu0 0
    %1208 = vmatpush.bf16.msra.mxu0 0
    %1209 = vmatpush.bf16.msra.mxu0 %v1036
    %1210 = vmatpush.bf16.msra.mxu0 %v1020
    %1211 = vmatmul.bf16.gmra.mxu0 %v1080
    %v1212 = vpop.f32.mrf.mxu0
    %v1213 = vadd.f32 %v892, %v1212
    %v1214 = vpop.f32.mrf.mxu0
    %v1215 = vadd.f32 %v892, %v1214
    %1216 = vmatmul.bf16.gmra.mxu0 %v1083
    %v1217 = vpop.f32.mrf.mxu0
    %v1218 = vadd.f32 %v892, %v1217
    %v1219 = vpop.f32.mrf.mxu0
    %v1220 = vadd.f32 %v892, %v1219
    %1221 = vmatmul.bf16.gmra.mxu0 %v1086
    %v1222 = vpop.f32.mrf.mxu0
    %v1223 = vadd.f32 %v892, %v1222
    %v1224 = vpop.f32.mrf.mxu0
    %1225 = vdwg.mxu0
    %1226 = vmatpush.bf16.msra.mxu0 0
    %1227 = vmatpush.bf16.msra.mxu0 0
    %1228 = vmatpush.bf16.msra.mxu0 0
    %1229 = vmatpush.bf16.msra.mxu0 0
    %1230 = vmatpush.bf16.msra.mxu0 0
    %1231 = vmatpush.bf16.msra.mxu0 0
    %1232 = vmatpush.bf16.msra.mxu0 %v1037
    %1233 = vmatpush.bf16.msra.mxu0 %v1021
    %1234 = vmatmul.bf16.gmra.mxu0 %v1080
    %v1235 = vpop.f32.mrf.mxu0
    %v1236 = vadd.f32 %v893, %v1235
    %v1237 = vpop.f32.mrf.mxu0
    %v1238 = vadd.f32 %v893, %v1237
    %1239 = vmatmul.bf16.gmra.mxu0 %v1083
    %v1240 = vpop.f32.mrf.mxu0
    %v1241 = vadd.f32 %v893, %v1240
    %v1242 = vpop.f32.mrf.mxu0
    %v1243 = vadd.f32 %v893, %v1242
    %1244 = vmatmul.bf16.gmra.mxu0 %v1086
    %v1245 = vpop.f32.mrf.mxu0
    %v1246 = vadd.f32 %v893, %v1245
    %v1247 = vpop.f32.mrf.mxu0
    %1248 = vdwg.mxu0
    %1249 = vmatpush.bf16.msra.mxu0 0
    %1250 = vmatpush.bf16.msra.mxu0 0
    %1251 = vmatpush.bf16.msra.mxu0 0
    %1252 = vmatpush.bf16.msra.mxu0 0
    %1253 = vmatpush.bf16.msra.mxu0 0
    %1254 = vmatpush.bf16.msra.mxu0 0
    %1255 = vmatpush.bf16.msra.mxu0 %v1038
    %1256 = vmatpush.bf16.msra.mxu0 %v1022
    %1257 = vmatmul.bf16.gmra.mxu0 %v1080
    %v1258 = vpop.f32.mrf.mxu0
    %v1259 = vadd.f32 %v894, %v1258
    %v1260 = vpop.f32.mrf.mxu0
    %v1261 = vadd.f32 %v894, %v1260
    %1262 = vmatmul.bf16.gmra.mxu0 %v1083
    %v1263 = vpop.f32.mrf.mxu0
    %v1264 = vadd.f32 %v894, %v1263
    %v1265 = vpop.f32.mrf.mxu0
    %v1266 = vadd.f32 %v894, %v1265
    %1267 = vmatmul.bf16.gmra.mxu0 %v1086
    %v1268 = vpop.f32.mrf.mxu0
    %v1269 = vadd.f32 %v894, %v1268
    %v1270 = vpop.f32.mrf.mxu0
    %1271 = vdwg.mxu0
    %1272 = vmatpush.bf16.msra.mxu0 0
    %1273 = vmatpush.bf16.msra.mxu0 0
    %1274 = vmatpush.bf16.msra.mxu0 0
    %1275 = vmatpush.bf16.msra.mxu0 0
    %1276 = vmatpush.bf16.msra.mxu0 0
    %1277 = vmatpush.bf16.msra.mxu0 0
    %1278 = vmatpush.bf16.msra.mxu0 %v1039
    %1279 = vmatpush.bf16.msra.mxu0 %v1023
    %1280 = vmatmul.bf16.gmra.mxu0 %v1080
    %v1281 = vpop.f32.mrf.mxu0
    %v1282 = vadd.f32 %v895, %v1281
    %v1283 = vpop.f32.mrf.mxu0
    %v1284 = vadd.f32 %v895, %v1283
    %1285 = vmatmul.bf16.gmra.mxu0 %v1083
    %v1286 = vpop.f32.mrf.mxu0
    %v1287 = vadd.f32 %v895, %v1286
    %v1288 = vpop.f32.mrf.mxu0
    %v1289 = vadd.f32 %v895, %v1288
    %1290 = vmatmul.bf16.gmra.mxu0 %v1086
    %v1291 = vpop.f32.mrf.mxu0
    %v1292 = vadd.f32 %v895, %v1291
    %v1293 = vpop.f32.mrf.mxu0
    %1294 = vdwg.mxu0
    %1295 = vmatpush.bf16.msra.mxu0 0
    %1296 = vmatpush.bf16.msra.mxu0 0
    %1297 = vmatpush.bf16.msra.mxu0 0
    %1298 = vmatpush.bf16.msra.mxu0 0
    %1299 = vmatpush.bf16.msra.mxu0 0
    %1300 = vmatpush.bf16.msra.mxu0 0
    %1301 = vmatpush.bf16.msra.mxu0 %v1040
    %1302 = vmatpush.bf16.msra.mxu0 %v1024
    %1303 = vmatmul.bf16.gmra.mxu0 %v1080
    %v1304 = vpop.f32.mrf.mxu0
    %v1305 = vadd.f32 %v896, %v1304
    %v1306 = vpop.f32.mrf.mxu0
    %v1307 = vadd.f32 %v896, %v1306
    %1308 = vmatmul.bf16.gmra.mxu0 %v1083
    %v1309 = vpop.f32.mrf.mxu0
    %v1310 = vadd.f32 %v896, %v1309
    %v1311 = vpop.f32.mrf.mxu0
    %v1312 = vadd.f32 %v896, %v1311
    %1313 = vmatmul.bf16.gmra.mxu0 %v1086
    %v1314 = vpop.f32.mrf.mxu0
    %v1315 = vadd.f32 %v896, %v1314
    %v1316 = vpop.f32.mrf.mxu0
    %1317 = vdwg.mxu0
    %1318 = vmatpush.bf16.msra.mxu0 0
    %1319 = vmatpush.bf16.msra.mxu0 0
    %1320 = vmatpush.bf16.msra.mxu0 0
    %1321 = vmatpush.bf16.msra.mxu0 0
    %1322 = vmatpush.bf16.msra.mxu0 0
    %1323 = vmatpush.bf16.msra.mxu0 0
    %1324 = vmatpush.bf16.msra.mxu0 %v1041
    %1325 = vmatpush.bf16.msra.mxu0 %v1025
    %1326 = vmatmul.bf16.gmra.mxu0 %v1080
    %v1327 = vpop.f32.mrf.mxu0
    %v1328 = vadd.f32 %v897, %v1327
    %v1329 = vpop.f32.mrf.mxu0
    %v1330 = vadd.f32 %v897, %v1329
    %1331 = vmatmul.bf16.gmra.mxu0 %v1083
    %v1332 = vpop.f32.mrf.mxu0
    %v1333 = vadd.f32 %v897, %v1332
    %v1334 = vpop.f32.mrf.mxu0
    %v1335 = vadd.f32 %v897, %v1334
    %1336 = vmatmul.bf16.gmra.mxu0 %v1086
    %v1337 = vpop.f32.mrf.mxu0
    %v1338 = vadd.f32 %v897, %v1337
    %v1339 = vpop.f32.mrf.mxu0
    %1340 = vdwg.mxu0
    %1341 = vmatpush.bf16.msra.mxu0 0
    %1342 = vmatpush.bf16.msra.mxu0 0
    %1343 = vmatpush.bf16.msra.mxu0 0
    %1344 = vmatpush.bf16.msra.mxu0 0
    %1345 = vmatpush.bf16.msra.mxu0 0
    %1346 = vmatpush.bf16.msra.mxu0 0
    %1347 = vmatpush.bf16.msra.mxu0 %v1042
    %1348 = vmatpush.bf16.msra.mxu0 %v1026
    %1349 = vmatmul.bf16.gmra.mxu0 %v1080
    %v1350 = vpop.f32.mrf.mxu0
    %v1351 = vadd.f32 %v898, %v1350
    %v1352 = vpop.f32.mrf.mxu0
    %v1353 = vadd.f32 %v898, %v1352
    %1354 = vmatmul.bf16.gmra.mxu0 %v1083
    %v1355 = vpop.f32.mrf.mxu0
    %v1356 = vadd.f32 %v898, %v1355
    %v1357 = vpop.f32.mrf.mxu0
    %v1358 = vadd.f32 %v898, %v1357
    %1359 = vmatmul.bf16.gmra.mxu0 %v1086
    %v1360 = vpop.f32.mrf.mxu0
    %v1361 = vadd.f32 %v898, %v1360
    %v1362 = vpop.f32.mrf.mxu0
    %1363 = vdwg.mxu0
    %1364 = vmatpush.bf16.msra.mxu0 0
    %1365 = vmatpush.bf16.msra.mxu0 0
    %1366 = vmatpush.bf16.msra.mxu0 0
    %1367 = vmatpush.bf16.msra.mxu0 0
    %1368 = vmatpush.bf16.msra.mxu0 0
    %1369 = vmatpush.bf16.msra.mxu0 0
    %1370 = vmatpush.bf16.msra.mxu0 %v1043
    %1371 = vmatpush.bf16.msra.mxu0 %v1027
    %1372 = vmatmul.bf16.gmra.mxu0 %v1080
    %v1373 = vpop.f32.mrf.mxu0
    %v1374 = vadd.f32 %v899, %v1373
    %v1375 = vpop.f32.mrf.mxu0
    %v1376 = vadd.f32 %v899, %v1375
    %1377 = vmatmul.bf16.gmra.mxu0 %v1083
    %v1378 = vpop.f32.mrf.mxu0
    %v1379 = vadd.f32 %v899, %v1378
    %v1380 = vpop.f32.mrf.mxu0
    %v1381 = vadd.f32 %v899, %v1380
    %1382 = vmatmul.bf16.gmra.mxu0 %v1086
    %v1383 = vpop.f32.mrf.mxu0
    %v1384 = vadd.f32 %v899, %v1383
    %v1385 = vpop.f32.mrf.mxu0
    %1386 = vdwg.mxu0
    %1387 = vmatpush.bf16.msra.mxu0 0
    %1388 = vmatpush.bf16.msra.mxu0 0
    %1389 = vmatpush.bf16.msra.mxu0 0
    %1390 = vmatpush.bf16.msra.mxu0 0
    %1391 = vmatpush.bf16.msra.mxu0 0
    %1392 = vmatpush.bf16.msra.mxu0 0
    %1393 = vmatpush.bf16.msra.mxu0 %v1044
    %1394 = vmatpush.bf16.msra.mxu0 %v1028
    %1395 = vmatmul.bf16.gmra.mxu0 %v1080
    %v1396 = vpop.f32.mrf.mxu0
    %v1397 = vadd.f32 %v900, %v1396
    %v1398 = vpop.f32.mrf.mxu0
    %v1399 = vadd.f32 %v900, %v1398
    %1400 = vmatmul.bf16.gmra.mxu0 %v1083
    %v1401 = vpop.f32.mrf.mxu0
    %v1402 = vadd.f32 %v900, %v1401
    %v1403 = vpop.f32.mrf.mxu0
    %v1404 = vadd.f32 %v900, %v1403
    %1405 = vmatmul.bf16.gmra.mxu0 %v1086
    %v1406 = vpop.f32.mrf.mxu0
    %v1407 = vadd.f32 %v900, %v1406
    %v1408 = vpop.f32.mrf.mxu0
    %1409 = vdwg.mxu0
    %1410 = vmatpush.bf16.msra.mxu0 0
    %1411 = vmatpush.bf16.msra.mxu0 0
    %1412 = vmatpush.bf16.msra.mxu0 0
    %1413 = vmatpush.bf16.msra.mxu0 0
    %1414 = vmatpush.bf16.msra.mxu0 0
    %1415 = vmatpush.bf16.msra.mxu0 0
    %1416 = vmatpush.bf16.msra.mxu0 %v1045
    %1417 = vmatpush.bf16.msra.mxu0 %v1029
    %1418 = vmatmul.bf16.gmra.mxu0 %v1080
    %v1419 = vpop.f32.mrf.mxu0
    %v1420 = vadd.f32 %v901, %v1419
    %v1421 = vpop.f32.mrf.mxu0
    %v1422 = vadd.f32 %v901, %v1421
    %1423 = vmatmul.bf16.gmra.mxu0 %v1083
    %v1424 = vpop.f32.mrf.mxu0
    %v1425 = vadd.f32 %v901, %v1424
    %v1426 = vpop.f32.mrf.mxu0
    %v1427 = vadd.f32 %v901, %v1426
    %1428 = vmatmul.bf16.gmra.mxu0 %v1086
    %v1429 = vpop.f32.mrf.mxu0
    %v1430 = vadd.f32 %v901, %v1429
    %v1431 = vpop.f32.mrf.mxu0
    %1432 = vdwg.mxu0
    %1433 = vmatpush.bf16.msra.mxu0 0
    %1434 = vmatpush.bf16.msra.mxu0 0
    %1435 = vmatpush.bf16.msra.mxu0 0
    %1436 = vmatpush.bf16.msra.mxu0 0
    %1437 = vmatpush.bf16.msra.mxu0 0
    %1438 = vmatpush.bf16.msra.mxu0 0
    %1439 = vmatpush.bf16.msra.mxu0 %v1046
    %1440 = vmatpush.bf16.msra.mxu0 %v1030
    %1441 = vmatmul.bf16.gmra.mxu0 %v1080
    %v1442 = vpop.f32.mrf.mxu0
    %v1443 = vadd.f32 %v902, %v1442
    %v1444 = vpop.f32.mrf.mxu0
    %v1445 = vadd.f32 %v902, %v1444
    %1446 = vmatmul.bf16.gmra.mxu0 %v1083
    %v1447 = vpop.f32.mrf.mxu0
    %v1448 = vadd.f32 %v902, %v1447
    %v1449 = vpop.f32.mrf.mxu0
    %v1450 = vadd.f32 %v902, %v1449
    %1451 = vmatmul.bf16.gmra.mxu0 %v1086
    %v1452 = vpop.f32.mrf.mxu0
    %v1453 = vadd.f32 %v902, %v1452
    %v1454 = vpop.f32.mrf.mxu0
    %1455 = vdwg.mxu0
    %v1456 = vmax.f32 %v1098, 0.0
    %v1457 = vmax.f32 %v1121, 0.0
    %v1458 = vmax.f32 %v1144, 0.0
    %v1459 = vmax.f32 %v1167, 0.0
    %v1460 = vmax.f32 %v1190, 0.0
    %v1461 = vmax.f32 %v1213, 0.0
    %v1462 = vmax.f32 %v1236, 0.0
    %v1463 = vmax.f32 %v1259, 0.0
    %v1464 = vmax.f32 %v1282, 0.0
    %v1465 = vmax.f32 %v1305, 0.0
    %v1466 = vmax.f32 %v1328, 0.0
    %v1467 = vmax.f32 %v1351, 0.0
    %v1468 = vmax.f32 %v1374, 0.0
    %v1469 = vmax.f32 %v1397, 0.0
    %v1470 = vmax.f32 %v1420, 0.0
    %v1471 = vmax.f32 %v1443, 0.0
    %v1472 = vmax.f32 %v1100, 0.0
    %v1473 = vmax.f32 %v1123, 0.0
    %v1474 = vmax.f32 %v1146, 0.0
    %v1475 = vmax.f32 %v1169, 0.0
    %v1476 = vmax.f32 %v1192, 0.0
    %v1477 = vmax.f32 %v1215, 0.0
    %v1478 = vmax.f32 %v1238, 0.0
    %v1479 = vmax.f32 %v1261, 0.0
    %v1480 = vmax.f32 %v1284, 0.0
    %v1481 = vmax.f32 %v1307, 0.0
    %v1482 = vmax.f32 %v1330, 0.0
    %v1483 = vmax.f32 %v1353, 0.0
    %v1484 = vmax.f32 %v1376, 0.0
    %v1485 = vmax.f32 %v1399, 0.0
    %v1486 = vmax.f32 %v1422, 0.0
    %v1487 = vmax.f32 %v1445, 0.0
    %v1488 = vmax.f32 %v1103, 0.0
    %v1489 = vmax.f32 %v1126, 0.0
    %v1490 = vmax.f32 %v1149, 0.0
    %v1491 = vmax.f32 %v1172, 0.0
    %v1492 = vmax.f32 %v1195, 0.0
    %v1493 = vmax.f32 %v1218, 0.0
    %v1494 = vmax.f32 %v1241, 0.0
    %v1495 = vmax.f32 %v1264, 0.0
    %v1496 = vmax.f32 %v1287, 0.0
    %v1497 = vmax.f32 %v1310, 0.0
    %v1498 = vmax.f32 %v1333, 0.0
    %v1499 = vmax.f32 %v1356, 0.0
    %v1500 = vmax.f32 %v1379, 0.0
    %v1501 = vmax.f32 %v1402, 0.0
    %v1502 = vmax.f32 %v1425, 0.0
    %v1503 = vmax.f32 %v1448, 0.0
    %v1504 = vmax.f32 %v1105, 0.0
    %v1505 = vmax.f32 %v1128, 0.0
    %v1506 = vmax.f32 %v1151, 0.0
    %v1507 = vmax.f32 %v1174, 0.0
    %v1508 = vmax.f32 %v1197, 0.0
    %v1509 = vmax.f32 %v1220, 0.0
    %v1510 = vmax.f32 %v1243, 0.0
    %v1511 = vmax.f32 %v1266, 0.0
    %v1512 = vmax.f32 %v1289, 0.0
    %v1513 = vmax.f32 %v1312, 0.0
    %v1514 = vmax.f32 %v1335, 0.0
    %v1515 = vmax.f32 %v1358, 0.0
    %v1516 = vmax.f32 %v1381, 0.0
    %v1517 = vmax.f32 %v1404, 0.0
    %v1518 = vmax.f32 %v1427, 0.0
    %v1519 = vmax.f32 %v1450, 0.0
    %v1520 = vmax.f32 %v1108, 0.0
    %v1521 = vmax.f32 %v1131, 0.0
    %v1522 = vmax.f32 %v1154, 0.0
    %v1523 = vmax.f32 %v1177, 0.0
    %v1524 = vmax.f32 %v1200, 0.0
    %v1525 = vmax.f32 %v1223, 0.0
    %v1526 = vmax.f32 %v1246, 0.0
    %v1527 = vmax.f32 %v1269, 0.0
    %v1528 = vmax.f32 %v1292, 0.0
    %v1529 = vmax.f32 %v1315, 0.0
    %v1530 = vmax.f32 %v1338, 0.0
    %v1531 = vmax.f32 %v1361, 0.0
    %v1532 = vmax.f32 %v1384, 0.0
    %v1533 = vmax.f32 %v1407, 0.0
    %v1534 = vmax.f32 %v1430, 0.0
    %v1535 = vmax.f32 %v1453, 0.0
    %v1536 = vpack.c.bf16 %v1472, %v1456
    %v1537 = vpack.c.bf16 %v1473, %v1457
    %v1538 = vpack.c.bf16 %v1474, %v1458
    %v1539 = vpack.c.bf16 %v1475, %v1459
    %v1540 = vpack.c.bf16 %v1476, %v1460
    %v1541 = vpack.c.bf16 %v1477, %v1461
    %v1542 = vpack.c.bf16 %v1478, %v1462
    %v1543 = vpack.c.bf16 %v1479, %v1463
    %v1544 = vpack.c.bf16 %v1480, %v1464
    %v1545 = vpack.c.bf16 %v1481, %v1465
    %v1546 = vpack.c.bf16 %v1482, %v1466
    %v1547 = vpack.c.bf16 %v1483, %v1467
    %v1548 = vpack.c.bf16 %v1484, %v1468
    %v1549 = vpack.c.bf16 %v1485, %v1469
    %v1550 = vpack.c.bf16 %v1486, %v1470
    %v1551 = vpack.c.bf16 %v1487, %v1471
    %v1552 = vpack.c.bf16 %v1504, %v1488
    %v1553 = vpack.c.bf16 %v1505, %v1489
    %v1554 = vpack.c.bf16 %v1506, %v1490
    %v1555 = vpack.c.bf16 %v1507, %v1491
    %v1556 = vpack.c.bf16 %v1508, %v1492
    %v1557 = vpack.c.bf16 %v1509, %v1493
    %v1558 = vpack.c.bf16 %v1510, %v1494
    %v1559 = vpack.c.bf16 %v1511, %v1495
    %v1560 = vpack.c.bf16 %v1512, %v1496
    %v1561 = vpack.c.bf16 %v1513, %v1497
    %v1562 = vpack.c.bf16 %v1514, %v1498
    %v1563 = vpack.c.bf16 %v1515, %v1499
    %v1564 = vpack.c.bf16 %v1516, %v1500
    %v1565 = vpack.c.bf16 %v1517, %v1501
    %v1566 = vpack.c.bf16 %v1518, %v1502
    %v1567 = vpack.c.bf16 %v1519, %v1503
    %v1568 = vpack.c.bf16 %v1520, %v1520
    %v1569 = vpack.c.bf16 %v1521, %v1521
    %v1570 = vpack.c.bf16 %v1522, %v1522
    %v1571 = vpack.c.bf16 %v1523, %v1523
    %v1572 = vpack.c.bf16 %v1524, %v1524
    %v1573 = vpack.c.bf16 %v1525, %v1525
    %v1574 = vpack.c.bf16 %v1526, %v1526
    %v1575 = vpack.c.bf16 %v1527, %v1527
    %v1576 = vpack.c.bf16 %v1528, %v1528
    %v1577 = vpack.c.bf16 %v1529, %v1529
    %v1578 = vpack.c.bf16 %v1530, %v1530
    %v1579 = vpack.c.bf16 %v1531, %v1531
    %v1580 = vpack.c.bf16 %v1532, %v1532
    %v1581 = vpack.c.bf16 %v1533, %v1533
    %v1582 = vpack.c.bf16 %v1534, %v1534
    %v1583 = vpack.c.bf16 %v1535, %v1535
    %v1584 = vld [vmem:[%s29] sm:$0xf]
    %v1585 = vld [vmem:[%s29 + $0x4] sm:$0xf]
    %v1586 = vld [vmem:[%s29 + $0x8] sm:$0xf]
    %v1587 = vld [vmem:[%s29 + $0xc] sm:$0xf]
    %v1588 = vld [vmem:[%s29 + $0x10] sm:$0xf]
    %v1589 = vld [vmem:[%s29 + $0x14] sm:$0xf]
    %v1590 = vld [vmem:[%s29 + $0x18] sm:$0xf]
    %v1591 = vld [vmem:[%s29 + $0x1c] sm:$0xf]
    %v1592 = vld [vmem:[%s29 + $0x20] sm:$0xf]
    %v1593 = vld [vmem:[%s29 + $0x24] sm:$0xf]
    %v1594 = vld [vmem:[%s29 + $0x28] sm:$0xf]
    %v1595 = vld [vmem:[%s29 + $0x2c] sm:$0xf]
    %v1596 = vld [vmem:[%s29 + $0x30] sm:$0xf]
    %v1597 = vld [vmem:[%s29 + $0x34] sm:$0xf]
    %v1598 = vld [vmem:[%s29 + $0x38] sm:$0xf]
    %v1599 = vld [vmem:[%s29 + $0x3c] sm:$0xf]
    %v1600 = vld [vmem:[%s29 + $0x40] sm:$0xf]
    %v1601 = vld [vmem:[%s29 + $0x44] sm:$0xf]
    %v1602 = vld [vmem:[%s29 + $0x48] sm:$0xf]
    %v1603 = vld [vmem:[%s29 + $0x4c] sm:$0xf]
    %v1604 = vld [vmem:[%s29 + $0x50] sm:$0xf]
    %v1605 = vld [vmem:[%s29 + $0x54] sm:$0xf]
    %v1606 = vld [vmem:[%s29 + $0x58] sm:$0xf]
    %v1607 = vld [vmem:[%s29 + $0x5c] sm:$0xf]
    %v1608 = vld [vmem:[%s29 + $0x60] sm:$0xf]
    %v1609 = vld [vmem:[%s29 + $0x64] sm:$0xf]
    %v1610 = vld [vmem:[%s29 + $0x68] sm:$0xf]
    %v1611 = vld [vmem:[%s29 + $0x6c] sm:$0xf]
    %v1612 = vld [vmem:[%s29 + $0x70] sm:$0xf]
    %v1613 = vld [vmem:[%s29 + $0x74] sm:$0xf]
    %v1614 = vld [vmem:[%s29 + $0x78] sm:$0xf]
    %v1615 = vld [vmem:[%s29 + $0x7c] sm:$0xf]
    %v1616 = vld [vmem:[%s29 + $0x80] sm:$0xf]
    %v1617 = vld [vmem:[%s29 + $0x84] sm:$0xf]
    %v1618 = vld [vmem:[%s29 + $0x88] sm:$0xf]
    %v1619 = vld [vmem:[%s29 + $0x8c] sm:$0xf]
    %v1620 = vld [vmem:[%s29 + $0x90] sm:$0xf]
    %v1621 = vld [vmem:[%s29 + $0x94] sm:$0xf]
    %v1622 = vld [vmem:[%s29 + $0x98] sm:$0xf]
    %v1623 = vld [vmem:[%s29 + $0x9c] sm:$0xf]
    %v1624 = vld [vmem:[%s29 + $0xa0] sm:$0xf]
    %v1625 = vld [vmem:[%s29 + $0xa4] sm:$0xf]
    %v1626 = vld [vmem:[%s29 + $0xa8] sm:$0xf]
    %v1627 = vld [vmem:[%s29 + $0xac] sm:$0xf]
    %v1628 = vld [vmem:[%s29 + $0xb0] sm:$0xf]
    %v1629 = vld [vmem:[%s29 + $0xb4] sm:$0xf]
    %v1630 = vld [vmem:[%s29 + $0xb8] sm:$0xf]
    %v1631 = vld [vmem:[%s29 + $0xbc] sm:$0xf]
    %v1632 = vld [vmem:[%s29 + $0xc0] sm:$0xf]
    %v1633 = vld [vmem:[%s29 + $0xc4] sm:$0xf]
    %v1634 = vld [vmem:[%s29 + $0xc8] sm:$0xf]
    %v1635 = vld [vmem:[%s29 + $0xcc] sm:$0xf]
    %v1636 = vld [vmem:[%s29 + $0xd0] sm:$0xf]
    %v1637 = vld [vmem:[%s29 + $0xd4] sm:$0xf]
    %v1638 = vld [vmem:[%s29 + $0xd8] sm:$0xf]
    %v1639 = vld [vmem:[%s29 + $0xdc] sm:$0xf]
    %v1640 = vld [vmem:[%s29 + $0xe0] sm:$0xf]
    %v1641 = vld [vmem:[%s29 + $0xe4] sm:$0xf]
    %v1642 = vld [vmem:[%s29 + $0xe8] sm:$0xf]
    %v1643 = vld [vmem:[%s29 + $0xec] sm:$0xf]
    %v1644 = vld [vmem:[%s29 + $0xf0] sm:$0xf]
    %v1645 = vld [vmem:[%s29 + $0xf4] sm:$0xf]
    %v1646 = vld [vmem:[%s29 + $0xf8] sm:$0xf]
    %v1647 = vld [vmem:[%s29 + $0xfc] sm:$0xf]
    %v1648 = vld [vmem:[%s29 + $0x100] sm:$0xf]
    %v1649 = vld [vmem:[%s29 + $0x104] sm:$0xf]
    %v1650 = vld [vmem:[%s29 + $0x108] sm:$0xf]
    %v1651 = vld [vmem:[%s29 + $0x10c] sm:$0xf]
    %v1652 = vld [vmem:[%s29 + $0x110] sm:$0xf]
    %v1653 = vld [vmem:[%s29 + $0x114] sm:$0xf]
    %v1654 = vld [vmem:[%s29 + $0x118] sm:$0xf]
    %v1655 = vld [vmem:[%s29 + $0x11c] sm:$0xf]
    %v1656 = vld [vmem:[%s29 + $0x120] sm:$0xf]
    %v1657 = vld [vmem:[%s29 + $0x124] sm:$0xf]
    %v1658 = vld [vmem:[%s29 + $0x128] sm:$0xf]
    %v1659 = vld [vmem:[%s29 + $0x12c] sm:$0xf]
    %v1660 = vld [vmem:[%s29 + $0x130] sm:$0xf]
    %v1661 = vld [vmem:[%s29 + $0x134] sm:$0xf]
    %v1662 = vld [vmem:[%s29 + $0x138] sm:$0xf]
    %v1663 = vld [vmem:[%s29 + $0x13c] sm:$0xf]
    %v1664 = vld [vmem:[%s29 + $0x140] sm:$0xf]
    %v1665 = vld [vmem:[%s29 + $0x144] sm:$0xf]
    %v1666 = vld [vmem:[%s29 + $0x148] sm:$0xf]
    %v1667 = vld [vmem:[%s29 + $0x14c] sm:$0xf]
    %v1668 = vld [vmem:[%s29 + $0x150] sm:$0xf]
    %v1669 = vld [vmem:[%s29 + $0x154] sm:$0xf]
    %v1670 = vld [vmem:[%s29 + $0x158] sm:$0xf]
    %v1671 = vld [vmem:[%s29 + $0x15c] sm:$0xf]
    %v1672 = vld [vmem:[%s29 + $0x160] sm:$0xf]
    %v1673 = vld [vmem:[%s29 + $0x164] sm:$0xf]
    %v1674 = vld [vmem:[%s29 + $0x168] sm:$0xf]
    %v1675 = vld [vmem:[%s29 + $0x16c] sm:$0xf]
    %v1676 = vld [vmem:[%s29 + $0x170] sm:$0xf]
    %v1677 = vld [vmem:[%s29 + $0x174] sm:$0xf]
    %v1678 = vld [vmem:[%s29 + $0x178] sm:$0xf]
    %v1679 = vld [vmem:[%s29 + $0x17c] sm:$0xf]
    %v1680 = vld [vmem:[%s29 + $0x180] sm:$0xf]
    %v1681 = vld [vmem:[%s29 + $0x184] sm:$0xf]
    %v1682 = vld [vmem:[%s29 + $0x188] sm:$0xf]
    %v1683 = vld [vmem:[%s29 + $0x18c] sm:$0xf]
    %v1684 = vld [vmem:[%s29 + $0x190] sm:$0xf]
    %v1685 = vld [vmem:[%s29 + $0x194] sm:$0xf]
    %v1686 = vld [vmem:[%s29 + $0x198] sm:$0xf]
    %v1687 = vld [vmem:[%s29 + $0x19c] sm:$0xf]
    %v1688 = vld [vmem:[%s29 + $0x1a0] sm:$0xf]
    %v1689 = vld [vmem:[%s29 + $0x1a4] sm:$0xf]
    %v1690 = vld [vmem:[%s29 + $0x1a8] sm:$0xf]
    %v1691 = vld [vmem:[%s29 + $0x1ac] sm:$0xf]
    %v1692 = vld [vmem:[%s29 + $0x1b0] sm:$0xf]
    %v1693 = vld [vmem:[%s29 + $0x1b4] sm:$0xf]
    %v1694 = vld [vmem:[%s29 + $0x1b8] sm:$0xf]
    %v1695 = vld [vmem:[%s29 + $0x1bc] sm:$0xf]
    %v1696 = vld [vmem:[%s29 + $0x1c0] sm:$0xf]
    %v1697 = vld [vmem:[%s29 + $0x1c4] sm:$0xf]
    %v1698 = vld [vmem:[%s29 + $0x1c8] sm:$0xf]
    %v1699 = vld [vmem:[%s29 + $0x1cc] sm:$0xf]
    %v1700 = vld [vmem:[%s29 + $0x1d0] sm:$0xf]
    %v1701 = vld [vmem:[%s29 + $0x1d4] sm:$0xf]
    %v1702 = vld [vmem:[%s29 + $0x1d8] sm:$0xf]
    %v1703 = vld [vmem:[%s29 + $0x1dc] sm:$0xf]
    %v1704 = vld [vmem:[%s29 + $0x1e0] sm:$0xf]
    %v1705 = vld [vmem:[%s29 + $0x1e4] sm:$0xf]
    %v1706 = vld [vmem:[%s29 + $0x1e8] sm:$0xf]
    %v1707 = vld [vmem:[%s29 + $0x1ec] sm:$0xf]
    %v1708 = vld [vmem:[%s29 + $0x1f0] sm:$0xf]
    %v1709 = vld [vmem:[%s29 + $0x1f4] sm:$0xf]
    %v1710 = vld [vmem:[%s29 + $0x1f8] sm:$0xf]
    %v1711 = vld [vmem:[%s29 + $0x1fc] sm:$0xf]
    %v1712 = vld [vmem:[%s29 + $0x200] sm:$0xf]
    %v1713 = vld [vmem:[%s29 + $0x204] sm:$0xf]
    %v1714 = vld [vmem:[%s29 + $0x208] sm:$0xf]
    %v1715 = vld [vmem:[%s29 + $0x20c] sm:$0xf]
    %v1716 = vld [vmem:[%s29 + $0x210] sm:$0xf]
    %v1717 = vld [vmem:[%s29 + $0x214] sm:$0xf]
    %v1718 = vld [vmem:[%s29 + $0x218] sm:$0xf]
    %v1719 = vld [vmem:[%s29 + $0x21c] sm:$0xf]
    %v1720 = vld [vmem:[%s29 + $0x220] sm:$0xf]
    %v1721 = vld [vmem:[%s29 + $0x224] sm:$0xf]
    %v1722 = vld [vmem:[%s29 + $0x228] sm:$0xf]
    %v1723 = vld [vmem:[%s29 + $0x22c] sm:$0xf]
    %v1724 = vld [vmem:[%s29 + $0x230] sm:$0xf]
    %v1725 = vld [vmem:[%s29 + $0x234] sm:$0xf]
    %v1726 = vld [vmem:[%s29 + $0x238] sm:$0xf]
    %v1727 = vld [vmem:[%s29 + $0x23c] sm:$0xf]
    %v1728 = vld [vmem:[%s29 + $0x240] sm:$0xf]
    %v1729 = vld [vmem:[%s29 + $0x244] sm:$0xf]
    %v1730 = vld [vmem:[%s29 + $0x248] sm:$0xf]
    %v1731 = vld [vmem:[%s29 + $0x24c] sm:$0xf]
    %v1732 = vld [vmem:[%s29 + $0x250] sm:$0xf]
    %v1733 = vld [vmem:[%s29 + $0x254] sm:$0xf]
    %v1734 = vld [vmem:[%s29 + $0x258] sm:$0xf]
    %v1735 = vld [vmem:[%s29 + $0x25c] sm:$0xf]
    %v1736 = vld [vmem:[%s29 + $0x260] sm:$0xf]
    %v1737 = vld [vmem:[%s29 + $0x264] sm:$0xf]
    %v1738 = vld [vmem:[%s29 + $0x268] sm:$0xf]
    %v1739 = vld [vmem:[%s29 + $0x26c] sm:$0xf]
    %v1740 = vld [vmem:[%s29 + $0x270] sm:$0xf]
    %v1741 = vld [vmem:[%s29 + $0x274] sm:$0xf]
    %v1742 = vld [vmem:[%s29 + $0x278] sm:$0xf]
    %v1743 = vld [vmem:[%s29 + $0x27c] sm:$0xf]
    %v1744 = vld [vmem:[%s29 + $0x280] sm:$0xf]
    %v1745 = vld [vmem:[%s29 + $0x284] sm:$0xf]
    %v1746 = vld [vmem:[%s29 + $0x288] sm:$0xf]
    %v1747 = vld [vmem:[%s29 + $0x28c] sm:$0xf]
    %v1748 = vld [vmem:[%s29 + $0x290] sm:$0xf]
    %v1749 = vld [vmem:[%s29 + $0x294] sm:$0xf]
    %v1750 = vld [vmem:[%s29 + $0x298] sm:$0xf]
    %v1751 = vld [vmem:[%s29 + $0x29c] sm:$0xf]
    %v1752 = vld [vmem:[%s29 + $0x2a0] sm:$0xf]
    %v1753 = vld [vmem:[%s29 + $0x2a4] sm:$0xf]
    %v1754 = vld [vmem:[%s29 + $0x2a8] sm:$0xf]
    %v1755 = vld [vmem:[%s29 + $0x2ac] sm:$0xf]
    %v1756 = vld [vmem:[%s29 + $0x2b0] sm:$0xf]
    %v1757 = vld [vmem:[%s29 + $0x2b4] sm:$0xf]
    %v1758 = vld [vmem:[%s29 + $0x2b8] sm:$0xf]
    %v1759 = vld [vmem:[%s29 + $0x2bc] sm:$0xf]
    %v1760 = vld [vmem:[%s29 + $0x2c0] sm:$0xf]
    %v1761 = vld [vmem:[%s29 + $0x2c4] sm:$0xf]
    %v1762 = vld [vmem:[%s29 + $0x2c8] sm:$0xf]
    %v1763 = vld [vmem:[%s29 + $0x2cc] sm:$0xf]
    %v1764 = vld [vmem:[%s29 + $0x2d0] sm:$0xf]
    %v1765 = vld [vmem:[%s29 + $0x2d4] sm:$0xf]
    %v1766 = vld [vmem:[%s29 + $0x2d8] sm:$0xf]
    %v1767 = vld [vmem:[%s29 + $0x2dc] sm:$0xf]
    %v1768 = vld [vmem:[%s29 + $0x2e0] sm:$0xf]
    %v1769 = vld [vmem:[%s29 + $0x2e4] sm:$0xf]
    %v1770 = vld [vmem:[%s29 + $0x2e8] sm:$0xf]
    %v1771 = vld [vmem:[%s29 + $0x2ec] sm:$0xf]
    %v1772 = vld [vmem:[%s29 + $0x2f0] sm:$0xf]
    %v1773 = vld [vmem:[%s29 + $0x2f4] sm:$0xf]
    %v1774 = vld [vmem:[%s29 + $0x2f8] sm:$0xf]
    %v1775 = vld [vmem:[%s29 + $0x2fc] sm:$0xf]
    %v1776 = vld [vmem:[%s29 + $0x300] sm:$0xf]
    %v1777 = vld [vmem:[%s29 + $0x304] sm:$0xf]
    %v1778 = vld [vmem:[%s29 + $0x308] sm:$0xf]
    %v1779 = vld [vmem:[%s29 + $0x30c] sm:$0xf]
    %v1780 = vld [vmem:[%s29 + $0x310] sm:$0xf]
    %v1781 = vld [vmem:[%s29 + $0x314] sm:$0xf]
    %v1782 = vld [vmem:[%s29 + $0x318] sm:$0xf]
    %v1783 = vld [vmem:[%s29 + $0x31c] sm:$0xf]
    %v1784 = vld [vmem:[%s29 + $0x320] sm:$0xf]
    %v1785 = vld [vmem:[%s29 + $0x324] sm:$0xf]
    %v1786 = vld [vmem:[%s29 + $0x328] sm:$0xf]
    %v1787 = vld [vmem:[%s29 + $0x32c] sm:$0xf]
    %v1788 = vld [vmem:[%s29 + $0x330] sm:$0xf]
    %v1789 = vld [vmem:[%s29 + $0x334] sm:$0xf]
    %v1790 = vld [vmem:[%s29 + $0x338] sm:$0xf]
    %v1791 = vld [vmem:[%s29 + $0x33c] sm:$0xf]
    %v1792 = vld [vmem:[%s29 + $0x340] sm:$0xf]
    %v1793 = vld [vmem:[%s29 + $0x344] sm:$0xf]
    %v1794 = vld [vmem:[%s29 + $0x348] sm:$0xf]
    %v1795 = vld [vmem:[%s29 + $0x34c] sm:$0xf]
    %v1796 = vld [vmem:[%s29 + $0x350] sm:$0xf]
    %v1797 = vld [vmem:[%s29 + $0x354] sm:$0xf]
    %v1798 = vld [vmem:[%s29 + $0x358] sm:$0xf]
    %v1799 = vld [vmem:[%s29 + $0x35c] sm:$0xf]
    %v1800 = vld [vmem:[%s29 + $0x360] sm:$0xf]
    %v1801 = vld [vmem:[%s29 + $0x364] sm:$0xf]
    %v1802 = vld [vmem:[%s29 + $0x368] sm:$0xf]
    %v1803 = vld [vmem:[%s29 + $0x36c] sm:$0xf]
    %v1804 = vld [vmem:[%s29 + $0x370] sm:$0xf]
    %v1805 = vld [vmem:[%s29 + $0x374] sm:$0xf]
    %v1806 = vld [vmem:[%s29 + $0x378] sm:$0xf]
    %v1807 = vld [vmem:[%s29 + $0x37c] sm:$0xf]
    %v1808 = vld [vmem:[%s29 + $0x380] sm:$0xf]
    %v1809 = vld [vmem:[%s29 + $0x384] sm:$0xf]
    %v1810 = vld [vmem:[%s29 + $0x388] sm:$0xf]
    %v1811 = vld [vmem:[%s29 + $0x38c] sm:$0xf]
    %v1812 = vld [vmem:[%s29 + $0x390] sm:$0xf]
    %v1813 = vld [vmem:[%s29 + $0x394] sm:$0xf]
    %v1814 = vld [vmem:[%s29 + $0x398] sm:$0xf]
    %v1815 = vld [vmem:[%s29 + $0x39c] sm:$0xf]
    %v1816 = vld [vmem:[%s29 + $0x3a0] sm:$0xf]
    %v1817 = vld [vmem:[%s29 + $0x3a4] sm:$0xf]
    %v1818 = vld [vmem:[%s29 + $0x3a8] sm:$0xf]
    %v1819 = vld [vmem:[%s29 + $0x3ac] sm:$0xf]
    %v1820 = vld [vmem:[%s29 + $0x3b0] sm:$0xf]
    %v1821 = vld [vmem:[%s29 + $0x3b4] sm:$0xf]
    %v1822 = vld [vmem:[%s29 + $0x3b8] sm:$0xf]
    %v1823 = vld [vmem:[%s29 + $0x3bc] sm:$0xf]
    %v1824 = vld [vmem:[%s29 + $0x3c0] sm:$0xf]
    %v1825 = vld [vmem:[%s29 + $0x3c4] sm:$0xf]
    %v1826 = vld [vmem:[%s29 + $0x3c8] sm:$0xf]
    %v1827 = vld [vmem:[%s29 + $0x3cc] sm:$0xf]
    %v1828 = vld [vmem:[%s29 + $0x3d0] sm:$0xf]
    %v1829 = vld [vmem:[%s29 + $0x3d4] sm:$0xf]
    %v1830 = vld [vmem:[%s29 + $0x3d8] sm:$0xf]
    %v1831 = vld [vmem:[%s29 + $0x3dc] sm:$0xf]
    %v1832 = vld [vmem:[%s29 + $0x3e0] sm:$0xf]
    %v1833 = vld [vmem:[%s29 + $0x3e4] sm:$0xf]
    %v1834 = vld [vmem:[%s29 + $0x3e8] sm:$0xf]
    %v1835 = vld [vmem:[%s29 + $0x3ec] sm:$0xf]
    %v1836 = vld [vmem:[%s29 + $0x3f0] sm:$0xf]
    %v1837 = vld [vmem:[%s29 + $0x3f4] sm:$0xf]
    %v1838 = vld [vmem:[%s29 + $0x3f8] sm:$0xf]
    %v1839 = vld [vmem:[%s29 + $0x3fc] sm:$0xf]
    %v1840 = vld [vmem:[%s31] sm:$0x1]
    %v1842 = vperm.slane %v1840, 0
    %v2100 = vunpack.c.l.b16 %v1584
    %v2101 = vunpack.c.l.b16 %v1585
    %v2102 = vunpack.c.l.b16 %v1586
    %v2103 = vunpack.c.l.b16 %v1587
    %v2104 = vunpack.c.l.b16 %v1588
    %v2105 = vunpack.c.l.b16 %v1589
    %v2106 = vunpack.c.l.b16 %v1590
    %v2107 = vunpack.c.l.b16 %v1591
    %v2108 = vunpack.c.l.b16 %v1592
    %v2109 = vunpack.c.l.b16 %v1593
    %v2110 = vunpack.c.l.b16 %v1594
    %v2111 = vunpack.c.l.b16 %v1595
    %v2112 = vunpack.c.l.b16 %v1596
    %v2113 = vunpack.c.l.b16 %v1597
    %v2114 = vunpack.c.l.b16 %v1598
    %v2115 = vunpack.c.l.b16 %v1599
    %v2116 = vunpack.c.l.b16 %v1600
    %v2117 = vunpack.c.l.b16 %v1601
    %v2118 = vunpack.c.l.b16 %v1602
    %v2119 = vunpack.c.l.b16 %v1603
    %v2120 = vunpack.c.l.b16 %v1604
    %v2121 = vunpack.c.l.b16 %v1605
    %v2122 = vunpack.c.l.b16 %v1606
    %v2123 = vunpack.c.l.b16 %v1607
    %v2124 = vunpack.c.l.b16 %v1608
    %v2125 = vunpack.c.l.b16 %v1609
    %v2126 = vunpack.c.l.b16 %v1610
    %v2127 = vunpack.c.l.b16 %v1611
    %v2128 = vunpack.c.l.b16 %v1612
    %v2129 = vunpack.c.l.b16 %v1613
    %v2130 = vunpack.c.l.b16 %v1614
    %v2131 = vunpack.c.l.b16 %v1615
    %v2132 = vunpack.c.l.b16 %v1616
    %v2133 = vunpack.c.l.b16 %v1617
    %v2134 = vunpack.c.l.b16 %v1618
    %v2135 = vunpack.c.l.b16 %v1619
    %v2136 = vunpack.c.l.b16 %v1620
    %v2137 = vunpack.c.l.b16 %v1621
    %v2138 = vunpack.c.l.b16 %v1622
    %v2139 = vunpack.c.l.b16 %v1623
    %v2140 = vunpack.c.l.b16 %v1624
    %v2141 = vunpack.c.l.b16 %v1625
    %v2142 = vunpack.c.l.b16 %v1626
    %v2143 = vunpack.c.l.b16 %v1627
    %v2144 = vunpack.c.l.b16 %v1628
    %v2145 = vunpack.c.l.b16 %v1629
    %v2146 = vunpack.c.l.b16 %v1630
    %v2147 = vunpack.c.l.b16 %v1631
    %v2148 = vunpack.c.l.b16 %v1632
    %v2149 = vunpack.c.l.b16 %v1633
    %v2150 = vunpack.c.l.b16 %v1634
    %v2151 = vunpack.c.l.b16 %v1635
    %v2152 = vunpack.c.l.b16 %v1636
    %v2153 = vunpack.c.l.b16 %v1637
    %v2154 = vunpack.c.l.b16 %v1638
    %v2155 = vunpack.c.l.b16 %v1639
    %v2156 = vunpack.c.l.b16 %v1640
    %v2157 = vunpack.c.l.b16 %v1641
    %v2158 = vunpack.c.l.b16 %v1642
    %v2159 = vunpack.c.l.b16 %v1643
    %v2160 = vunpack.c.l.b16 %v1644
    %v2161 = vunpack.c.l.b16 %v1645
    %v2162 = vunpack.c.l.b16 %v1646
    %v2163 = vunpack.c.l.b16 %v1647
    %v2164 = vunpack.c.l.b16 %v1648
    %v2165 = vunpack.c.l.b16 %v1649
    %v2166 = vunpack.c.l.b16 %v1650
    %v2167 = vunpack.c.l.b16 %v1651
    %v2168 = vunpack.c.l.b16 %v1652
    %v2169 = vunpack.c.l.b16 %v1653
    %v2170 = vunpack.c.l.b16 %v1654
    %v2171 = vunpack.c.l.b16 %v1655
    %v2172 = vunpack.c.l.b16 %v1656
    %v2173 = vunpack.c.l.b16 %v1657
    %v2174 = vunpack.c.l.b16 %v1658
    %v2175 = vunpack.c.l.b16 %v1659
    %v2176 = vunpack.c.l.b16 %v1660
    %v2177 = vunpack.c.l.b16 %v1661
    %v2178 = vunpack.c.l.b16 %v1662
    %v2179 = vunpack.c.l.b16 %v1663
    %v2180 = vunpack.c.l.b16 %v1664
    %v2181 = vunpack.c.l.b16 %v1665
    %v2182 = vunpack.c.l.b16 %v1666
    %v2183 = vunpack.c.l.b16 %v1667
    %v2184 = vunpack.c.l.b16 %v1668
    %v2185 = vunpack.c.l.b16 %v1669
    %v2186 = vunpack.c.l.b16 %v1670
    %v2187 = vunpack.c.l.b16 %v1671
    %v2188 = vunpack.c.l.b16 %v1672
    %v2189 = vunpack.c.l.b16 %v1673
    %v2190 = vunpack.c.l.b16 %v1674
    %v2191 = vunpack.c.l.b16 %v1675
    %v2192 = vunpack.c.l.b16 %v1676
    %v2193 = vunpack.c.l.b16 %v1677
    %v2194 = vunpack.c.l.b16 %v1678
    %v2195 = vunpack.c.l.b16 %v1679
    %v2196 = vunpack.c.l.b16 %v1680
    %v2197 = vunpack.c.l.b16 %v1681
    %v2198 = vunpack.c.l.b16 %v1682
    %v2199 = vunpack.c.l.b16 %v1683
    %v2200 = vunpack.c.l.b16 %v1684
    %v2201 = vunpack.c.l.b16 %v1685
    %v2202 = vunpack.c.l.b16 %v1686
    %v2203 = vunpack.c.l.b16 %v1687
    %v2204 = vunpack.c.l.b16 %v1688
    %v2205 = vunpack.c.l.b16 %v1689
    %v2206 = vunpack.c.l.b16 %v1690
    %v2207 = vunpack.c.l.b16 %v1691
    %v2208 = vunpack.c.l.b16 %v1692
    %v2209 = vunpack.c.l.b16 %v1693
    %v2210 = vunpack.c.l.b16 %v1694
    %v2211 = vunpack.c.l.b16 %v1695
    %v2212 = vunpack.c.l.b16 %v1696
    %v2213 = vunpack.c.l.b16 %v1697
    %v2214 = vunpack.c.l.b16 %v1698
    %v2215 = vunpack.c.l.b16 %v1699
    %v2216 = vunpack.c.l.b16 %v1700
    %v2217 = vunpack.c.l.b16 %v1701
    %v2218 = vunpack.c.l.b16 %v1702
    %v2219 = vunpack.c.l.b16 %v1703
    %v2220 = vunpack.c.l.b16 %v1704
    %v2221 = vunpack.c.l.b16 %v1705
    %v2222 = vunpack.c.l.b16 %v1706
    %v2223 = vunpack.c.l.b16 %v1707
    %v2224 = vunpack.c.l.b16 %v1708
    %v2225 = vunpack.c.l.b16 %v1709
    %v2226 = vunpack.c.l.b16 %v1710
    %v2227 = vunpack.c.l.b16 %v1711
    %v2228 = vunpack.c.l.b16 %v1712
    %v2229 = vunpack.c.l.b16 %v1713
    %v2230 = vunpack.c.l.b16 %v1714
    %v2231 = vunpack.c.l.b16 %v1715
    %v2232 = vunpack.c.l.b16 %v1716
    %v2233 = vunpack.c.l.b16 %v1717
    %v2234 = vunpack.c.l.b16 %v1718
    %v2235 = vunpack.c.l.b16 %v1719
    %v2236 = vunpack.c.l.b16 %v1720
    %v2237 = vunpack.c.l.b16 %v1721
    %v2238 = vunpack.c.l.b16 %v1722
    %v2239 = vunpack.c.l.b16 %v1723
    %v2240 = vunpack.c.l.b16 %v1724
    %v2241 = vunpack.c.l.b16 %v1725
    %v2242 = vunpack.c.l.b16 %v1726
    %v2243 = vunpack.c.l.b16 %v1727
    %v2244 = vunpack.c.l.b16 %v1728
    %v2245 = vunpack.c.l.b16 %v1729
    %v2246 = vunpack.c.l.b16 %v1730
    %v2247 = vunpack.c.l.b16 %v1731
    %v2248 = vunpack.c.l.b16 %v1732
    %v2249 = vunpack.c.l.b16 %v1733
    %v2250 = vunpack.c.l.b16 %v1734
    %v2251 = vunpack.c.l.b16 %v1735
    %v2252 = vunpack.c.l.b16 %v1736
    %v2253 = vunpack.c.l.b16 %v1737
    %v2254 = vunpack.c.l.b16 %v1738
    %v2255 = vunpack.c.l.b16 %v1739
    %v2256 = vunpack.c.l.b16 %v1740
    %v2257 = vunpack.c.l.b16 %v1741
    %v2258 = vunpack.c.l.b16 %v1742
    %v2259 = vunpack.c.l.b16 %v1743
    %v2260 = vunpack.c.l.b16 %v1744
    %v2261 = vunpack.c.l.b16 %v1745
    %v2262 = vunpack.c.l.b16 %v1746
    %v2263 = vunpack.c.l.b16 %v1747
    %v2264 = vunpack.c.l.b16 %v1748
    %v2265 = vunpack.c.l.b16 %v1749
    %v2266 = vunpack.c.l.b16 %v1750
    %v2267 = vunpack.c.l.b16 %v1751
    %v2268 = vunpack.c.l.b16 %v1752
    %v2269 = vunpack.c.l.b16 %v1753
    %v2270 = vunpack.c.l.b16 %v1754
    %v2271 = vunpack.c.l.b16 %v1755
    %v2272 = vunpack.c.l.b16 %v1756
    %v2273 = vunpack.c.l.b16 %v1757
    %v2274 = vunpack.c.l.b16 %v1758
    %v2275 = vunpack.c.l.b16 %v1759
    %v2276 = vunpack.c.l.b16 %v1760
    %v2277 = vunpack.c.l.b16 %v1761
    %v2278 = vunpack.c.l.b16 %v1762
    %v2279 = vunpack.c.l.b16 %v1763
    %v2280 = vunpack.c.l.b16 %v1764
    %v2281 = vunpack.c.l.b16 %v1765
    %v2282 = vunpack.c.l.b16 %v1766
    %v2283 = vunpack.c.l.b16 %v1767
    %v2284 = vunpack.c.l.b16 %v1768
    %v2285 = vunpack.c.l.b16 %v1769
    %v2286 = vunpack.c.l.b16 %v1770
    %v2287 = vunpack.c.l.b16 %v1771
    %v2288 = vunpack.c.l.b16 %v1772
    %v2289 = vunpack.c.l.b16 %v1773
    %v2290 = vunpack.c.l.b16 %v1774
    %v2291 = vunpack.c.l.b16 %v1775
    %v2292 = vunpack.c.l.b16 %v1776
    %v2293 = vunpack.c.l.b16 %v1777
    %v2294 = vunpack.c.l.b16 %v1778
    %v2295 = vunpack.c.l.b16 %v1779
    %v2296 = vunpack.c.l.b16 %v1780
    %v2297 = vunpack.c.l.b16 %v1781
    %v2298 = vunpack.c.l.b16 %v1782
    %v2299 = vunpack.c.l.b16 %v1783
    %v2300 = vunpack.c.l.b16 %v1784
    %v2301 = vunpack.c.l.b16 %v1785
    %v2302 = vunpack.c.l.b16 %v1786
    %v2303 = vunpack.c.l.b16 %v1787
    %v2304 = vunpack.c.l.b16 %v1788
    %v2305 = vunpack.c.l.b16 %v1789
    %v2306 = vunpack.c.l.b16 %v1790
    %v2307 = vunpack.c.l.b16 %v1791
    %v2308 = vunpack.c.l.b16 %v1792
    %v2309 = vunpack.c.l.b16 %v1793
    %v2310 = vunpack.c.l.b16 %v1794
    %v2311 = vunpack.c.l.b16 %v1795
    %v2312 = vunpack.c.l.b16 %v1796
    %v2313 = vunpack.c.l.b16 %v1797
    %v2314 = vunpack.c.l.b16 %v1798
    %v2315 = vunpack.c.l.b16 %v1799
    %v2316 = vunpack.c.l.b16 %v1800
    %v2317 = vunpack.c.l.b16 %v1801
    %v2318 = vunpack.c.l.b16 %v1802
    %v2319 = vunpack.c.l.b16 %v1803
    %v2320 = vunpack.c.l.b16 %v1804
    %v2321 = vunpack.c.l.b16 %v1805
    %v2322 = vunpack.c.l.b16 %v1806
    %v2323 = vunpack.c.l.b16 %v1807
    %v2324 = vunpack.c.l.b16 %v1808
    %v2325 = vunpack.c.l.b16 %v1809
    %v2326 = vunpack.c.l.b16 %v1810
    %v2327 = vunpack.c.l.b16 %v1811
    %v2328 = vunpack.c.l.b16 %v1812
    %v2329 = vunpack.c.l.b16 %v1813
    %v2330 = vunpack.c.l.b16 %v1814
    %v2331 = vunpack.c.l.b16 %v1815
    %v2332 = vunpack.c.l.b16 %v1816
    %v2333 = vunpack.c.l.b16 %v1817
    %v2334 = vunpack.c.l.b16 %v1818
    %v2335 = vunpack.c.l.b16 %v1819
    %v2336 = vunpack.c.l.b16 %v1820
    %v2337 = vunpack.c.l.b16 %v1821
    %v2338 = vunpack.c.l.b16 %v1822
    %v2339 = vunpack.c.l.b16 %v1823
    %v2340 = vunpack.c.l.b16 %v1824
    %v2341 = vunpack.c.l.b16 %v1825
    %v2342 = vunpack.c.l.b16 %v1826
    %v2343 = vunpack.c.l.b16 %v1827
    %v2344 = vunpack.c.l.b16 %v1828
    %v2345 = vunpack.c.l.b16 %v1829
    %v2346 = vunpack.c.l.b16 %v1830
    %v2347 = vunpack.c.l.b16 %v1831
    %v2348 = vunpack.c.l.b16 %v1832
    %v2349 = vunpack.c.l.b16 %v1833
    %v2350 = vunpack.c.l.b16 %v1834
    %v2351 = vunpack.c.l.b16 %v1835
    %v2352 = vunpack.c.l.b16 %v1836
    %v2353 = vunpack.c.l.b16 %v1837
    %v2354 = vunpack.c.l.b16 %v1838
    %v2355 = vunpack.c.l.b16 %v1839
    %v2356 = vpack.c.b16 %v2101, %v2100
    %v2357 = vpack.c.b16 %v2103, %v2102
    %v2358 = vpack.c.b16 %v2105, %v2104
    %v2359 = vpack.c.b16 %v2107, %v2106
    %v2360 = vpack.c.b16 %v2109, %v2108
    %v2361 = vpack.c.b16 %v2111, %v2110
    %v2362 = vpack.c.b16 %v2113, %v2112
    %v2363 = vpack.c.b16 %v2115, %v2114
    %v2364 = vpack.c.b16 %v2117, %v2116
    %v2365 = vpack.c.b16 %v2119, %v2118
    %v2366 = vpack.c.b16 %v2121, %v2120
    %v2367 = vpack.c.b16 %v2123, %v2122
    %v2368 = vpack.c.b16 %v2125, %v2124
    %v2369 = vpack.c.b16 %v2127, %v2126
    %v2370 = vpack.c.b16 %v2129, %v2128
    %v2371 = vpack.c.b16 %v2131, %v2130
    %v2372 = vpack.c.b16 %v2133, %v2132
    %v2373 = vpack.c.b16 %v2135, %v2134
    %v2374 = vpack.c.b16 %v2137, %v2136
    %v2375 = vpack.c.b16 %v2139, %v2138
    %v2376 = vpack.c.b16 %v2141, %v2140
    %v2377 = vpack.c.b16 %v2143, %v2142
    %v2378 = vpack.c.b16 %v2145, %v2144
    %v2379 = vpack.c.b16 %v2147, %v2146
    %v2380 = vpack.c.b16 %v2149, %v2148
    %v2381 = vpack.c.b16 %v2151, %v2150
    %v2382 = vpack.c.b16 %v2153, %v2152
    %v2383 = vpack.c.b16 %v2155, %v2154
    %v2384 = vpack.c.b16 %v2157, %v2156
    %v2385 = vpack.c.b16 %v2159, %v2158
    %v2386 = vpack.c.b16 %v2161, %v2160
    %v2387 = vpack.c.b16 %v2163, %v2162
    %v2388 = vpack.c.b16 %v2165, %v2164
    %v2389 = vpack.c.b16 %v2167, %v2166
    %v2390 = vpack.c.b16 %v2169, %v2168
    %v2391 = vpack.c.b16 %v2171, %v2170
    %v2392 = vpack.c.b16 %v2173, %v2172
    %v2393 = vpack.c.b16 %v2175, %v2174
    %v2394 = vpack.c.b16 %v2177, %v2176
    %v2395 = vpack.c.b16 %v2179, %v2178
    %v2396 = vpack.c.b16 %v2181, %v2180
    %v2397 = vpack.c.b16 %v2183, %v2182
    %v2398 = vpack.c.b16 %v2185, %v2184
    %v2399 = vpack.c.b16 %v2187, %v2186
    %v2400 = vpack.c.b16 %v2189, %v2188
    %v2401 = vpack.c.b16 %v2191, %v2190
    %v2402 = vpack.c.b16 %v2193, %v2192
    %v2403 = vpack.c.b16 %v2195, %v2194
    %v2404 = vpack.c.b16 %v2197, %v2196
    %v2405 = vpack.c.b16 %v2199, %v2198
    %v2406 = vpack.c.b16 %v2201, %v2200
    %v2407 = vpack.c.b16 %v2203, %v2202
    %v2408 = vpack.c.b16 %v2205, %v2204
    %v2409 = vpack.c.b16 %v2207, %v2206
    %v2410 = vpack.c.b16 %v2209, %v2208
    %v2411 = vpack.c.b16 %v2211, %v2210
    %v2412 = vpack.c.b16 %v2213, %v2212
    %v2413 = vpack.c.b16 %v2215, %v2214
    %v2414 = vpack.c.b16 %v2217, %v2216
    %v2415 = vpack.c.b16 %v2219, %v2218
    %v2416 = vpack.c.b16 %v2221, %v2220
    %v2417 = vpack.c.b16 %v2223, %v2222
    %v2418 = vpack.c.b16 %v2225, %v2224
    %v2419 = vpack.c.b16 %v2227, %v2226
    %v2420 = vpack.c.b16 %v2229, %v2228
    %v2421 = vpack.c.b16 %v2231, %v2230
    %v2422 = vpack.c.b16 %v2233, %v2232
    %v2423 = vpack.c.b16 %v2235, %v2234
    %v2424 = vpack.c.b16 %v2237, %v2236
    %v2425 = vpack.c.b16 %v2239, %v2238
    %v2426 = vpack.c.b16 %v2241, %v2240
    %v2427 = vpack.c.b16 %v2243, %v2242
    %v2428 = vpack.c.b16 %v2245, %v2244
    %v2429 = vpack.c.b16 %v2247, %v2246
    %v2430 = vpack.c.b16 %v2249, %v2248
    %v2431 = vpack.c.b16 %v2251, %v2250
    %v2432 = vpack.c.b16 %v2253, %v2252
    %v2433 = vpack.c.b16 %v2255, %v2254
    %v2434 = vpack.c.b16 %v2257, %v2256
    %v2435 = vpack.c.b16 %v2259, %v2258
    %v2436 = vpack.c.b16 %v2261, %v2260
    %v2437 = vpack.c.b16 %v2263, %v2262
    %v2438 = vpack.c.b16 %v2265, %v2264
    %v2439 = vpack.c.b16 %v2267, %v2266
    %v2440 = vpack.c.b16 %v2269, %v2268
    %v2441 = vpack.c.b16 %v2271, %v2270
    %v2442 = vpack.c.b16 %v2273, %v2272
    %v2443 = vpack.c.b16 %v2275, %v2274
    %v2444 = vpack.c.b16 %v2277, %v2276
    %v2445 = vpack.c.b16 %v2279, %v2278
    %v2446 = vpack.c.b16 %v2281, %v2280
    %v2447 = vpack.c.b16 %v2283, %v2282
    %v2448 = vpack.c.b16 %v2285, %v2284
    %v2449 = vpack.c.b16 %v2287, %v2286
    %v2450 = vpack.c.b16 %v2289, %v2288
    %v2451 = vpack.c.b16 %v2291, %v2290
    %v2452 = vpack.c.b16 %v2293, %v2292
    %v2453 = vpack.c.b16 %v2295, %v2294
    %v2454 = vpack.c.b16 %v2297, %v2296
    %v2455 = vpack.c.b16 %v2299, %v2298
    %v2456 = vpack.c.b16 %v2301, %v2300
    %v2457 = vpack.c.b16 %v2303, %v2302
    %v2458 = vpack.c.b16 %v2305, %v2304
    %v2459 = vpack.c.b16 %v2307, %v2306
    %v2460 = vpack.c.b16 %v2309, %v2308
    %v2461 = vpack.c.b16 %v2311, %v2310
    %v2462 = vpack.c.b16 %v2313, %v2312
    %v2463 = vpack.c.b16 %v2315, %v2314
    %v2464 = vpack.c.b16 %v2317, %v2316
    %v2465 = vpack.c.b16 %v2319, %v2318
    %v2466 = vpack.c.b16 %v2321, %v2320
    %v2467 = vpack.c.b16 %v2323, %v2322
    %v2468 = vpack.c.b16 %v2325, %v2324
    %v2469 = vpack.c.b16 %v2327, %v2326
    %v2470 = vpack.c.b16 %v2329, %v2328
    %v2471 = vpack.c.b16 %v2331, %v2330
    %v2472 = vpack.c.b16 %v2333, %v2332
    %v2473 = vpack.c.b16 %v2335, %v2334
    %v2474 = vpack.c.b16 %v2337, %v2336
    %v2475 = vpack.c.b16 %v2339, %v2338
    %v2476 = vpack.c.b16 %v2341, %v2340
    %v2477 = vpack.c.b16 %v2343, %v2342
    %v2478 = vpack.c.b16 %v2345, %v2344
    %v2479 = vpack.c.b16 %v2347, %v2346
    %v2480 = vpack.c.b16 %v2349, %v2348
    %v2481 = vpack.c.b16 %v2351, %v2350
    %v2482 = vpack.c.b16 %v2353, %v2352
    %v2483 = vpack.c.b16 %v2355, %v2354
    %2612 = vmatpush.bf16.msra.mxu0 %v2363
    %2613 = vmatpush.bf16.msra.mxu0 %v2362
    %2614 = vmatpush.bf16.msra.mxu0 %v2361
    %2615 = vmatpush.bf16.msra.mxu0 %v2360
    %2616 = vmatpush.bf16.msra.mxu0 %v2359
    %2617 = vmatpush.bf16.msra.mxu0 %v2358
    %2618 = vmatpush.bf16.msra.mxu0 %v2357
    %2619 = vmatpush.bf16.msra.mxu0 %v2356
    %2620 = vmatmul.bf16.gmra.mxu0 %v1536
    %v2621 = vpop.f32.mrf.mxu0
    %v2622 = vadd.f32 %v1842, %v2621
    %v2623 = vpop.f32.mrf.mxu0
    %v2624 = vadd.f32 %v1842, %v2623
    %2625 = vmatmul.bf16.gmra.mxu0 %v1552
    %v2626 = vpop.f32.mrf.mxu0
    %v2627 = vadd.f32 %v1842, %v2626
    %v2628 = vpop.f32.mrf.mxu0
    %v2629 = vadd.f32 %v1842, %v2628
    %2630 = vmatmul.bf16.gmra.mxu0 %v1568
    %v2631 = vpop.f32.mrf.mxu0
    %v2632 = vadd.f32 %v1842, %v2631
    %v2633 = vpop.f32.mrf.mxu0
    %2634 = vdwg.mxu0
    %2635 = vmatpush.bf16.msra.mxu0 %v2371
    %2636 = vmatpush.bf16.msra.mxu0 %v2370
    %2637 = vmatpush.bf16.msra.mxu0 %v2369
    %2638 = vmatpush.bf16.msra.mxu0 %v2368
    %2639 = vmatpush.bf16.msra.mxu0 %v2367
    %2640 = vmatpush.bf16.msra.mxu0 %v2366
    %2641 = vmatpush.bf16.msra.mxu0 %v2365
    %2642 = vmatpush.bf16.msra.mxu0 %v2364
    %2643 = vmatmul.bf16.gmra.mxu0 %v1537
    %v2644 = vpop.f32.mrf.mxu0
    %v2645 = vadd.f32 %v2622, %v2644
    %v2646 = vpop.f32.mrf.mxu0
    %v2647 = vadd.f32 %v2624, %v2646
    %2648 = vmatmul.bf16.gmra.mxu0 %v1553
    %v2649 = vpop.f32.mrf.mxu0
    %v2650 = vadd.f32 %v2627, %v2649
    %v2651 = vpop.f32.mrf.mxu0
    %v2652 = vadd.f32 %v2629, %v2651
    %2653 = vmatmul.bf16.gmra.mxu0 %v1569
    %v2654 = vpop.f32.mrf.mxu0
    %v2655 = vadd.f32 %v2632, %v2654
    %v2656 = vpop.f32.mrf.mxu0
    %2657 = vdwg.mxu0
    %2658 = vmatpush.bf16.msra.mxu0 %v2379
    %2659 = vmatpush.bf16.msra.mxu0 %v2378
    %2660 = vmatpush.bf16.msra.mxu0 %v2377
    %2661 = vmatpush.bf16.msra.mxu0 %v2376
    %2662 = vmatpush.bf16.msra.mxu0 %v2375
    %2663 = vmatpush.bf16.msra.mxu0 %v2374
    %2664 = vmatpush.bf16.msra.mxu0 %v2373
    %2665 = vmatpush.bf16.msra.mxu0 %v2372
    %2666 = vmatmul.bf16.gmra.mxu0 %v1538
    %v2667 = vpop.f32.mrf.mxu0
    %v2668 = vadd.f32 %v2645, %v2667
    %v2669 = vpop.f32.mrf.mxu0
    %v2670 = vadd.f32 %v2647, %v2669
    %2671 = vmatmul.bf16.gmra.mxu0 %v1554
    %v2672 = vpop.f32.mrf.mxu0
    %v2673 = vadd.f32 %v2650, %v2672
    %v2674 = vpop.f32.mrf.mxu0
    %v2675 = vadd.f32 %v2652, %v2674
    %2676 = vmatmul.bf16.gmra.mxu0 %v1570
    %v2677 = vpop.f32.mrf.mxu0
    %v2678 = vadd.f32 %v2655, %v2677
    %v2679 = vpop.f32.mrf.mxu0
    %2680 = vdwg.mxu0
    %2681 = vmatpush.bf16.msra.mxu0 %v2387
    %2682 = vmatpush.bf16.msra.mxu0 %v2386
    %2683 = vmatpush.bf16.msra.mxu0 %v2385
    %2684 = vmatpush.bf16.msra.mxu0 %v2384
    %2685 = vmatpush.bf16.msra.mxu0 %v2383
    %2686 = vmatpush.bf16.msra.mxu0 %v2382
    %2687 = vmatpush.bf16.msra.mxu0 %v2381
    %2688 = vmatpush.bf16.msra.mxu0 %v2380
    %2689 = vmatmul.bf16.gmra.mxu0 %v1539
    %v2690 = vpop.f32.mrf.mxu0
    %v2691 = vadd.f32 %v2668, %v2690
    %v2692 = vpop.f32.mrf.mxu0
    %v2693 = vadd.f32 %v2670, %v2692
    %2694 = vmatmul.bf16.gmra.mxu0 %v1555
    %v2695 = vpop.f32.mrf.mxu0
    %v2696 = vadd.f32 %v2673, %v2695
    %v2697 = vpop.f32.mrf.mxu0
    %v2698 = vadd.f32 %v2675, %v2697
    %2699 = vmatmul.bf16.gmra.mxu0 %v1571
    %v2700 = vpop.f32.mrf.mxu0
    %v2701 = vadd.f32 %v2678, %v2700
    %v2702 = vpop.f32.mrf.mxu0
    %2703 = vdwg.mxu0
    %2704 = vmatpush.bf16.msra.mxu0 %v2395
    %2705 = vmatpush.bf16.msra.mxu0 %v2394
    %2706 = vmatpush.bf16.msra.mxu0 %v2393
    %2707 = vmatpush.bf16.msra.mxu0 %v2392
    %2708 = vmatpush.bf16.msra.mxu0 %v2391
    %2709 = vmatpush.bf16.msra.mxu0 %v2390
    %2710 = vmatpush.bf16.msra.mxu0 %v2389
    %2711 = vmatpush.bf16.msra.mxu0 %v2388
    %2712 = vmatmul.bf16.gmra.mxu0 %v1540
    %v2713 = vpop.f32.mrf.mxu0
    %v2714 = vadd.f32 %v2691, %v2713
    %v2715 = vpop.f32.mrf.mxu0
    %v2716 = vadd.f32 %v2693, %v2715
    %2717 = vmatmul.bf16.gmra.mxu0 %v1556
    %v2718 = vpop.f32.mrf.mxu0
    %v2719 = vadd.f32 %v2696, %v2718
    %v2720 = vpop.f32.mrf.mxu0
    %v2721 = vadd.f32 %v2698, %v2720
    %2722 = vmatmul.bf16.gmra.mxu0 %v1572
    %v2723 = vpop.f32.mrf.mxu0
    %v2724 = vadd.f32 %v2701, %v2723
    %v2725 = vpop.f32.mrf.mxu0
    %2726 = vdwg.mxu0
    %2727 = vmatpush.bf16.msra.mxu0 %v2403
    %2728 = vmatpush.bf16.msra.mxu0 %v2402
    %2729 = vmatpush.bf16.msra.mxu0 %v2401
    %2730 = vmatpush.bf16.msra.mxu0 %v2400
    %2731 = vmatpush.bf16.msra.mxu0 %v2399
    %2732 = vmatpush.bf16.msra.mxu0 %v2398
    %2733 = vmatpush.bf16.msra.mxu0 %v2397
    %2734 = vmatpush.bf16.msra.mxu0 %v2396
    %2735 = vmatmul.bf16.gmra.mxu0 %v1541
    %v2736 = vpop.f32.mrf.mxu0
    %v2737 = vadd.f32 %v2714, %v2736
    %v2738 = vpop.f32.mrf.mxu0
    %v2739 = vadd.f32 %v2716, %v2738
    %2740 = vmatmul.bf16.gmra.mxu0 %v1557
    %v2741 = vpop.f32.mrf.mxu0
    %v2742 = vadd.f32 %v2719, %v2741
    %v2743 = vpop.f32.mrf.mxu0
    %v2744 = vadd.f32 %v2721, %v2743
    %2745 = vmatmul.bf16.gmra.mxu0 %v1573
    %v2746 = vpop.f32.mrf.mxu0
    %v2747 = vadd.f32 %v2724, %v2746
    %v2748 = vpop.f32.mrf.mxu0
    %2749 = vdwg.mxu0
    %2750 = vmatpush.bf16.msra.mxu0 %v2411
    %2751 = vmatpush.bf16.msra.mxu0 %v2410
    %2752 = vmatpush.bf16.msra.mxu0 %v2409
    %2753 = vmatpush.bf16.msra.mxu0 %v2408
    %2754 = vmatpush.bf16.msra.mxu0 %v2407
    %2755 = vmatpush.bf16.msra.mxu0 %v2406
    %2756 = vmatpush.bf16.msra.mxu0 %v2405
    %2757 = vmatpush.bf16.msra.mxu0 %v2404
    %2758 = vmatmul.bf16.gmra.mxu0 %v1542
    %v2759 = vpop.f32.mrf.mxu0
    %v2760 = vadd.f32 %v2737, %v2759
    %v2761 = vpop.f32.mrf.mxu0
    %v2762 = vadd.f32 %v2739, %v2761
    %2763 = vmatmul.bf16.gmra.mxu0 %v1558
    %v2764 = vpop.f32.mrf.mxu0
    %v2765 = vadd.f32 %v2742, %v2764
    %v2766 = vpop.f32.mrf.mxu0
    %v2767 = vadd.f32 %v2744, %v2766
    %2768 = vmatmul.bf16.gmra.mxu0 %v1574
    %v2769 = vpop.f32.mrf.mxu0
    %v2770 = vadd.f32 %v2747, %v2769
    %v2771 = vpop.f32.mrf.mxu0
    %2772 = vdwg.mxu0
    %2773 = vmatpush.bf16.msra.mxu0 %v2419
    %2774 = vmatpush.bf16.msra.mxu0 %v2418
    %2775 = vmatpush.bf16.msra.mxu0 %v2417
    %2776 = vmatpush.bf16.msra.mxu0 %v2416
    %2777 = vmatpush.bf16.msra.mxu0 %v2415
    %2778 = vmatpush.bf16.msra.mxu0 %v2414
    %2779 = vmatpush.bf16.msra.mxu0 %v2413
    %2780 = vmatpush.bf16.msra.mxu0 %v2412
    %2781 = vmatmul.bf16.gmra.mxu0 %v1543
    %v2782 = vpop.f32.mrf.mxu0
    %v2783 = vadd.f32 %v2760, %v2782
    %v2784 = vpop.f32.mrf.mxu0
    %v2785 = vadd.f32 %v2762, %v2784
    %2786 = vmatmul.bf16.gmra.mxu0 %v1559
    %v2787 = vpop.f32.mrf.mxu0
    %v2788 = vadd.f32 %v2765, %v2787
    %v2789 = vpop.f32.mrf.mxu0
    %v2790 = vadd.f32 %v2767, %v2789
    %2791 = vmatmul.bf16.gmra.mxu0 %v1575
    %v2792 = vpop.f32.mrf.mxu0
    %v2793 = vadd.f32 %v2770, %v2792
    %v2794 = vpop.f32.mrf.mxu0
    %2795 = vdwg.mxu0
    %2796 = vmatpush.bf16.msra.mxu0 %v2427
    %2797 = vmatpush.bf16.msra.mxu0 %v2426
    %2798 = vmatpush.bf16.msra.mxu0 %v2425
    %2799 = vmatpush.bf16.msra.mxu0 %v2424
    %2800 = vmatpush.bf16.msra.mxu0 %v2423
    %2801 = vmatpush.bf16.msra.mxu0 %v2422
    %2802 = vmatpush.bf16.msra.mxu0 %v2421
    %2803 = vmatpush.bf16.msra.mxu0 %v2420
    %2804 = vmatmul.bf16.gmra.mxu0 %v1544
    %v2805 = vpop.f32.mrf.mxu0
    %v2806 = vadd.f32 %v2783, %v2805
    %v2807 = vpop.f32.mrf.mxu0
    %v2808 = vadd.f32 %v2785, %v2807
    %2809 = vmatmul.bf16.gmra.mxu0 %v1560
    %v2810 = vpop.f32.mrf.mxu0
    %v2811 = vadd.f32 %v2788, %v2810
    %v2812 = vpop.f32.mrf.mxu0
    %v2813 = vadd.f32 %v2790, %v2812
    %2814 = vmatmul.bf16.gmra.mxu0 %v1576
    %v2815 = vpop.f32.mrf.mxu0
    %v2816 = vadd.f32 %v2793, %v2815
    %v2817 = vpop.f32.mrf.mxu0
    %2818 = vdwg.mxu0
    %2819 = vmatpush.bf16.msra.mxu0 %v2435
    %2820 = vmatpush.bf16.msra.mxu0 %v2434
    %2821 = vmatpush.bf16.msra.mxu0 %v2433
    %2822 = vmatpush.bf16.msra.mxu0 %v2432
    %2823 = vmatpush.bf16.msra.mxu0 %v2431
    %2824 = vmatpush.bf16.msra.mxu0 %v2430
    %2825 = vmatpush.bf16.msra.mxu0 %v2429
    %2826 = vmatpush.bf16.msra.mxu0 %v2428
    %2827 = vmatmul.bf16.gmra.mxu0 %v1545
    %v2828 = vpop.f32.mrf.mxu0
    %v2829 = vadd.f32 %v2806, %v2828
    %v2830 = vpop.f32.mrf.mxu0
    %v2831 = vadd.f32 %v2808, %v2830
    %2832 = vmatmul.bf16.gmra.mxu0 %v1561
    %v2833 = vpop.f32.mrf.mxu0
    %v2834 = vadd.f32 %v2811, %v2833
    %v2835 = vpop.f32.mrf.mxu0
    %v2836 = vadd.f32 %v2813, %v2835
    %2837 = vmatmul.bf16.gmra.mxu0 %v1577
    %v2838 = vpop.f32.mrf.mxu0
    %v2839 = vadd.f32 %v2816, %v2838
    %v2840 = vpop.f32.mrf.mxu0
    %2841 = vdwg.mxu0
    %2842 = vmatpush.bf16.msra.mxu0 %v2443
    %2843 = vmatpush.bf16.msra.mxu0 %v2442
    %2844 = vmatpush.bf16.msra.mxu0 %v2441
    %2845 = vmatpush.bf16.msra.mxu0 %v2440
    %2846 = vmatpush.bf16.msra.mxu0 %v2439
    %2847 = vmatpush.bf16.msra.mxu0 %v2438
    %2848 = vmatpush.bf16.msra.mxu0 %v2437
    %2849 = vmatpush.bf16.msra.mxu0 %v2436
    %2850 = vmatmul.bf16.gmra.mxu0 %v1546
    %v2851 = vpop.f32.mrf.mxu0
    %v2852 = vadd.f32 %v2829, %v2851
    %v2853 = vpop.f32.mrf.mxu0
    %v2854 = vadd.f32 %v2831, %v2853
    %2855 = vmatmul.bf16.gmra.mxu0 %v1562
    %v2856 = vpop.f32.mrf.mxu0
    %v2857 = vadd.f32 %v2834, %v2856
    %v2858 = vpop.f32.mrf.mxu0
    %v2859 = vadd.f32 %v2836, %v2858
    %2860 = vmatmul.bf16.gmra.mxu0 %v1578
    %v2861 = vpop.f32.mrf.mxu0
    %v2862 = vadd.f32 %v2839, %v2861
    %v2863 = vpop.f32.mrf.mxu0
    %2864 = vdwg.mxu0
    %2865 = vmatpush.bf16.msra.mxu0 %v2451
    %2866 = vmatpush.bf16.msra.mxu0 %v2450
    %2867 = vmatpush.bf16.msra.mxu0 %v2449
    %2868 = vmatpush.bf16.msra.mxu0 %v2448
    %2869 = vmatpush.bf16.msra.mxu0 %v2447
    %2870 = vmatpush.bf16.msra.mxu0 %v2446
    %2871 = vmatpush.bf16.msra.mxu0 %v2445
    %2872 = vmatpush.bf16.msra.mxu0 %v2444
    %2873 = vmatmul.bf16.gmra.mxu0 %v1547
    %v2874 = vpop.f32.mrf.mxu0
    %v2875 = vadd.f32 %v2852, %v2874
    %v2876 = vpop.f32.mrf.mxu0
    %v2877 = vadd.f32 %v2854, %v2876
    %2878 = vmatmul.bf16.gmra.mxu0 %v1563
    %v2879 = vpop.f32.mrf.mxu0
    %v2880 = vadd.f32 %v2857, %v2879
    %v2881 = vpop.f32.mrf.mxu0
    %v2882 = vadd.f32 %v2859, %v2881
    %2883 = vmatmul.bf16.gmra.mxu0 %v1579
    %v2884 = vpop.f32.mrf.mxu0
    %v2885 = vadd.f32 %v2862, %v2884
    %v2886 = vpop.f32.mrf.mxu0
    %2887 = vdwg.mxu0
    %2888 = vmatpush.bf16.msra.mxu0 %v2459
    %2889 = vmatpush.bf16.msra.mxu0 %v2458
    %2890 = vmatpush.bf16.msra.mxu0 %v2457
    %2891 = vmatpush.bf16.msra.mxu0 %v2456
    %2892 = vmatpush.bf16.msra.mxu0 %v2455
    %2893 = vmatpush.bf16.msra.mxu0 %v2454
    %2894 = vmatpush.bf16.msra.mxu0 %v2453
    %2895 = vmatpush.bf16.msra.mxu0 %v2452
    %2896 = vmatmul.bf16.gmra.mxu0 %v1548
    %v2897 = vpop.f32.mrf.mxu0
    %v2898 = vadd.f32 %v2875, %v2897
    %v2899 = vpop.f32.mrf.mxu0
    %v2900 = vadd.f32 %v2877, %v2899
    %2901 = vmatmul.bf16.gmra.mxu0 %v1564
    %v2902 = vpop.f32.mrf.mxu0
    %v2903 = vadd.f32 %v2880, %v2902
    %v2904 = vpop.f32.mrf.mxu0
    %v2905 = vadd.f32 %v2882, %v2904
    %2906 = vmatmul.bf16.gmra.mxu0 %v1580
    %v2907 = vpop.f32.mrf.mxu0
    %v2908 = vadd.f32 %v2885, %v2907
    %v2909 = vpop.f32.mrf.mxu0
    %2910 = vdwg.mxu0
    %2911 = vmatpush.bf16.msra.mxu0 %v2467
    %2912 = vmatpush.bf16.msra.mxu0 %v2466
    %2913 = vmatpush.bf16.msra.mxu0 %v2465
    %2914 = vmatpush.bf16.msra.mxu0 %v2464
    %2915 = vmatpush.bf16.msra.mxu0 %v2463
    %2916 = vmatpush.bf16.msra.mxu0 %v2462
    %2917 = vmatpush.bf16.msra.mxu0 %v2461
    %2918 = vmatpush.bf16.msra.mxu0 %v2460
    %2919 = vmatmul.bf16.gmra.mxu0 %v1549
    %v2920 = vpop.f32.mrf.mxu0
    %v2921 = vadd.f32 %v2898, %v2920
    %v2922 = vpop.f32.mrf.mxu0
    %v2923 = vadd.f32 %v2900, %v2922
    %2924 = vmatmul.bf16.gmra.mxu0 %v1565
    %v2925 = vpop.f32.mrf.mxu0
    %v2926 = vadd.f32 %v2903, %v2925
    %v2927 = vpop.f32.mrf.mxu0
    %v2928 = vadd.f32 %v2905, %v2927
    %2929 = vmatmul.bf16.gmra.mxu0 %v1581
    %v2930 = vpop.f32.mrf.mxu0
    %v2931 = vadd.f32 %v2908, %v2930
    %v2932 = vpop.f32.mrf.mxu0
    %2933 = vdwg.mxu0
    %2934 = vmatpush.bf16.msra.mxu0 %v2475
    %2935 = vmatpush.bf16.msra.mxu0 %v2474
    %2936 = vmatpush.bf16.msra.mxu0 %v2473
    %2937 = vmatpush.bf16.msra.mxu0 %v2472
    %2938 = vmatpush.bf16.msra.mxu0 %v2471
    %2939 = vmatpush.bf16.msra.mxu0 %v2470
    %2940 = vmatpush.bf16.msra.mxu0 %v2469
    %2941 = vmatpush.bf16.msra.mxu0 %v2468
    %2942 = vmatmul.bf16.gmra.mxu0 %v1550
    %v2943 = vpop.f32.mrf.mxu0
    %v2944 = vadd.f32 %v2921, %v2943
    %v2945 = vpop.f32.mrf.mxu0
    %v2946 = vadd.f32 %v2923, %v2945
    %2947 = vmatmul.bf16.gmra.mxu0 %v1566
    %v2948 = vpop.f32.mrf.mxu0
    %v2949 = vadd.f32 %v2926, %v2948
    %v2950 = vpop.f32.mrf.mxu0
    %v2951 = vadd.f32 %v2928, %v2950
    %2952 = vmatmul.bf16.gmra.mxu0 %v1582
    %v2953 = vpop.f32.mrf.mxu0
    %v2954 = vadd.f32 %v2931, %v2953
    %v2955 = vpop.f32.mrf.mxu0
    %2956 = vdwg.mxu0
    %2957 = vmatpush.bf16.msra.mxu0 %v2483
    %2958 = vmatpush.bf16.msra.mxu0 %v2482
    %2959 = vmatpush.bf16.msra.mxu0 %v2481
    %2960 = vmatpush.bf16.msra.mxu0 %v2480
    %2961 = vmatpush.bf16.msra.mxu0 %v2479
    %2962 = vmatpush.bf16.msra.mxu0 %v2478
    %2963 = vmatpush.bf16.msra.mxu0 %v2477
    %2964 = vmatpush.bf16.msra.mxu0 %v2476
    %2965 = vmatmul.bf16.gmra.mxu0 %v1551
    %v2966 = vpop.f32.mrf.mxu0
    %v2967 = vadd.f32 %v2944, %v2966
    %v2968 = vpop.f32.mrf.mxu0
    %v2969 = vadd.f32 %v2946, %v2968
    %2970 = vmatmul.bf16.gmra.mxu0 %v1567
    %v2971 = vpop.f32.mrf.mxu0
    %v2972 = vadd.f32 %v2949, %v2971
    %v2973 = vpop.f32.mrf.mxu0
    %v2974 = vadd.f32 %v2951, %v2973
    %2975 = vmatmul.bf16.gmra.mxu0 %v1583
    %v2976 = vpop.f32.mrf.mxu0
    %v2977 = vadd.f32 %v2954, %v2976
    %v2978 = vpop.f32.mrf.mxu0
    %2979 = vdwg.mxu0
    %v2980 = vadd.f32 %v843, %v2967
    %v2981 = vadd.f32 %v844, %v2969
    %v2982 = vadd.f32 %v845, %v2972
    %v2983 = vadd.f32 %v846, %v2974
    %v2984 = vadd.f32 %v847, %v2977
    %v2985 = vld [vmem:[%s33] sm:$0x1]
    %v2986 = vld [vmem:[%s35] sm:$0x1]
    %v2987 = vsel %vm227, %v2980, 0.0
    %2988 = vadd.xlane.f32.xlu0 %v2987
    %v2989 = vpop.xlane.xlu0 %2988
    %v2990 = vsel %vm227, %v2981, 0.0
    %2991 = vadd.xlane.f32.xlu0 %v2990
    %v2992 = vpop.xlane.xlu0 %2991
    %v2993 = vsel %vm227, %v2982, 0.0
    %2994 = vadd.xlane.f32.xlu0 %v2993
    %v2995 = vpop.xlane.xlu0 %2994
    %v2996 = vsel %vm227, %v2983, 0.0
    %2997 = vadd.xlane.f32.xlu0 %v2996
    %v2998 = vpop.xlane.xlu0 %2997
    %v2999 = vsel %vm726, %v2984, 0.0
    %3000 = vadd.xlane.f32.xlu0 %v2999
    %v3001 = vpop.xlane.xlu0 %3000
    %v3002 = vmul.f32 %v2989, %v736
    %v3003 = vmul.f32 %v2992, %v736
    %v3004 = vmul.f32 %v2995, %v736
    %v3005 = vmul.f32 %v2998, %v736
    %v3006 = vmul.f32 %v3001, %v736
    %v3007 = vsub.f32 %v2980, %v3002
    %v3008 = vsub.f32 %v2981, %v3003
    %v3009 = vsub.f32 %v2982, %v3004
    %v3010 = vsub.f32 %v2983, %v3005
    %v3011 = vsub.f32 %v2984, %v3006
    %v3012 = vmul.f32 %v3007, %v3007
    %v3013 = vmul.f32 %v3008, %v3008
    %v3014 = vmul.f32 %v3009, %v3009
    %v3015 = vmul.f32 %v3010, %v3010
    %v3016 = vmul.f32 %v3011, %v3011
    %v3017 = vsel %vm227, %v3012, 0.0
    %3018 = vadd.xlane.f32.xlu0 %v3017
    %v3019 = vpop.xlane.xlu0 %3018
    %v3020 = vsel %vm227, %v3013, 0.0
    %3021 = vadd.xlane.f32.xlu0 %v3020
    %v3022 = vpop.xlane.xlu0 %3021
    %v3023 = vsel %vm227, %v3014, 0.0
    %3024 = vadd.xlane.f32.xlu0 %v3023
    %v3025 = vpop.xlane.xlu0 %3024
    %v3026 = vsel %vm227, %v3015, 0.0
    %3027 = vadd.xlane.f32.xlu0 %v3026
    %v3028 = vpop.xlane.xlu0 %3027
    %v3029 = vsel %vm726, %v3016, 0.0
    %3030 = vadd.xlane.f32.xlu0 %v3029
    %v3031 = vpop.xlane.xlu0 %3030
    %v3032 = vmul.f32 %v3019, %v736
    %v3033 = vmul.f32 %v3022, %v736
    %v3034 = vmul.f32 %v3025, %v736
    %v3035 = vmul.f32 %v3028, %v736
    %v3036 = vmul.f32 %v3031, %v736
    %v3037 = vadd.f32 %v3032, 1e-05
    %v3038 = vadd.f32 %v3033, 1e-05
    %v3039 = vadd.f32 %v3034, 1e-05
    %v3040 = vadd.f32 %v3035, 1e-05
    %v3041 = vadd.f32 %v3036, 1e-05
    %v3042 = vrsqrt.pop %v3037
    %v3043 = vmul.f32 %v3042, %v3037
    %v3044 = vmul.f32 %v3043, %v3042
    %v3045 = vmul.f32 0.5, %v3044
    %v3046 = vsub.f32 1.5, %v3045
    %v3047 = vmul.f32 %v3042, %v3046
    %vm3048 = vweird.f32 %v3037
    %vm3049 = vweird.f32 %v3042
    %vm3050 = vmor %vm3048, %vm3049
    %v3051 = vsel %vm3050, %v3042, %v3047
    %v3052 = vrsqrt.pop %v3038
    %v3053 = vmul.f32 %v3052, %v3038
    %v3054 = vmul.f32 %v3053, %v3052
    %v3055 = vmul.f32 0.5, %v3054
    %v3056 = vsub.f32 1.5, %v3055
    %v3057 = vmul.f32 %v3052, %v3056
    %vm3058 = vweird.f32 %v3038
    %vm3059 = vweird.f32 %v3052
    %vm3060 = vmor %vm3058, %vm3059
    %v3061 = vsel %vm3060, %v3052, %v3057
    %v3062 = vrsqrt.pop %v3039
    %v3063 = vmul.f32 %v3062, %v3039
    %v3064 = vmul.f32 %v3063, %v3062
    %v3065 = vmul.f32 0.5, %v3064
    %v3066 = vsub.f32 1.5, %v3065
    %v3067 = vmul.f32 %v3062, %v3066
    %vm3068 = vweird.f32 %v3039
    %vm3069 = vweird.f32 %v3062
    %vm3070 = vmor %vm3068, %vm3069
    %v3071 = vsel %vm3070, %v3062, %v3067
    %v3072 = vrsqrt.pop %v3040
    %v3073 = vmul.f32 %v3072, %v3040
    %v3074 = vmul.f32 %v3073, %v3072
    %v3075 = vmul.f32 0.5, %v3074
    %v3076 = vsub.f32 1.5, %v3075
    %v3077 = vmul.f32 %v3072, %v3076
    %vm3078 = vweird.f32 %v3040
    %vm3079 = vweird.f32 %v3072
    %vm3080 = vmor %vm3078, %vm3079
    %v3081 = vsel %vm3080, %v3072, %v3077
    %v3082 = vrsqrt.pop %v3041
    %v3083 = vmul.f32 %v3082, %v3041
    %v3084 = vmul.f32 %v3083, %v3082
    %v3085 = vmul.f32 0.5, %v3084
    %v3086 = vsub.f32 1.5, %v3085
    %v3087 = vmul.f32 %v3082, %v3086
    %vm3088 = vweird.f32 %v3041
    %vm3089 = vweird.f32 %v3082
    %vm3090 = vmor %vm3088, %vm3089
    %v3091 = vsel %vm3090, %v3082, %v3087
    %v3092 = vmul.f32 %v3007, %v3051
    %v3093 = vmul.f32 %v3008, %v3061
    %v3094 = vmul.f32 %v3009, %v3071
    %v3095 = vmul.f32 %v3010, %v3081
    %v3096 = vmul.f32 %v3011, %v3091
    %v3098 = vperm.slane %v2985, 0
    %v3100 = vmul.f32 %v3092, %v3098
    %v3101 = vmul.f32 %v3093, %v3098
    %v3102 = vmul.f32 %v3094, %v3098
    %v3103 = vmul.f32 %v3095, %v3098
    %v3104 = vmul.f32 %v3096, %v3098
    %v3106 = vperm.slane %v2986, 0
    %v3108 = vadd.f32 %v3100, %v3106
    %v3109 = vadd.f32 %v3101, %v3106
    %v3110 = vadd.f32 %v3102, %v3106
    %v3111 = vadd.f32 %v3103, %v3106
    %v3112 = vadd.f32 %v3104, %v3106
    %v3113 = vld [vmem:[%s37] sm:$0xff]
    %v3114 = vld [vmem:[%s37 + $0x8] sm:$0xff]
    %v3115 = vld [vmem:[%s37 + $0x10] sm:$0xff]
    %v3116 = vld [vmem:[%s37 + $0x18] sm:$0xff]
    %v3117 = vld [vmem:[%s39] sm:$0x1]
    %v3119 = vperm.slane %v3117, 0
    %v3122 = vsel %vm227, %v3108, 0
    %v3125 = vsel %vm227, %v3109, 0
    %v3128 = vsel %vm227, %v3110, 0
    %v3131 = vsel %vm227, %v3111, 0
    %v3134 = vsel %vm227, %v3112, 0
    %3136 = vmatpush.msra.mxu0 0.0
    %3137 = vmatpush.msra.mxu0 0.0
    %3138 = vmatpush.msra.mxu0 0.0
    %3139 = vmatpush.msra.mxu0 0.0
    %3140 = vmatpush.msra.mxu0 0.0
    %3141 = vmatpush.msra.mxu0 0.0
    %3142 = vmatpush.msra.mxu0 0.0
    %3143 = vmatpush.msra.mxu0 0.0
    %3144 = vmatpush.msra.mxu0 0.0
    %3145 = vmatpush.msra.mxu0 0.0
    %3146 = vmatpush.msra.mxu0 0.0
    %3147 = vmatpush.msra.mxu0 0.0
    %3148 = vmatpush.msra.mxu0 %v3116
    %3149 = vmatpush.msra.mxu0 %v3115
    %3150 = vmatpush.msra.mxu0 %v3114
    %3151 = vmatpush.msra.mxu0 %v3113
    %3152 = vmatmul.f32.gmra.mxu0 %v3122
    %v3153 = vpop.f32.mrf.mxu0
    %v3154 = vadd.f32 %v3119, %v3153
    %3155 = vmatmul.f32.gmra.mxu0 %v3125
    %v3156 = vpop.f32.mrf.mxu0
    %v3157 = vadd.f32 %v3119, %v3156
    %3158 = vmatmul.f32.gmra.mxu0 %v3128
    %v3159 = vpop.f32.mrf.mxu0
    %v3160 = vadd.f32 %v3119, %v3159
    %3161 = vmatmul.f32.gmra.mxu0 %v3131
    %v3162 = vpop.f32.mrf.mxu0
    %v3163 = vadd.f32 %v3119, %v3162
    %3164 = vmatmul.f32.gmra.mxu0 %v3134
    %v3165 = vpop.f32.mrf.mxu0
    %v3166 = vadd.f32 %v3119, %v3165
    %3167 = vdwg.mxu0
    %v3171 = vrot.slane %v3154, 7
    %v3172 = vrot.slane %v3157, 7
    %v3173 = vsel %vm278, %v3171, %v3172
    %v3174 = vrot.slane %v3160, 7
    %v3175 = vsel %vm278, %v3172, %v3174
    %v3177 = vsel %vm278, %v3160, %v3171
    %3179 = vrot.lane.b32.xlu0 %v3154, 96
    %v3180 = vpop.permute.xlu0 %3179
    %3181 = vrot.lane.b32.xlu0 %v3157, 96
    %v3182 = vpop.permute.xlu0 %3181
    %3183 = vrot.lane.b32.xlu0 %v3177, 96
    %v3184 = vpop.permute.xlu0 %3183
    %3185 = vrot.lane.b32.xlu0 %v3173, 96
    %v3186 = vpop.permute.xlu0 %3185
    %3187 = vrot.lane.b32.xlu0 %v3175, 96
    %v3188 = vpop.permute.xlu0 %3187
    %v3194 = vmul.f32 %v3154, %v3180
    %v3195 = vmul.f32 %v3157, %v3182
    %v3196 = vmul.f32 %v3160, %v3184
    %v3197 = vmul.f32 %v3163, %v3186
    %v3198 = vmul.f32 %v3166, %v3188
    %v3201 = vrot.slane %v3160, 1
    %v3202 = vrot.slane %v3163, 1
    %v3203 = vsel %vm309, %v3201, %v3202
    %v3204 = vrot.slane %v3166, 1
    %v3205 = vsel %vm309, %v3202, %v3204
    %v3207 = vsel %vm278, %v3204, %v3160
    %3209 = vrot.lane.b32.xlu0 %v3203, 96
    %v3210 = vpop.permute.xlu0 %3209
    %3211 = vrot.lane.b32.xlu0 %v3205, 96
    %v3212 = vpop.permute.xlu0 %3211
    %3213 = vrot.lane.b32.xlu0 %v3207, 96
    %v3214 = vpop.permute.xlu0 %3213
    %3215 = vrot.lane.b32.xlu0 %v3163, 96
    %v3216 = vpop.permute.xlu0 %3215
    %3217 = vrot.lane.b32.xlu0 %v3166, 96
    %v3218 = vpop.permute.xlu0 %3217
    %v3224 = vmul.f32 %v3154, %v3210
    %v3225 = vmul.f32 %v3157, %v3212
    %v3226 = vmul.f32 %v3160, %v3214
    %v3227 = vmul.f32 %v3163, %v3216
    %v3228 = vmul.f32 %v3166, %v3218
    %3234 = vrot.lane.b32.xlu0 %v3224, 32
    %v3235 = vpop.permute.xlu0 %3234
    %3236 = vrot.lane.b32.xlu0 %v3225, 32
    %v3237 = vpop.permute.xlu0 %3236
    %3238 = vrot.lane.b32.xlu0 %v3226, 32
    %v3239 = vpop.permute.xlu0 %3238
    %3240 = vrot.lane.b32.xlu0 %v3227, 32
    %v3241 = vpop.permute.xlu0 %3240
    %3242 = vrot.lane.b32.xlu0 %v3228, 32
    %v3243 = vpop.permute.xlu0 %3242
    %v3249 = vsel %vm227, %v3194, %v3235
    %v3250 = vsel %vm227, %v3195, %v3237
    %v3251 = vsel %vm227, %v3196, %v3239
    %v3252 = vsel %vm227, %v3197, %v3241
    %v3253 = vsel %vm227, %v3198, %v3243
    %v3255 = vsel %vm363, %v3249, 0
    %v3258 = vsel %vm363, %v3250, 0
    %v3261 = vsel %vm363, %v3251, 0
    %v3264 = vsel %vm363, %v3252, 0
    %v3267 = vsel %vm363, %v3253, 0
    %3269 = vmatpush.msra.mxu0 0.0
    %3270 = vmatpush.msra.mxu0 0.0
    %3271 = vmatpush.msra.mxu0 0.0
    %3272 = vmatpush.msra.mxu0 0.0
    %3273 = vmatpush.msra.mxu0 0.0
    %3274 = vmatpush.msra.mxu0 0.0
    %3275 = vmatpush.msra.mxu0 0.0
    %3276 = vmatpush.msra.mxu0 0.0
    %3277 = vmatpush.msra.mxu0 %v151
    %3278 = vmatpush.msra.mxu0 %v150
    %3279 = vmatpush.msra.mxu0 %v149
    %3280 = vmatpush.msra.mxu0 %v148
    %3281 = vmatpush.msra.mxu0 %v147
    %3282 = vmatpush.msra.mxu0 %v146
    %3283 = vmatpush.msra.mxu0 %v145
    %3284 = vmatpush.msra.mxu0 %v144
    %3285 = vmatmul.f32.gmra.mxu0 %v3255
    %v3286 = vpop.f32.mrf.mxu0
    %v3287 = vadd.f32 0.0, %v3286
    %3288 = vmatmul.f32.gmra.mxu0 %v3258
    %v3289 = vpop.f32.mrf.mxu0
    %v3290 = vadd.f32 0.0, %v3289
    %3291 = vmatmul.f32.gmra.mxu0 %v3261
    %v3292 = vpop.f32.mrf.mxu0
    %v3293 = vadd.f32 0.0, %v3292
    %3294 = vmatmul.f32.gmra.mxu0 %v3264
    %v3295 = vpop.f32.mrf.mxu0
    %v3296 = vadd.f32 0.0, %v3295
    %3297 = vmatmul.f32.gmra.mxu0 %v3267
    %v3298 = vpop.f32.mrf.mxu0
    %v3299 = vadd.f32 0.0, %v3298
    %3300 = vdwg.mxu0
    %3306 = vrot.lane.b32.xlu0 %v3287, 120
    %v3307 = vpop.permute.xlu0 %3306
    %3308 = vrot.lane.b32.xlu0 %v3290, 120
    %v3309 = vpop.permute.xlu0 %3308
    %3310 = vrot.lane.b32.xlu0 %v3293, 120
    %v3311 = vpop.permute.xlu0 %3310
    %3312 = vrot.lane.b32.xlu0 %v3296, 120
    %v3313 = vpop.permute.xlu0 %3312
    %3314 = vrot.lane.b32.xlu0 %v3299, 120
    %v3315 = vpop.permute.xlu0 %3314
    %v3321 = vmax.f32 %v3287, %v3307
    %v3322 = vmax.f32 %v3290, %v3309
    %v3323 = vmax.f32 %v3293, %v3311
    %v3324 = vmax.f32 %v3296, %v3313
    %v3325 = vmax.f32 %v3299, %v3315
    %3331 = vrot.lane.b32.xlu0 %v3321, 8
    %v3332 = vpop.permute.xlu0 %3331
    %3333 = vrot.lane.b32.xlu0 %v3322, 8
    %v3334 = vpop.permute.xlu0 %3333
    %3335 = vrot.lane.b32.xlu0 %v3323, 8
    %v3336 = vpop.permute.xlu0 %3335
    %3337 = vrot.lane.b32.xlu0 %v3324, 8
    %v3338 = vpop.permute.xlu0 %3337
    %3339 = vrot.lane.b32.xlu0 %v3325, 8
    %v3340 = vpop.permute.xlu0 %3339
    %v3346 = vsel %vm456, %v3321, %v3332
    %v3347 = vsel %vm456, %v3322, %v3334
    %v3348 = vsel %vm456, %v3323, %v3336
    %v3349 = vsel %vm456, %v3324, %v3338
    %v3350 = vsel %vm456, %v3325, %v3340
    %v3351 = vsub.f32 %v3287, %v3346
    %v3352 = vsub.f32 %v3290, %v3347
    %v3353 = vsub.f32 %v3293, %v3348
    %v3354 = vsub.f32 %v3296, %v3349
    %v3355 = vsub.f32 %v3299, %v3350
    %v3356 = vmul.f32 %v3351, 1.442695
    %v3357 = vpow.pop %v3356
    %v3358 = vmul.f32 %v3352, 1.442695
    %v3359 = vpow.pop %v3358
    %v3360 = vmul.f32 %v3353, 1.442695
    %v3361 = vpow.pop %v3360
    %v3362 = vmul.f32 %v3354, 1.442695
    %v3363 = vpow.pop %v3362
    %v3364 = vmul.f32 %v3355, 1.442695
    %v3365 = vpow.pop %v3364
    %3371 = vrot.lane.b32.xlu0 %v3357, 120
    %v3372 = vpop.permute.xlu0 %3371
    %3373 = vrot.lane.b32.xlu0 %v3359, 120
    %v3374 = vpop.permute.xlu0 %3373
    %3375 = vrot.lane.b32.xlu0 %v3361, 120
    %v3376 = vpop.permute.xlu0 %3375
    %3377 = vrot.lane.b32.xlu0 %v3363, 120
    %v3378 = vpop.permute.xlu0 %3377
    %3379 = vrot.lane.b32.xlu0 %v3365, 120
    %v3380 = vpop.permute.xlu0 %3379
    %v3386 = vadd.f32 %v3357, %v3372
    %v3387 = vadd.f32 %v3359, %v3374
    %v3388 = vadd.f32 %v3361, %v3376
    %v3389 = vadd.f32 %v3363, %v3378
    %v3390 = vadd.f32 %v3365, %v3380
    %v3391 = vrcp.pop %v3386
    %v3392 = vrcp.pop %v3387
    %v3393 = vrcp.pop %v3388
    %v3394 = vrcp.pop %v3389
    %v3395 = vrcp.pop %v3390
    %v3396 = vsel %vm507, %v3357, 0
    %v3398 = vsel %vm507, %v3359, 0
    %v3400 = vsel %vm507, %v3361, 0
    %v3402 = vsel %vm507, %v3363, 0
    %v3404 = vsel %vm507, %v3365, 0
    %3406 = vmatpush.msra.mxu0 0.0
    %3407 = vmatpush.msra.mxu0 0.0
    %3408 = vmatpush.msra.mxu0 0.0
    %3409 = vmatpush.msra.mxu0 0.0
    %3410 = vmatpush.msra.mxu0 0.0
    %3411 = vmatpush.msra.mxu0 0.0
    %3412 = vmatpush.msra.mxu0 0.0
    %3413 = vmatpush.msra.mxu0 0.0
    %3414 = vmatpush.msra.mxu0 0.0
    %3415 = vmatpush.msra.mxu0 0.0
    %3416 = vmatpush.msra.mxu0 0.0
    %3417 = vmatpush.msra.mxu0 0.0
    %3418 = vmatpush.msra.mxu0 0.0
    %3419 = vmatpush.msra.mxu0 0.0
    %3420 = vmatpush.msra.mxu0 %v153
    %3421 = vmatpush.msra.mxu0 %v152
    %3422 = vmatmul.f32.gmra.mxu0 %v3396
    %v3423 = vpop.f32.mrf.mxu0
    %v3424 = vadd.f32 0.0, %v3423
    %3425 = vmatmul.f32.gmra.mxu0 %v3398
    %v3426 = vpop.f32.mrf.mxu0
    %v3427 = vadd.f32 0.0, %v3426
    %3428 = vmatmul.f32.gmra.mxu0 %v3400
    %v3429 = vpop.f32.mrf.mxu0
    %v3430 = vadd.f32 0.0, %v3429
    %3431 = vmatmul.f32.gmra.mxu0 %v3402
    %v3432 = vpop.f32.mrf.mxu0
    %v3433 = vadd.f32 0.0, %v3432
    %3434 = vmatmul.f32.gmra.mxu0 %v3404
    %v3435 = vpop.f32.mrf.mxu0
    %v3436 = vadd.f32 0.0, %v3435
    %3437 = vdwg.mxu0
    %3438 = vrot.lane.b32.xlu0 %v3154, 64
    %v3439 = vpop.permute.xlu0 %3438
    %3440 = vrot.lane.b32.xlu0 %v3157, 64
    %v3441 = vpop.permute.xlu0 %3440
    %3442 = vrot.lane.b32.xlu0 %v3177, 64
    %v3443 = vpop.permute.xlu0 %3442
    %3444 = vrot.lane.b32.xlu0 %v3173, 64
    %v3445 = vpop.permute.xlu0 %3444
    %3446 = vrot.lane.b32.xlu0 %v3175, 64
    %v3447 = vpop.permute.xlu0 %3446
    %v3453 = vmul.f32 %v3424, %v3439
    %v3454 = vmul.f32 %v3427, %v3441
    %v3455 = vmul.f32 %v3430, %v3443
    %v3456 = vmul.f32 %v3433, %v3445
    %v3457 = vmul.f32 %v3436, %v3447
    %v3458 = vmul.f32 %v3424, %v3210
    %v3459 = vmul.f32 %v3427, %v3212
    %v3460 = vmul.f32 %v3430, %v3214
    %v3461 = vmul.f32 %v3433, %v3216
    %v3462 = vmul.f32 %v3436, %v3218
    %3468 = vrot.lane.b32.xlu0 %v3458, 96
    %v3469 = vpop.permute.xlu0 %3468
    %3470 = vrot.lane.b32.xlu0 %v3459, 96
    %v3471 = vpop.permute.xlu0 %3470
    %3472 = vrot.lane.b32.xlu0 %v3460, 96
    %v3473 = vpop.permute.xlu0 %3472
    %3474 = vrot.lane.b32.xlu0 %v3461, 96
    %v3475 = vpop.permute.xlu0 %3474
    %3476 = vrot.lane.b32.xlu0 %v3462, 96
    %v3477 = vpop.permute.xlu0 %3476
    %v3483 = vadd.f32 %v3453, %v3469
    %v3484 = vadd.f32 %v3454, %v3471
    %v3485 = vadd.f32 %v3455, %v3473
    %v3486 = vadd.f32 %v3456, %v3475
    %v3487 = vadd.f32 %v3457, %v3477
    %v3489 = vsel %vm456, %v3391, 0
    %v3492 = vsel %vm456, %v3392, 0
    %v3495 = vsel %vm456, %v3393, 0
    %v3498 = vsel %vm456, %v3394, 0
    %v3501 = vsel %vm456, %v3395, 0
    %3503 = vmatpush.msra.mxu0 0.0
    %3504 = vmatpush.msra.mxu0 0.0
    %3505 = vmatpush.msra.mxu0 0.0
    %3506 = vmatpush.msra.mxu0 0.0
    %3507 = vmatpush.msra.mxu0 0.0
    %3508 = vmatpush.msra.mxu0 0.0
    %3509 = vmatpush.msra.mxu0 0.0
    %3510 = vmatpush.msra.mxu0 0.0
    %3511 = vmatpush.msra.mxu0 0.0
    %3512 = vmatpush.msra.mxu0 0.0
    %3513 = vmatpush.msra.mxu0 0.0
    %3514 = vmatpush.msra.mxu0 0.0
    %3515 = vmatpush.msra.mxu0 0.0
    %3516 = vmatpush.msra.mxu0 0.0
    %3517 = vmatpush.msra.mxu0 0.0
    %3518 = vmatpush.msra.mxu0 %v154
    %3519 = vmatmul.f32.gmra.mxu0 %v3489
    %v3520 = vpop.f32.mrf.mxu0
    %v3521 = vadd.f32 0.0, %v3520
    %3522 = vmatmul.f32.gmra.mxu0 %v3492
    %v3523 = vpop.f32.mrf.mxu0
    %v3524 = vadd.f32 0.0, %v3523
    %3525 = vmatmul.f32.gmra.mxu0 %v3495
    %v3526 = vpop.f32.mrf.mxu0
    %v3527 = vadd.f32 0.0, %v3526
    %3528 = vmatmul.f32.gmra.mxu0 %v3498
    %v3529 = vpop.f32.mrf.mxu0
    %v3530 = vadd.f32 0.0, %v3529
    %3531 = vmatmul.f32.gmra.mxu0 %v3501
    %v3532 = vpop.f32.mrf.mxu0
    %v3533 = vadd.f32 0.0, %v3532
    %3534 = vdwg.mxu0
    %v3535 = vmul.f32 %v3483, %v3521
    %v3536 = vmul.f32 %v3484, %v3524
    %v3537 = vmul.f32 %v3485, %v3527
    %v3538 = vmul.f32 %v3486, %v3530
    %v3539 = vmul.f32 %v3487, %v3533
    %v3540 = vld [vmem:[%s41] sm:$0xff]
    %v3541 = vld [vmem:[%s41 + $0x8] sm:$0xff]
    %v3542 = vld [vmem:[%s41 + $0x10] sm:$0xff]
    %v3543 = vld [vmem:[%s41 + $0x18] sm:$0xff]
    %v3544 = vld [vmem:[%s43] sm:$0x1]
    %v3546 = vperm.slane %v3544, 0
    %v3549 = vsel %vm227, %v3535, 0
    %v3552 = vsel %vm227, %v3536, 0
    %v3555 = vsel %vm227, %v3537, 0
    %v3558 = vsel %vm227, %v3538, 0
    %v3561 = vsel %vm227, %v3539, 0
    %3563 = vmatpush.msra.mxu0 0.0
    %3564 = vmatpush.msra.mxu0 0.0
    %3565 = vmatpush.msra.mxu0 0.0
    %3566 = vmatpush.msra.mxu0 0.0
    %3567 = vmatpush.msra.mxu0 0.0
    %3568 = vmatpush.msra.mxu0 0.0
    %3569 = vmatpush.msra.mxu0 0.0
    %3570 = vmatpush.msra.mxu0 0.0
    %3571 = vmatpush.msra.mxu0 0.0
    %3572 = vmatpush.msra.mxu0 0.0
    %3573 = vmatpush.msra.mxu0 0.0
    %3574 = vmatpush.msra.mxu0 0.0
    %3575 = vmatpush.msra.mxu0 %v3543
    %3576 = vmatpush.msra.mxu0 %v3542
    %3577 = vmatpush.msra.mxu0 %v3541
    %3578 = vmatpush.msra.mxu0 %v3540
    %3579 = vmatmul.f32.gmra.mxu0 %v3549
    %v3580 = vpop.f32.mrf.mxu0
    %v3581 = vadd.f32 %v3546, %v3580
    %3582 = vmatmul.f32.gmra.mxu0 %v3552
    %v3583 = vpop.f32.mrf.mxu0
    %v3584 = vadd.f32 %v3546, %v3583
    %3585 = vmatmul.f32.gmra.mxu0 %v3555
    %v3586 = vpop.f32.mrf.mxu0
    %v3587 = vadd.f32 %v3546, %v3586
    %3588 = vmatmul.f32.gmra.mxu0 %v3558
    %v3589 = vpop.f32.mrf.mxu0
    %v3590 = vadd.f32 %v3546, %v3589
    %3591 = vmatmul.f32.gmra.mxu0 %v3561
    %v3592 = vpop.f32.mrf.mxu0
    %v3593 = vadd.f32 %v3546, %v3592
    %3594 = vdwg.mxu0
    %v3595 = vadd.f32 %v3108, %v3581
    %v3596 = vadd.f32 %v3109, %v3584
    %v3597 = vadd.f32 %v3110, %v3587
    %v3598 = vadd.f32 %v3111, %v3590
    %v3599 = vadd.f32 %v3112, %v3593
    %v3600 = vld [vmem:[%s45] sm:$0x1]
    %v3601 = vld [vmem:[%s47] sm:$0x1]
    %v3602 = vsel %vm227, %v3595, 0.0
    %3603 = vadd.xlane.f32.xlu0 %v3602
    %v3604 = vpop.xlane.xlu0 %3603
    %v3605 = vsel %vm227, %v3596, 0.0
    %3606 = vadd.xlane.f32.xlu0 %v3605
    %v3607 = vpop.xlane.xlu0 %3606
    %v3608 = vsel %vm227, %v3597, 0.0
    %3609 = vadd.xlane.f32.xlu0 %v3608
    %v3610 = vpop.xlane.xlu0 %3609
    %v3611 = vsel %vm227, %v3598, 0.0
    %3612 = vadd.xlane.f32.xlu0 %v3611
    %v3613 = vpop.xlane.xlu0 %3612
    %v3614 = vsel %vm726, %v3599, 0.0
    %3615 = vadd.xlane.f32.xlu0 %v3614
    %v3616 = vpop.xlane.xlu0 %3615
    %v3617 = vmul.f32 %v3604, %v736
    %v3618 = vmul.f32 %v3607, %v736
    %v3619 = vmul.f32 %v3610, %v736
    %v3620 = vmul.f32 %v3613, %v736
    %v3621 = vmul.f32 %v3616, %v736
    %v3622 = vsub.f32 %v3595, %v3617
    %v3623 = vsub.f32 %v3596, %v3618
    %v3624 = vsub.f32 %v3597, %v3619
    %v3625 = vsub.f32 %v3598, %v3620
    %v3626 = vsub.f32 %v3599, %v3621
    %v3627 = vmul.f32 %v3622, %v3622
    %v3628 = vmul.f32 %v3623, %v3623
    %v3629 = vmul.f32 %v3624, %v3624
    %v3630 = vmul.f32 %v3625, %v3625
    %v3631 = vmul.f32 %v3626, %v3626
    %v3632 = vsel %vm227, %v3627, 0.0
    %3633 = vadd.xlane.f32.xlu0 %v3632
    %v3634 = vpop.xlane.xlu0 %3633
    %v3635 = vsel %vm227, %v3628, 0.0
    %3636 = vadd.xlane.f32.xlu0 %v3635
    %v3637 = vpop.xlane.xlu0 %3636
    %v3638 = vsel %vm227, %v3629, 0.0
    %3639 = vadd.xlane.f32.xlu0 %v3638
    %v3640 = vpop.xlane.xlu0 %3639
    %v3641 = vsel %vm227, %v3630, 0.0
    %3642 = vadd.xlane.f32.xlu0 %v3641
    %v3643 = vpop.xlane.xlu0 %3642
    %v3644 = vsel %vm726, %v3631, 0.0
    %3645 = vadd.xlane.f32.xlu0 %v3644
    %v3646 = vpop.xlane.xlu0 %3645
    %v3647 = vmul.f32 %v3634, %v736
    %v3648 = vmul.f32 %v3637, %v736
    %v3649 = vmul.f32 %v3640, %v736
    %v3650 = vmul.f32 %v3643, %v736
    %v3651 = vmul.f32 %v3646, %v736
    %v3652 = vadd.f32 %v3647, 1e-05
    %v3653 = vadd.f32 %v3648, 1e-05
    %v3654 = vadd.f32 %v3649, 1e-05
    %v3655 = vadd.f32 %v3650, 1e-05
    %v3656 = vadd.f32 %v3651, 1e-05
    %v3657 = vrsqrt.pop %v3652
    %v3658 = vmul.f32 %v3657, %v3652
    %v3659 = vmul.f32 %v3658, %v3657
    %v3660 = vmul.f32 0.5, %v3659
    %v3661 = vsub.f32 1.5, %v3660
    %v3662 = vmul.f32 %v3657, %v3661
    %vm3663 = vweird.f32 %v3652
    %vm3664 = vweird.f32 %v3657
    %vm3665 = vmor %vm3663, %vm3664
    %v3666 = vsel %vm3665, %v3657, %v3662
    %v3667 = vrsqrt.pop %v3653
    %v3668 = vmul.f32 %v3667, %v3653
    %v3669 = vmul.f32 %v3668, %v3667
    %v3670 = vmul.f32 0.5, %v3669
    %v3671 = vsub.f32 1.5, %v3670
    %v3672 = vmul.f32 %v3667, %v3671
    %vm3673 = vweird.f32 %v3653
    %vm3674 = vweird.f32 %v3667
    %vm3675 = vmor %vm3673, %vm3674
    %v3676 = vsel %vm3675, %v3667, %v3672
    %v3677 = vrsqrt.pop %v3654
    %v3678 = vmul.f32 %v3677, %v3654
    %v3679 = vmul.f32 %v3678, %v3677
    %v3680 = vmul.f32 0.5, %v3679
    %v3681 = vsub.f32 1.5, %v3680
    %v3682 = vmul.f32 %v3677, %v3681
    %vm3683 = vweird.f32 %v3654
    %vm3684 = vweird.f32 %v3677
    %vm3685 = vmor %vm3683, %vm3684
    %v3686 = vsel %vm3685, %v3677, %v3682
    %v3687 = vrsqrt.pop %v3655
    %v3688 = vmul.f32 %v3687, %v3655
    %v3689 = vmul.f32 %v3688, %v3687
    %v3690 = vmul.f32 0.5, %v3689
    %v3691 = vsub.f32 1.5, %v3690
    %v3692 = vmul.f32 %v3687, %v3691
    %vm3693 = vweird.f32 %v3655
    %vm3694 = vweird.f32 %v3687
    %vm3695 = vmor %vm3693, %vm3694
    %v3696 = vsel %vm3695, %v3687, %v3692
    %v3697 = vrsqrt.pop %v3656
    %v3698 = vmul.f32 %v3697, %v3656
    %v3699 = vmul.f32 %v3698, %v3697
    %v3700 = vmul.f32 0.5, %v3699
    %v3701 = vsub.f32 1.5, %v3700
    %v3702 = vmul.f32 %v3697, %v3701
    %vm3703 = vweird.f32 %v3656
    %vm3704 = vweird.f32 %v3697
    %vm3705 = vmor %vm3703, %vm3704
    %v3706 = vsel %vm3705, %v3697, %v3702
    %v3707 = vmul.f32 %v3622, %v3666
    %v3708 = vmul.f32 %v3623, %v3676
    %v3709 = vmul.f32 %v3624, %v3686
    %v3710 = vmul.f32 %v3625, %v3696
    %v3711 = vmul.f32 %v3626, %v3706
    %v3713 = vperm.slane %v3600, 0
    %v3715 = vmul.f32 %v3707, %v3713
    %v3716 = vmul.f32 %v3708, %v3713
    %v3717 = vmul.f32 %v3709, %v3713
    %v3718 = vmul.f32 %v3710, %v3713
    %v3719 = vmul.f32 %v3711, %v3713
    %v3721 = vperm.slane %v3601, 0
    %v3723 = vadd.f32 %v3715, %v3721
    %v3724 = vadd.f32 %v3716, %v3721
    %v3725 = vadd.f32 %v3717, %v3721
    %v3726 = vadd.f32 %v3718, %v3721
    %v3727 = vadd.f32 %v3719, %v3721
    %v3728 = vpack.c.bf16 %v3724, %v3723
    %v3729 = vpack.c.bf16 %v3726, %v3725
    %v3730 = vpack.c.bf16 %v3727, %v3727
    %v3731 = vld [vmem:[%s49] sm:$0xff]
    %v3732 = vld [vmem:[%s49 + $0x8] sm:$0xff]
    %v3733 = vld [vmem:[%s49 + $0x10] sm:$0xff]
    %v3734 = vld [vmem:[%s49 + $0x18] sm:$0xff]
    %v3735 = vld [vmem:[%s49 + $0x20] sm:$0xff]
    %v3736 = vld [vmem:[%s49 + $0x28] sm:$0xff]
    %v3737 = vld [vmem:[%s49 + $0x30] sm:$0xff]
    %v3738 = vld [vmem:[%s49 + $0x38] sm:$0xff]
    %v3739 = vld [vmem:[%s49 + $0x40] sm:$0xff]
    %v3740 = vld [vmem:[%s49 + $0x48] sm:$0xff]
    %v3741 = vld [vmem:[%s49 + $0x50] sm:$0xff]
    %v3742 = vld [vmem:[%s49 + $0x58] sm:$0xff]
    %v3743 = vld [vmem:[%s49 + $0x60] sm:$0xff]
    %v3744 = vld [vmem:[%s49 + $0x68] sm:$0xff]
    %v3745 = vld [vmem:[%s49 + $0x70] sm:$0xff]
    %v3746 = vld [vmem:[%s49 + $0x78] sm:$0xff]
    %v3747 = vld [vmem:[%s49 + $0x80] sm:$0xff]
    %v3748 = vld [vmem:[%s49 + $0x88] sm:$0xff]
    %v3749 = vld [vmem:[%s49 + $0x90] sm:$0xff]
    %v3750 = vld [vmem:[%s49 + $0x98] sm:$0xff]
    %v3751 = vld [vmem:[%s49 + $0xa0] sm:$0xff]
    %v3752 = vld [vmem:[%s49 + $0xa8] sm:$0xff]
    %v3753 = vld [vmem:[%s49 + $0xb0] sm:$0xff]
    %v3754 = vld [vmem:[%s49 + $0xb8] sm:$0xff]
    %v3755 = vld [vmem:[%s49 + $0xc0] sm:$0xff]
    %v3756 = vld [vmem:[%s49 + $0xc8] sm:$0xff]
    %v3757 = vld [vmem:[%s49 + $0xd0] sm:$0xff]
    %v3758 = vld [vmem:[%s49 + $0xd8] sm:$0xff]
    %v3759 = vld [vmem:[%s49 + $0xe0] sm:$0xff]
    %v3760 = vld [vmem:[%s49 + $0xe8] sm:$0xff]
    %v3761 = vld [vmem:[%s49 + $0xf0] sm:$0xff]
    %v3762 = vld [vmem:[%s49 + $0xf8] sm:$0xff]
    %v3763 = vld [vmem:[%s51] sm:$0xff]
    %v3764 = vld [vmem:[%s51 + $0x8] sm:$0xff]
    %v3767 = vperm.slane %v3763, 0
    %v3768 = vperm.slane %v3763, 1
    %v3769 = vperm.slane %v3763, 2
    %v3770 = vperm.slane %v3763, 3
    %v3771 = vperm.slane %v3763, 4
    %v3772 = vperm.slane %v3763, 5
    %v3773 = vperm.slane %v3763, 6
    %v3774 = vperm.slane %v3763, 7
    %v3775 = vperm.slane %v3764, 0
    %v3776 = vperm.slane %v3764, 1
    %v3777 = vperm.slane %v3764, 2
    %v3778 = vperm.slane %v3764, 3
    %v3779 = vperm.slane %v3764, 4
    %v3780 = vperm.slane %v3764, 5
    %v3781 = vperm.slane %v3764, 6
    %v3782 = vperm.slane %v3764, 7
    %v3831 = vunpack.c.l.b16 %v3731
    %v3832 = vunpack.c.h.b16 %v3731
    %v3833 = vunpack.c.l.b16 %v3732
    %v3834 = vunpack.c.h.b16 %v3732
    %v3835 = vunpack.c.l.b16 %v3733
    %v3836 = vunpack.c.h.b16 %v3733
    %v3837 = vunpack.c.l.b16 %v3734
    %v3838 = vunpack.c.h.b16 %v3734
    %v3839 = vunpack.c.l.b16 %v3735
    %v3840 = vunpack.c.h.b16 %v3735
    %v3841 = vunpack.c.l.b16 %v3736
    %v3842 = vunpack.c.h.b16 %v3736
    %v3843 = vunpack.c.l.b16 %v3737
    %v3844 = vunpack.c.h.b16 %v3737
    %v3845 = vunpack.c.l.b16 %v3738
    %v3846 = vunpack.c.h.b16 %v3738
    %v3847 = vunpack.c.l.b16 %v3739
    %v3848 = vunpack.c.h.b16 %v3739
    %v3849 = vunpack.c.l.b16 %v3740
    %v3850 = vunpack.c.h.b16 %v3740
    %v3851 = vunpack.c.l.b16 %v3741
    %v3852 = vunpack.c.h.b16 %v3741
    %v3853 = vunpack.c.l.b16 %v3742
    %v3854 = vunpack.c.h.b16 %v3742
    %v3855 = vunpack.c.l.b16 %v3743
    %v3856 = vunpack.c.h.b16 %v3743
    %v3857 = vunpack.c.l.b16 %v3744
    %v3858 = vunpack.c.h.b16 %v3744
    %v3859 = vunpack.c.l.b16 %v3745
    %v3860 = vunpack.c.h.b16 %v3745
    %v3861 = vunpack.c.l.b16 %v3746
    %v3862 = vunpack.c.h.b16 %v3746
    %v3863 = vunpack.c.l.b16 %v3747
    %v3864 = vunpack.c.h.b16 %v3747
    %v3865 = vunpack.c.l.b16 %v3748
    %v3866 = vunpack.c.h.b16 %v3748
    %v3867 = vunpack.c.l.b16 %v3749
    %v3868 = vunpack.c.h.b16 %v3749
    %v3869 = vunpack.c.l.b16 %v3750
    %v3870 = vunpack.c.h.b16 %v3750
    %v3871 = vunpack.c.l.b16 %v3751
    %v3872 = vunpack.c.h.b16 %v3751
    %v3873 = vunpack.c.l.b16 %v3752
    %v3874 = vunpack.c.h.b16 %v3752
    %v3875 = vunpack.c.l.b16 %v3753
    %v3876 = vunpack.c.h.b16 %v3753
    %v3877 = vunpack.c.l.b16 %v3754
    %v3878 = vunpack.c.h.b16 %v3754
    %v3879 = vunpack.c.l.b16 %v3755
    %v3880 = vunpack.c.h.b16 %v3755
    %v3881 = vunpack.c.l.b16 %v3756
    %v3882 = vunpack.c.h.b16 %v3756
    %v3883 = vunpack.c.l.b16 %v3757
    %v3884 = vunpack.c.h.b16 %v3757
    %v3885 = vunpack.c.l.b16 %v3758
    %v3886 = vunpack.c.h.b16 %v3758
    %v3887 = vunpack.c.l.b16 %v3759
    %v3888 = vunpack.c.h.b16 %v3759
    %v3889 = vunpack.c.l.b16 %v3760
    %v3890 = vunpack.c.h.b16 %v3760
    %v3891 = vunpack.c.l.b16 %v3761
    %v3892 = vunpack.c.h.b16 %v3761
    %v3893 = vunpack.c.l.b16 %v3762
    %v3894 = vunpack.c.h.b16 %v3762
    %v3895 = vpack.c.b16 %v3847, %v3831
    %v3896 = vpack.c.b16 %v3848, %v3832
    %v3897 = vpack.c.b16 %v3849, %v3833
    %v3898 = vpack.c.b16 %v3850, %v3834
    %v3899 = vpack.c.b16 %v3851, %v3835
    %v3900 = vpack.c.b16 %v3852, %v3836
    %v3901 = vpack.c.b16 %v3853, %v3837
    %v3902 = vpack.c.b16 %v3854, %v3838
    %v3903 = vpack.c.b16 %v3855, %v3839
    %v3904 = vpack.c.b16 %v3856, %v3840
    %v3905 = vpack.c.b16 %v3857, %v3841
    %v3906 = vpack.c.b16 %v3858, %v3842
    %v3907 = vpack.c.b16 %v3859, %v3843
    %v3908 = vpack.c.b16 %v3860, %v3844
    %v3909 = vpack.c.b16 %v3861, %v3845
    %v3910 = vpack.c.b16 %v3862, %v3846
    %v3911 = vpack.c.b16 %v3879, %v3863
    %v3912 = vpack.c.b16 %v3880, %v3864
    %v3913 = vpack.c.b16 %v3881, %v3865
    %v3914 = vpack.c.b16 %v3882, %v3866
    %v3915 = vpack.c.b16 %v3883, %v3867
    %v3916 = vpack.c.b16 %v3884, %v3868
    %v3917 = vpack.c.b16 %v3885, %v3869
    %v3918 = vpack.c.b16 %v3886, %v3870
    %v3919 = vpack.c.b16 %v3887, %v3871
    %v3920 = vpack.c.b16 %v3888, %v3872
    %v3921 = vpack.c.b16 %v3889, %v3873
    %v3922 = vpack.c.b16 %v3890, %v3874
    %v3923 = vpack.c.b16 %v3891, %v3875
    %v3924 = vpack.c.b16 %v3892, %v3876
    %v3925 = vpack.c.b16 %v3893, %v3877
    %v3926 = vpack.c.b16 %v3894, %v3878
    %v3960 = vsel %vm227, %v3728, 0
    %v3963 = vsel %vm227, %v3729, 0
    %v3966 = vsel %vm227, %v3730, 0
    %3968 = vmatpush.bf16.msra.mxu0 0
    %3969 = vmatpush.bf16.msra.mxu0 0
    %3970 = vmatpush.bf16.msra.mxu0 0
    %3971 = vmatpush.bf16.msra.mxu0 0
    %3972 = vmatpush.bf16.msra.mxu0 0
    %3973 = vmatpush.bf16.msra.mxu0 0
    %3974 = vmatpush.bf16.msra.mxu0 %v3911
    %3975 = vmatpush.bf16.msra.mxu0 %v3895
    %3976 = vmatmul.bf16.gmra.mxu0 %v3960
    %v3977 = vpop.f32.mrf.mxu0
    %v3978 = vadd.f32 %v3767, %v3977
    %v3979 = vpop.f32.mrf.mxu0
    %v3980 = vadd.f32 %v3767, %v3979
    %3981 = vmatmul.bf16.gmra.mxu0 %v3963
    %v3982 = vpop.f32.mrf.mxu0
    %v3983 = vadd.f32 %v3767, %v3982
    %v3984 = vpop.f32.mrf.mxu0
    %v3985 = vadd.f32 %v3767, %v3984
    %3986 = vmatmul.bf16.gmra.mxu0 %v3966
    %v3987 = vpop.f32.mrf.mxu0
    %v3988 = vadd.f32 %v3767, %v3987
    %v3989 = vpop.f32.mrf.mxu0
    %3990 = vdwg.mxu0
    %3991 = vmatpush.bf16.msra.mxu0 0
    %3992 = vmatpush.bf16.msra.mxu0 0
    %3993 = vmatpush.bf16.msra.mxu0 0
    %3994 = vmatpush.bf16.msra.mxu0 0
    %3995 = vmatpush.bf16.msra.mxu0 0
    %3996 = vmatpush.bf16.msra.mxu0 0
    %3997 = vmatpush.bf16.msra.mxu0 %v3912
    %3998 = vmatpush.bf16.msra.mxu0 %v3896
    %3999 = vmatmul.bf16.gmra.mxu0 %v3960
    %v4000 = vpop.f32.mrf.mxu0
    %v4001 = vadd.f32 %v3768, %v4000
    %v4002 = vpop.f32.mrf.mxu0
    %v4003 = vadd.f32 %v3768, %v4002
    %4004 = vmatmul.bf16.gmra.mxu0 %v3963
    %v4005 = vpop.f32.mrf.mxu0
    %v4006 = vadd.f32 %v3768, %v4005
    %v4007 = vpop.f32.mrf.mxu0
    %v4008 = vadd.f32 %v3768, %v4007
    %4009 = vmatmul.bf16.gmra.mxu0 %v3966
    %v4010 = vpop.f32.mrf.mxu0
    %v4011 = vadd.f32 %v3768, %v4010
    %v4012 = vpop.f32.mrf.mxu0
    %4013 = vdwg.mxu0
    %4014 = vmatpush.bf16.msra.mxu0 0
    %4015 = vmatpush.bf16.msra.mxu0 0
    %4016 = vmatpush.bf16.msra.mxu0 0
    %4017 = vmatpush.bf16.msra.mxu0 0
    %4018 = vmatpush.bf16.msra.mxu0 0
    %4019 = vmatpush.bf16.msra.mxu0 0
    %4020 = vmatpush.bf16.msra.mxu0 %v3913
    %4021 = vmatpush.bf16.msra.mxu0 %v3897
    %4022 = vmatmul.bf16.gmra.mxu0 %v3960
    %v4023 = vpop.f32.mrf.mxu0
    %v4024 = vadd.f32 %v3769, %v4023
    %v4025 = vpop.f32.mrf.mxu0
    %v4026 = vadd.f32 %v3769, %v4025
    %4027 = vmatmul.bf16.gmra.mxu0 %v3963
    %v4028 = vpop.f32.mrf.mxu0
    %v4029 = vadd.f32 %v3769, %v4028
    %v4030 = vpop.f32.mrf.mxu0
    %v4031 = vadd.f32 %v3769, %v4030
    %4032 = vmatmul.bf16.gmra.mxu0 %v3966
    %v4033 = vpop.f32.mrf.mxu0
    %v4034 = vadd.f32 %v3769, %v4033
    %v4035 = vpop.f32.mrf.mxu0
    %4036 = vdwg.mxu0
    %4037 = vmatpush.bf16.msra.mxu0 0
    %4038 = vmatpush.bf16.msra.mxu0 0
    %4039 = vmatpush.bf16.msra.mxu0 0
    %4040 = vmatpush.bf16.msra.mxu0 0
    %4041 = vmatpush.bf16.msra.mxu0 0
    %4042 = vmatpush.bf16.msra.mxu0 0
    %4043 = vmatpush.bf16.msra.mxu0 %v3914
    %4044 = vmatpush.bf16.msra.mxu0 %v3898
    %4045 = vmatmul.bf16.gmra.mxu0 %v3960
    %v4046 = vpop.f32.mrf.mxu0
    %v4047 = vadd.f32 %v3770, %v4046
    %v4048 = vpop.f32.mrf.mxu0
    %v4049 = vadd.f32 %v3770, %v4048
    %4050 = vmatmul.bf16.gmra.mxu0 %v3963
    %v4051 = vpop.f32.mrf.mxu0
    %v4052 = vadd.f32 %v3770, %v4051
    %v4053 = vpop.f32.mrf.mxu0
    %v4054 = vadd.f32 %v3770, %v4053
    %4055 = vmatmul.bf16.gmra.mxu0 %v3966
    %v4056 = vpop.f32.mrf.mxu0
    %v4057 = vadd.f32 %v3770, %v4056
    %v4058 = vpop.f32.mrf.mxu0
    %4059 = vdwg.mxu0
    %4060 = vmatpush.bf16.msra.mxu0 0
    %4061 = vmatpush.bf16.msra.mxu0 0
    %4062 = vmatpush.bf16.msra.mxu0 0
    %4063 = vmatpush.bf16.msra.mxu0 0
    %4064 = vmatpush.bf16.msra.mxu0 0
    %4065 = vmatpush.bf16.msra.mxu0 0
    %4066 = vmatpush.bf16.msra.mxu0 %v3915
    %4067 = vmatpush.bf16.msra.mxu0 %v3899
    %4068 = vmatmul.bf16.gmra.mxu0 %v3960
    %v4069 = vpop.f32.mrf.mxu0
    %v4070 = vadd.f32 %v3771, %v4069
    %v4071 = vpop.f32.mrf.mxu0
    %v4072 = vadd.f32 %v3771, %v4071
    %4073 = vmatmul.bf16.gmra.mxu0 %v3963
    %v4074 = vpop.f32.mrf.mxu0
    %v4075 = vadd.f32 %v3771, %v4074
    %v4076 = vpop.f32.mrf.mxu0
    %v4077 = vadd.f32 %v3771, %v4076
    %4078 = vmatmul.bf16.gmra.mxu0 %v3966
    %v4079 = vpop.f32.mrf.mxu0
    %v4080 = vadd.f32 %v3771, %v4079
    %v4081 = vpop.f32.mrf.mxu0
    %4082 = vdwg.mxu0
    %4083 = vmatpush.bf16.msra.mxu0 0
    %4084 = vmatpush.bf16.msra.mxu0 0
    %4085 = vmatpush.bf16.msra.mxu0 0
    %4086 = vmatpush.bf16.msra.mxu0 0
    %4087 = vmatpush.bf16.msra.mxu0 0
    %4088 = vmatpush.bf16.msra.mxu0 0
    %4089 = vmatpush.bf16.msra.mxu0 %v3916
    %4090 = vmatpush.bf16.msra.mxu0 %v3900
    %4091 = vmatmul.bf16.gmra.mxu0 %v3960
    %v4092 = vpop.f32.mrf.mxu0
    %v4093 = vadd.f32 %v3772, %v4092
    %v4094 = vpop.f32.mrf.mxu0
    %v4095 = vadd.f32 %v3772, %v4094
    %4096 = vmatmul.bf16.gmra.mxu0 %v3963
    %v4097 = vpop.f32.mrf.mxu0
    %v4098 = vadd.f32 %v3772, %v4097
    %v4099 = vpop.f32.mrf.mxu0
    %v4100 = vadd.f32 %v3772, %v4099
    %4101 = vmatmul.bf16.gmra.mxu0 %v3966
    %v4102 = vpop.f32.mrf.mxu0
    %v4103 = vadd.f32 %v3772, %v4102
    %v4104 = vpop.f32.mrf.mxu0
    %4105 = vdwg.mxu0
    %4106 = vmatpush.bf16.msra.mxu0 0
    %4107 = vmatpush.bf16.msra.mxu0 0
    %4108 = vmatpush.bf16.msra.mxu0 0
    %4109 = vmatpush.bf16.msra.mxu0 0
    %4110 = vmatpush.bf16.msra.mxu0 0
    %4111 = vmatpush.bf16.msra.mxu0 0
    %4112 = vmatpush.bf16.msra.mxu0 %v3917
    %4113 = vmatpush.bf16.msra.mxu0 %v3901
    %4114 = vmatmul.bf16.gmra.mxu0 %v3960
    %v4115 = vpop.f32.mrf.mxu0
    %v4116 = vadd.f32 %v3773, %v4115
    %v4117 = vpop.f32.mrf.mxu0
    %v4118 = vadd.f32 %v3773, %v4117
    %4119 = vmatmul.bf16.gmra.mxu0 %v3963
    %v4120 = vpop.f32.mrf.mxu0
    %v4121 = vadd.f32 %v3773, %v4120
    %v4122 = vpop.f32.mrf.mxu0
    %v4123 = vadd.f32 %v3773, %v4122
    %4124 = vmatmul.bf16.gmra.mxu0 %v3966
    %v4125 = vpop.f32.mrf.mxu0
    %v4126 = vadd.f32 %v3773, %v4125
    %v4127 = vpop.f32.mrf.mxu0
    %4128 = vdwg.mxu0
    %4129 = vmatpush.bf16.msra.mxu0 0
    %4130 = vmatpush.bf16.msra.mxu0 0
    %4131 = vmatpush.bf16.msra.mxu0 0
    %4132 = vmatpush.bf16.msra.mxu0 0
    %4133 = vmatpush.bf16.msra.mxu0 0
    %4134 = vmatpush.bf16.msra.mxu0 0
    %4135 = vmatpush.bf16.msra.mxu0 %v3918
    %4136 = vmatpush.bf16.msra.mxu0 %v3902
    %4137 = vmatmul.bf16.gmra.mxu0 %v3960
    %v4138 = vpop.f32.mrf.mxu0
    %v4139 = vadd.f32 %v3774, %v4138
    %v4140 = vpop.f32.mrf.mxu0
    %v4141 = vadd.f32 %v3774, %v4140
    %4142 = vmatmul.bf16.gmra.mxu0 %v3963
    %v4143 = vpop.f32.mrf.mxu0
    %v4144 = vadd.f32 %v3774, %v4143
    %v4145 = vpop.f32.mrf.mxu0
    %v4146 = vadd.f32 %v3774, %v4145
    %4147 = vmatmul.bf16.gmra.mxu0 %v3966
    %v4148 = vpop.f32.mrf.mxu0
    %v4149 = vadd.f32 %v3774, %v4148
    %v4150 = vpop.f32.mrf.mxu0
    %4151 = vdwg.mxu0
    %4152 = vmatpush.bf16.msra.mxu0 0
    %4153 = vmatpush.bf16.msra.mxu0 0
    %4154 = vmatpush.bf16.msra.mxu0 0
    %4155 = vmatpush.bf16.msra.mxu0 0
    %4156 = vmatpush.bf16.msra.mxu0 0
    %4157 = vmatpush.bf16.msra.mxu0 0
    %4158 = vmatpush.bf16.msra.mxu0 %v3919
    %4159 = vmatpush.bf16.msra.mxu0 %v3903
    %4160 = vmatmul.bf16.gmra.mxu0 %v3960
    %v4161 = vpop.f32.mrf.mxu0
    %v4162 = vadd.f32 %v3775, %v4161
    %v4163 = vpop.f32.mrf.mxu0
    %v4164 = vadd.f32 %v3775, %v4163
    %4165 = vmatmul.bf16.gmra.mxu0 %v3963
    %v4166 = vpop.f32.mrf.mxu0
    %v4167 = vadd.f32 %v3775, %v4166
    %v4168 = vpop.f32.mrf.mxu0
    %v4169 = vadd.f32 %v3775, %v4168
    %4170 = vmatmul.bf16.gmra.mxu0 %v3966
    %v4171 = vpop.f32.mrf.mxu0
    %v4172 = vadd.f32 %v3775, %v4171
    %v4173 = vpop.f32.mrf.mxu0
    %4174 = vdwg.mxu0
    %4175 = vmatpush.bf16.msra.mxu0 0
    %4176 = vmatpush.bf16.msra.mxu0 0
    %4177 = vmatpush.bf16.msra.mxu0 0
    %4178 = vmatpush.bf16.msra.mxu0 0
    %4179 = vmatpush.bf16.msra.mxu0 0
    %4180 = vmatpush.bf16.msra.mxu0 0
    %4181 = vmatpush.bf16.msra.mxu0 %v3920
    %4182 = vmatpush.bf16.msra.mxu0 %v3904
    %4183 = vmatmul.bf16.gmra.mxu0 %v3960
    %v4184 = vpop.f32.mrf.mxu0
    %v4185 = vadd.f32 %v3776, %v4184
    %v4186 = vpop.f32.mrf.mxu0
    %v4187 = vadd.f32 %v3776, %v4186
    %4188 = vmatmul.bf16.gmra.mxu0 %v3963
    %v4189 = vpop.f32.mrf.mxu0
    %v4190 = vadd.f32 %v3776, %v4189
    %v4191 = vpop.f32.mrf.mxu0
    %v4192 = vadd.f32 %v3776, %v4191
    %4193 = vmatmul.bf16.gmra.mxu0 %v3966
    %v4194 = vpop.f32.mrf.mxu0
    %v4195 = vadd.f32 %v3776, %v4194
    %v4196 = vpop.f32.mrf.mxu0
    %4197 = vdwg.mxu0
    %4198 = vmatpush.bf16.msra.mxu0 0
    %4199 = vmatpush.bf16.msra.mxu0 0
    %4200 = vmatpush.bf16.msra.mxu0 0
    %4201 = vmatpush.bf16.msra.mxu0 0
    %4202 = vmatpush.bf16.msra.mxu0 0
    %4203 = vmatpush.bf16.msra.mxu0 0
    %4204 = vmatpush.bf16.msra.mxu0 %v3921
    %4205 = vmatpush.bf16.msra.mxu0 %v3905
    %4206 = vmatmul.bf16.gmra.mxu0 %v3960
    %v4207 = vpop.f32.mrf.mxu0
    %v4208 = vadd.f32 %v3777, %v4207
    %v4209 = vpop.f32.mrf.mxu0
    %v4210 = vadd.f32 %v3777, %v4209
    %4211 = vmatmul.bf16.gmra.mxu0 %v3963
    %v4212 = vpop.f32.mrf.mxu0
    %v4213 = vadd.f32 %v3777, %v4212
    %v4214 = vpop.f32.mrf.mxu0
    %v4215 = vadd.f32 %v3777, %v4214
    %4216 = vmatmul.bf16.gmra.mxu0 %v3966
    %v4217 = vpop.f32.mrf.mxu0
    %v4218 = vadd.f32 %v3777, %v4217
    %v4219 = vpop.f32.mrf.mxu0
    %4220 = vdwg.mxu0
    %4221 = vmatpush.bf16.msra.mxu0 0
    %4222 = vmatpush.bf16.msra.mxu0 0
    %4223 = vmatpush.bf16.msra.mxu0 0
    %4224 = vmatpush.bf16.msra.mxu0 0
    %4225 = vmatpush.bf16.msra.mxu0 0
    %4226 = vmatpush.bf16.msra.mxu0 0
    %4227 = vmatpush.bf16.msra.mxu0 %v3922
    %4228 = vmatpush.bf16.msra.mxu0 %v3906
    %4229 = vmatmul.bf16.gmra.mxu0 %v3960
    %v4230 = vpop.f32.mrf.mxu0
    %v4231 = vadd.f32 %v3778, %v4230
    %v4232 = vpop.f32.mrf.mxu0
    %v4233 = vadd.f32 %v3778, %v4232
    %4234 = vmatmul.bf16.gmra.mxu0 %v3963
    %v4235 = vpop.f32.mrf.mxu0
    %v4236 = vadd.f32 %v3778, %v4235
    %v4237 = vpop.f32.mrf.mxu0
    %v4238 = vadd.f32 %v3778, %v4237
    %4239 = vmatmul.bf16.gmra.mxu0 %v3966
    %v4240 = vpop.f32.mrf.mxu0
    %v4241 = vadd.f32 %v3778, %v4240
    %v4242 = vpop.f32.mrf.mxu0
    %4243 = vdwg.mxu0
    %4244 = vmatpush.bf16.msra.mxu0 0
    %4245 = vmatpush.bf16.msra.mxu0 0
    %4246 = vmatpush.bf16.msra.mxu0 0
    %4247 = vmatpush.bf16.msra.mxu0 0
    %4248 = vmatpush.bf16.msra.mxu0 0
    %4249 = vmatpush.bf16.msra.mxu0 0
    %4250 = vmatpush.bf16.msra.mxu0 %v3923
    %4251 = vmatpush.bf16.msra.mxu0 %v3907
    %4252 = vmatmul.bf16.gmra.mxu0 %v3960
    %v4253 = vpop.f32.mrf.mxu0
    %v4254 = vadd.f32 %v3779, %v4253
    %v4255 = vpop.f32.mrf.mxu0
    %v4256 = vadd.f32 %v3779, %v4255
    %4257 = vmatmul.bf16.gmra.mxu0 %v3963
    %v4258 = vpop.f32.mrf.mxu0
    %v4259 = vadd.f32 %v3779, %v4258
    %v4260 = vpop.f32.mrf.mxu0
    %v4261 = vadd.f32 %v3779, %v4260
    %4262 = vmatmul.bf16.gmra.mxu0 %v3966
    %v4263 = vpop.f32.mrf.mxu0
    %v4264 = vadd.f32 %v3779, %v4263
    %v4265 = vpop.f32.mrf.mxu0
    %4266 = vdwg.mxu0
    %4267 = vmatpush.bf16.msra.mxu0 0
    %4268 = vmatpush.bf16.msra.mxu0 0
    %4269 = vmatpush.bf16.msra.mxu0 0
    %4270 = vmatpush.bf16.msra.mxu0 0
    %4271 = vmatpush.bf16.msra.mxu0 0
    %4272 = vmatpush.bf16.msra.mxu0 0
    %4273 = vmatpush.bf16.msra.mxu0 %v3924
    %4274 = vmatpush.bf16.msra.mxu0 %v3908
    %4275 = vmatmul.bf16.gmra.mxu0 %v3960
    %v4276 = vpop.f32.mrf.mxu0
    %v4277 = vadd.f32 %v3780, %v4276
    %v4278 = vpop.f32.mrf.mxu0
    %v4279 = vadd.f32 %v3780, %v4278
    %4280 = vmatmul.bf16.gmra.mxu0 %v3963
    %v4281 = vpop.f32.mrf.mxu0
    %v4282 = vadd.f32 %v3780, %v4281
    %v4283 = vpop.f32.mrf.mxu0
    %v4284 = vadd.f32 %v3780, %v4283
    %4285 = vmatmul.bf16.gmra.mxu0 %v3966
    %v4286 = vpop.f32.mrf.mxu0
    %v4287 = vadd.f32 %v3780, %v4286
    %v4288 = vpop.f32.mrf.mxu0
    %4289 = vdwg.mxu0
    %4290 = vmatpush.bf16.msra.mxu0 0
    %4291 = vmatpush.bf16.msra.mxu0 0
    %4292 = vmatpush.bf16.msra.mxu0 0
    %4293 = vmatpush.bf16.msra.mxu0 0
    %4294 = vmatpush.bf16.msra.mxu0 0
    %4295 = vmatpush.bf16.msra.mxu0 0
    %4296 = vmatpush.bf16.msra.mxu0 %v3925
    %4297 = vmatpush.bf16.msra.mxu0 %v3909
    %4298 = vmatmul.bf16.gmra.mxu0 %v3960
    %v4299 = vpop.f32.mrf.mxu0
    %v4300 = vadd.f32 %v3781, %v4299
    %v4301 = vpop.f32.mrf.mxu0
    %v4302 = vadd.f32 %v3781, %v4301
    %4303 = vmatmul.bf16.gmra.mxu0 %v3963
    %v4304 = vpop.f32.mrf.mxu0
    %v4305 = vadd.f32 %v3781, %v4304
    %v4306 = vpop.f32.mrf.mxu0
    %v4307 = vadd.f32 %v3781, %v4306
    %4308 = vmatmul.bf16.gmra.mxu0 %v3966
    %v4309 = vpop.f32.mrf.mxu0
    %v4310 = vadd.f32 %v3781, %v4309
    %v4311 = vpop.f32.mrf.mxu0
    %4312 = vdwg.mxu0
    %4313 = vmatpush.bf16.msra.mxu0 0
    %4314 = vmatpush.bf16.msra.mxu0 0
    %4315 = vmatpush.bf16.msra.mxu0 0
    %4316 = vmatpush.bf16.msra.mxu0 0
    %4317 = vmatpush.bf16.msra.mxu0 0
    %4318 = vmatpush.bf16.msra.mxu0 0
    %4319 = vmatpush.bf16.msra.mxu0 %v3926
    %4320 = vmatpush.bf16.msra.mxu0 %v3910
    %4321 = vmatmul.bf16.gmra.mxu0 %v3960
    %v4322 = vpop.f32.mrf.mxu0
    %v4323 = vadd.f32 %v3782, %v4322
    %v4324 = vpop.f32.mrf.mxu0
    %v4325 = vadd.f32 %v3782, %v4324
    %4326 = vmatmul.bf16.gmra.mxu0 %v3963
    %v4327 = vpop.f32.mrf.mxu0
    %v4328 = vadd.f32 %v3782, %v4327
    %v4329 = vpop.f32.mrf.mxu0
    %v4330 = vadd.f32 %v3782, %v4329
    %4331 = vmatmul.bf16.gmra.mxu0 %v3966
    %v4332 = vpop.f32.mrf.mxu0
    %v4333 = vadd.f32 %v3782, %v4332
    %v4334 = vpop.f32.mrf.mxu0
    %4335 = vdwg.mxu0
    %v4336 = vmax.f32 %v3978, 0.0
    %v4337 = vmax.f32 %v4001, 0.0
    %v4338 = vmax.f32 %v4024, 0.0
    %v4339 = vmax.f32 %v4047, 0.0
    %v4340 = vmax.f32 %v4070, 0.0
    %v4341 = vmax.f32 %v4093, 0.0
    %v4342 = vmax.f32 %v4116, 0.0
    %v4343 = vmax.f32 %v4139, 0.0
    %v4344 = vmax.f32 %v4162, 0.0
    %v4345 = vmax.f32 %v4185, 0.0
    %v4346 = vmax.f32 %v4208, 0.0
    %v4347 = vmax.f32 %v4231, 0.0
    %v4348 = vmax.f32 %v4254, 0.0
    %v4349 = vmax.f32 %v4277, 0.0
    %v4350 = vmax.f32 %v4300, 0.0
    %v4351 = vmax.f32 %v4323, 0.0
    %v4352 = vmax.f32 %v3980, 0.0
    %v4353 = vmax.f32 %v4003, 0.0
    %v4354 = vmax.f32 %v4026, 0.0
    %v4355 = vmax.f32 %v4049, 0.0
    %v4356 = vmax.f32 %v4072, 0.0
    %v4357 = vmax.f32 %v4095, 0.0
    %v4358 = vmax.f32 %v4118, 0.0
    %v4359 = vmax.f32 %v4141, 0.0
    %v4360 = vmax.f32 %v4164, 0.0
    %v4361 = vmax.f32 %v4187, 0.0
    %v4362 = vmax.f32 %v4210, 0.0
    %v4363 = vmax.f32 %v4233, 0.0
    %v4364 = vmax.f32 %v4256, 0.0
    %v4365 = vmax.f32 %v4279, 0.0
    %v4366 = vmax.f32 %v4302, 0.0
    %v4367 = vmax.f32 %v4325, 0.0
    %v4368 = vmax.f32 %v3983, 0.0
    %v4369 = vmax.f32 %v4006, 0.0
    %v4370 = vmax.f32 %v4029, 0.0
    %v4371 = vmax.f32 %v4052, 0.0
    %v4372 = vmax.f32 %v4075, 0.0
    %v4373 = vmax.f32 %v4098, 0.0
    %v4374 = vmax.f32 %v4121, 0.0
    %v4375 = vmax.f32 %v4144, 0.0
    %v4376 = vmax.f32 %v4167, 0.0
    %v4377 = vmax.f32 %v4190, 0.0
    %v4378 = vmax.f32 %v4213, 0.0
    %v4379 = vmax.f32 %v4236, 0.0
    %v4380 = vmax.f32 %v4259, 0.0
    %v4381 = vmax.f32 %v4282, 0.0
    %v4382 = vmax.f32 %v4305, 0.0
    %v4383 = vmax.f32 %v4328, 0.0
    %v4384 = vmax.f32 %v3985, 0.0
    %v4385 = vmax.f32 %v4008, 0.0
    %v4386 = vmax.f32 %v4031, 0.0
    %v4387 = vmax.f32 %v4054, 0.0
    %v4388 = vmax.f32 %v4077, 0.0
    %v4389 = vmax.f32 %v4100, 0.0
    %v4390 = vmax.f32 %v4123, 0.0
    %v4391 = vmax.f32 %v4146, 0.0
    %v4392 = vmax.f32 %v4169, 0.0
    %v4393 = vmax.f32 %v4192, 0.0
    %v4394 = vmax.f32 %v4215, 0.0
    %v4395 = vmax.f32 %v4238, 0.0
    %v4396 = vmax.f32 %v4261, 0.0
    %v4397 = vmax.f32 %v4284, 0.0
    %v4398 = vmax.f32 %v4307, 0.0
    %v4399 = vmax.f32 %v4330, 0.0
    %v4400 = vmax.f32 %v3988, 0.0
    %v4401 = vmax.f32 %v4011, 0.0
    %v4402 = vmax.f32 %v4034, 0.0
    %v4403 = vmax.f32 %v4057, 0.0
    %v4404 = vmax.f32 %v4080, 0.0
    %v4405 = vmax.f32 %v4103, 0.0
    %v4406 = vmax.f32 %v4126, 0.0
    %v4407 = vmax.f32 %v4149, 0.0
    %v4408 = vmax.f32 %v4172, 0.0
    %v4409 = vmax.f32 %v4195, 0.0
    %v4410 = vmax.f32 %v4218, 0.0
    %v4411 = vmax.f32 %v4241, 0.0
    %v4412 = vmax.f32 %v4264, 0.0
    %v4413 = vmax.f32 %v4287, 0.0
    %v4414 = vmax.f32 %v4310, 0.0
    %v4415 = vmax.f32 %v4333, 0.0
    %v4416 = vpack.c.bf16 %v4352, %v4336
    %v4417 = vpack.c.bf16 %v4353, %v4337
    %v4418 = vpack.c.bf16 %v4354, %v4338
    %v4419 = vpack.c.bf16 %v4355, %v4339
    %v4420 = vpack.c.bf16 %v4356, %v4340
    %v4421 = vpack.c.bf16 %v4357, %v4341
    %v4422 = vpack.c.bf16 %v4358, %v4342
    %v4423 = vpack.c.bf16 %v4359, %v4343
    %v4424 = vpack.c.bf16 %v4360, %v4344
    %v4425 = vpack.c.bf16 %v4361, %v4345
    %v4426 = vpack.c.bf16 %v4362, %v4346
    %v4427 = vpack.c.bf16 %v4363, %v4347
    %v4428 = vpack.c.bf16 %v4364, %v4348
    %v4429 = vpack.c.bf16 %v4365, %v4349
    %v4430 = vpack.c.bf16 %v4366, %v4350
    %v4431 = vpack.c.bf16 %v4367, %v4351
    %v4432 = vpack.c.bf16 %v4384, %v4368
    %v4433 = vpack.c.bf16 %v4385, %v4369
    %v4434 = vpack.c.bf16 %v4386, %v4370
    %v4435 = vpack.c.bf16 %v4387, %v4371
    %v4436 = vpack.c.bf16 %v4388, %v4372
    %v4437 = vpack.c.bf16 %v4389, %v4373
    %v4438 = vpack.c.bf16 %v4390, %v4374
    %v4439 = vpack.c.bf16 %v4391, %v4375
    %v4440 = vpack.c.bf16 %v4392, %v4376
    %v4441 = vpack.c.bf16 %v4393, %v4377
    %v4442 = vpack.c.bf16 %v4394, %v4378
    %v4443 = vpack.c.bf16 %v4395, %v4379
    %v4444 = vpack.c.bf16 %v4396, %v4380
    %v4445 = vpack.c.bf16 %v4397, %v4381
    %v4446 = vpack.c.bf16 %v4398, %v4382
    %v4447 = vpack.c.bf16 %v4399, %v4383
    %v4448 = vpack.c.bf16 %v4400, %v4400
    %v4449 = vpack.c.bf16 %v4401, %v4401
    %v4450 = vpack.c.bf16 %v4402, %v4402
    %v4451 = vpack.c.bf16 %v4403, %v4403
    %v4452 = vpack.c.bf16 %v4404, %v4404
    %v4453 = vpack.c.bf16 %v4405, %v4405
    %v4454 = vpack.c.bf16 %v4406, %v4406
    %v4455 = vpack.c.bf16 %v4407, %v4407
    %v4456 = vpack.c.bf16 %v4408, %v4408
    %v4457 = vpack.c.bf16 %v4409, %v4409
    %v4458 = vpack.c.bf16 %v4410, %v4410
    %v4459 = vpack.c.bf16 %v4411, %v4411
    %v4460 = vpack.c.bf16 %v4412, %v4412
    %v4461 = vpack.c.bf16 %v4413, %v4413
    %v4462 = vpack.c.bf16 %v4414, %v4414
    %v4463 = vpack.c.bf16 %v4415, %v4415
    %v4464 = vld [vmem:[%s53] sm:$0xf]
    %v4465 = vld [vmem:[%s53 + $0x4] sm:$0xf]
    %v4466 = vld [vmem:[%s53 + $0x8] sm:$0xf]
    %v4467 = vld [vmem:[%s53 + $0xc] sm:$0xf]
    %v4468 = vld [vmem:[%s53 + $0x10] sm:$0xf]
    %v4469 = vld [vmem:[%s53 + $0x14] sm:$0xf]
    %v4470 = vld [vmem:[%s53 + $0x18] sm:$0xf]
    %v4471 = vld [vmem:[%s53 + $0x1c] sm:$0xf]
    %v4472 = vld [vmem:[%s53 + $0x20] sm:$0xf]
    %v4473 = vld [vmem:[%s53 + $0x24] sm:$0xf]
    %v4474 = vld [vmem:[%s53 + $0x28] sm:$0xf]
    %v4475 = vld [vmem:[%s53 + $0x2c] sm:$0xf]
    %v4476 = vld [vmem:[%s53 + $0x30] sm:$0xf]
    %v4477 = vld [vmem:[%s53 + $0x34] sm:$0xf]
    %v4478 = vld [vmem:[%s53 + $0x38] sm:$0xf]
    %v4479 = vld [vmem:[%s53 + $0x3c] sm:$0xf]
    %v4480 = vld [vmem:[%s53 + $0x40] sm:$0xf]
    %v4481 = vld [vmem:[%s53 + $0x44] sm:$0xf]
    %v4482 = vld [vmem:[%s53 + $0x48] sm:$0xf]
    %v4483 = vld [vmem:[%s53 + $0x4c] sm:$0xf]
    %v4484 = vld [vmem:[%s53 + $0x50] sm:$0xf]
    %v4485 = vld [vmem:[%s53 + $0x54] sm:$0xf]
    %v4486 = vld [vmem:[%s53 + $0x58] sm:$0xf]
    %v4487 = vld [vmem:[%s53 + $0x5c] sm:$0xf]
    %v4488 = vld [vmem:[%s53 + $0x60] sm:$0xf]
    %v4489 = vld [vmem:[%s53 + $0x64] sm:$0xf]
    %v4490 = vld [vmem:[%s53 + $0x68] sm:$0xf]
    %v4491 = vld [vmem:[%s53 + $0x6c] sm:$0xf]
    %v4492 = vld [vmem:[%s53 + $0x70] sm:$0xf]
    %v4493 = vld [vmem:[%s53 + $0x74] sm:$0xf]
    %v4494 = vld [vmem:[%s53 + $0x78] sm:$0xf]
    %v4495 = vld [vmem:[%s53 + $0x7c] sm:$0xf]
    %v4496 = vld [vmem:[%s53 + $0x80] sm:$0xf]
    %v4497 = vld [vmem:[%s53 + $0x84] sm:$0xf]
    %v4498 = vld [vmem:[%s53 + $0x88] sm:$0xf]
    %v4499 = vld [vmem:[%s53 + $0x8c] sm:$0xf]
    %v4500 = vld [vmem:[%s53 + $0x90] sm:$0xf]
    %v4501 = vld [vmem:[%s53 + $0x94] sm:$0xf]
    %v4502 = vld [vmem:[%s53 + $0x98] sm:$0xf]
    %v4503 = vld [vmem:[%s53 + $0x9c] sm:$0xf]
    %v4504 = vld [vmem:[%s53 + $0xa0] sm:$0xf]
    %v4505 = vld [vmem:[%s53 + $0xa4] sm:$0xf]
    %v4506 = vld [vmem:[%s53 + $0xa8] sm:$0xf]
    %v4507 = vld [vmem:[%s53 + $0xac] sm:$0xf]
    %v4508 = vld [vmem:[%s53 + $0xb0] sm:$0xf]
    %v4509 = vld [vmem:[%s53 + $0xb4] sm:$0xf]
    %v4510 = vld [vmem:[%s53 + $0xb8] sm:$0xf]
    %v4511 = vld [vmem:[%s53 + $0xbc] sm:$0xf]
    %v4512 = vld [vmem:[%s53 + $0xc0] sm:$0xf]
    %v4513 = vld [vmem:[%s53 + $0xc4] sm:$0xf]
    %v4514 = vld [vmem:[%s53 + $0xc8] sm:$0xf]
    %v4515 = vld [vmem:[%s53 + $0xcc] sm:$0xf]
    %v4516 = vld [vmem:[%s53 + $0xd0] sm:$0xf]
    %v4517 = vld [vmem:[%s53 + $0xd4] sm:$0xf]
    %v4518 = vld [vmem:[%s53 + $0xd8] sm:$0xf]
    %v4519 = vld [vmem:[%s53 + $0xdc] sm:$0xf]
    %v4520 = vld [vmem:[%s53 + $0xe0] sm:$0xf]
    %v4521 = vld [vmem:[%s53 + $0xe4] sm:$0xf]
    %v4522 = vld [vmem:[%s53 + $0xe8] sm:$0xf]
    %v4523 = vld [vmem:[%s53 + $0xec] sm:$0xf]
    %v4524 = vld [vmem:[%s53 + $0xf0] sm:$0xf]
    %v4525 = vld [vmem:[%s53 + $0xf4] sm:$0xf]
    %v4526 = vld [vmem:[%s53 + $0xf8] sm:$0xf]
    %v4527 = vld [vmem:[%s53 + $0xfc] sm:$0xf]
    %v4528 = vld [vmem:[%s53 + $0x100] sm:$0xf]
    %v4529 = vld [vmem:[%s53 + $0x104] sm:$0xf]
    %v4530 = vld [vmem:[%s53 + $0x108] sm:$0xf]
    %v4531 = vld [vmem:[%s53 + $0x10c] sm:$0xf]
    %v4532 = vld [vmem:[%s53 + $0x110] sm:$0xf]
    %v4533 = vld [vmem:[%s53 + $0x114] sm:$0xf]
    %v4534 = vld [vmem:[%s53 + $0x118] sm:$0xf]
    %v4535 = vld [vmem:[%s53 + $0x11c] sm:$0xf]
    %v4536 = vld [vmem:[%s53 + $0x120] sm:$0xf]
    %v4537 = vld [vmem:[%s53 + $0x124] sm:$0xf]
    %v4538 = vld [vmem:[%s53 + $0x128] sm:$0xf]
    %v4539 = vld [vmem:[%s53 + $0x12c] sm:$0xf]
    %v4540 = vld [vmem:[%s53 + $0x130] sm:$0xf]
    %v4541 = vld [vmem:[%s53 + $0x134] sm:$0xf]
    %v4542 = vld [vmem:[%s53 + $0x138] sm:$0xf]
    %v4543 = vld [vmem:[%s53 + $0x13c] sm:$0xf]
    %v4544 = vld [vmem:[%s53 + $0x140] sm:$0xf]
    %v4545 = vld [vmem:[%s53 + $0x144] sm:$0xf]
    %v4546 = vld [vmem:[%s53 + $0x148] sm:$0xf]
    %v4547 = vld [vmem:[%s53 + $0x14c] sm:$0xf]
    %v4548 = vld [vmem:[%s53 + $0x150] sm:$0xf]
    %v4549 = vld [vmem:[%s53 + $0x154] sm:$0xf]
    %v4550 = vld [vmem:[%s53 + $0x158] sm:$0xf]
    %v4551 = vld [vmem:[%s53 + $0x15c] sm:$0xf]
    %v4552 = vld [vmem:[%s53 + $0x160] sm:$0xf]
    %v4553 = vld [vmem:[%s53 + $0x164] sm:$0xf]
    %v4554 = vld [vmem:[%s53 + $0x168] sm:$0xf]
    %v4555 = vld [vmem:[%s53 + $0x16c] sm:$0xf]
    %v4556 = vld [vmem:[%s53 + $0x170] sm:$0xf]
    %v4557 = vld [vmem:[%s53 + $0x174] sm:$0xf]
    %v4558 = vld [vmem:[%s53 + $0x178] sm:$0xf]
    %v4559 = vld [vmem:[%s53 + $0x17c] sm:$0xf]
    %v4560 = vld [vmem:[%s53 + $0x180] sm:$0xf]
    %v4561 = vld [vmem:[%s53 + $0x184] sm:$0xf]
    %v4562 = vld [vmem:[%s53 + $0x188] sm:$0xf]
    %v4563 = vld [vmem:[%s53 + $0x18c] sm:$0xf]
    %v4564 = vld [vmem:[%s53 + $0x190] sm:$0xf]
    %v4565 = vld [vmem:[%s53 + $0x194] sm:$0xf]
    %v4566 = vld [vmem:[%s53 + $0x198] sm:$0xf]
    %v4567 = vld [vmem:[%s53 + $0x19c] sm:$0xf]
    %v4568 = vld [vmem:[%s53 + $0x1a0] sm:$0xf]
    %v4569 = vld [vmem:[%s53 + $0x1a4] sm:$0xf]
    %v4570 = vld [vmem:[%s53 + $0x1a8] sm:$0xf]
    %v4571 = vld [vmem:[%s53 + $0x1ac] sm:$0xf]
    %v4572 = vld [vmem:[%s53 + $0x1b0] sm:$0xf]
    %v4573 = vld [vmem:[%s53 + $0x1b4] sm:$0xf]
    %v4574 = vld [vmem:[%s53 + $0x1b8] sm:$0xf]
    %v4575 = vld [vmem:[%s53 + $0x1bc] sm:$0xf]
    %v4576 = vld [vmem:[%s53 + $0x1c0] sm:$0xf]
    %v4577 = vld [vmem:[%s53 + $0x1c4] sm:$0xf]
    %v4578 = vld [vmem:[%s53 + $0x1c8] sm:$0xf]
    %v4579 = vld [vmem:[%s53 + $0x1cc] sm:$0xf]
    %v4580 = vld [vmem:[%s53 + $0x1d0] sm:$0xf]
    %v4581 = vld [vmem:[%s53 + $0x1d4] sm:$0xf]
    %v4582 = vld [vmem:[%s53 + $0x1d8] sm:$0xf]
    %v4583 = vld [vmem:[%s53 + $0x1dc] sm:$0xf]
    %v4584 = vld [vmem:[%s53 + $0x1e0] sm:$0xf]
    %v4585 = vld [vmem:[%s53 + $0x1e4] sm:$0xf]
    %v4586 = vld [vmem:[%s53 + $0x1e8] sm:$0xf]
    %v4587 = vld [vmem:[%s53 + $0x1ec] sm:$0xf]
    %v4588 = vld [vmem:[%s53 + $0x1f0] sm:$0xf]
    %v4589 = vld [vmem:[%s53 + $0x1f4] sm:$0xf]
    %v4590 = vld [vmem:[%s53 + $0x1f8] sm:$0xf]
    %v4591 = vld [vmem:[%s53 + $0x1fc] sm:$0xf]
    %v4592 = vld [vmem:[%s53 + $0x200] sm:$0xf]
    %v4593 = vld [vmem:[%s53 + $0x204] sm:$0xf]
    %v4594 = vld [vmem:[%s53 + $0x208] sm:$0xf]
    %v4595 = vld [vmem:[%s53 + $0x20c] sm:$0xf]
    %v4596 = vld [vmem:[%s53 + $0x210] sm:$0xf]
    %v4597 = vld [vmem:[%s53 + $0x214] sm:$0xf]
    %v4598 = vld [vmem:[%s53 + $0x218] sm:$0xf]
    %v4599 = vld [vmem:[%s53 + $0x21c] sm:$0xf]
    %v4600 = vld [vmem:[%s53 + $0x220] sm:$0xf]
    %v4601 = vld [vmem:[%s53 + $0x224] sm:$0xf]
    %v4602 = vld [vmem:[%s53 + $0x228] sm:$0xf]
    %v4603 = vld [vmem:[%s53 + $0x22c] sm:$0xf]
    %v4604 = vld [vmem:[%s53 + $0x230] sm:$0xf]
    %v4605 = vld [vmem:[%s53 + $0x234] sm:$0xf]
    %v4606 = vld [vmem:[%s53 + $0x238] sm:$0xf]
    %v4607 = vld [vmem:[%s53 + $0x23c] sm:$0xf]
    %v4608 = vld [vmem:[%s53 + $0x240] sm:$0xf]
    %v4609 = vld [vmem:[%s53 + $0x244] sm:$0xf]
    %v4610 = vld [vmem:[%s53 + $0x248] sm:$0xf]
    %v4611 = vld [vmem:[%s53 + $0x24c] sm:$0xf]
    %v4612 = vld [vmem:[%s53 + $0x250] sm:$0xf]
    %v4613 = vld [vmem:[%s53 + $0x254] sm:$0xf]
    %v4614 = vld [vmem:[%s53 + $0x258] sm:$0xf]
    %v4615 = vld [vmem:[%s53 + $0x25c] sm:$0xf]
    %v4616 = vld [vmem:[%s53 + $0x260] sm:$0xf]
    %v4617 = vld [vmem:[%s53 + $0x264] sm:$0xf]
    %v4618 = vld [vmem:[%s53 + $0x268] sm:$0xf]
    %v4619 = vld [vmem:[%s53 + $0x26c] sm:$0xf]
    %v4620 = vld [vmem:[%s53 + $0x270] sm:$0xf]
    %v4621 = vld [vmem:[%s53 + $0x274] sm:$0xf]
    %v4622 = vld [vmem:[%s53 + $0x278] sm:$0xf]
    %v4623 = vld [vmem:[%s53 + $0x27c] sm:$0xf]
    %v4624 = vld [vmem:[%s53 + $0x280] sm:$0xf]
    %v4625 = vld [vmem:[%s53 + $0x284] sm:$0xf]
    %v4626 = vld [vmem:[%s53 + $0x288] sm:$0xf]
    %v4627 = vld [vmem:[%s53 + $0x28c] sm:$0xf]
    %v4628 = vld [vmem:[%s53 + $0x290] sm:$0xf]
    %v4629 = vld [vmem:[%s53 + $0x294] sm:$0xf]
    %v4630 = vld [vmem:[%s53 + $0x298] sm:$0xf]
    %v4631 = vld [vmem:[%s53 + $0x29c] sm:$0xf]
    %v4632 = vld [vmem:[%s53 + $0x2a0] sm:$0xf]
    %v4633 = vld [vmem:[%s53 + $0x2a4] sm:$0xf]
    %v4634 = vld [vmem:[%s53 + $0x2a8] sm:$0xf]
    %v4635 = vld [vmem:[%s53 + $0x2ac] sm:$0xf]
    %v4636 = vld [vmem:[%s53 + $0x2b0] sm:$0xf]
    %v4637 = vld [vmem:[%s53 + $0x2b4] sm:$0xf]
    %v4638 = vld [vmem:[%s53 + $0x2b8] sm:$0xf]
    %v4639 = vld [vmem:[%s53 + $0x2bc] sm:$0xf]
    %v4640 = vld [vmem:[%s53 + $0x2c0] sm:$0xf]
    %v4641 = vld [vmem:[%s53 + $0x2c4] sm:$0xf]
    %v4642 = vld [vmem:[%s53 + $0x2c8] sm:$0xf]
    %v4643 = vld [vmem:[%s53 + $0x2cc] sm:$0xf]
    %v4644 = vld [vmem:[%s53 + $0x2d0] sm:$0xf]
    %v4645 = vld [vmem:[%s53 + $0x2d4] sm:$0xf]
    %v4646 = vld [vmem:[%s53 + $0x2d8] sm:$0xf]
    %v4647 = vld [vmem:[%s53 + $0x2dc] sm:$0xf]
    %v4648 = vld [vmem:[%s53 + $0x2e0] sm:$0xf]
    %v4649 = vld [vmem:[%s53 + $0x2e4] sm:$0xf]
    %v4650 = vld [vmem:[%s53 + $0x2e8] sm:$0xf]
    %v4651 = vld [vmem:[%s53 + $0x2ec] sm:$0xf]
    %v4652 = vld [vmem:[%s53 + $0x2f0] sm:$0xf]
    %v4653 = vld [vmem:[%s53 + $0x2f4] sm:$0xf]
    %v4654 = vld [vmem:[%s53 + $0x2f8] sm:$0xf]
    %v4655 = vld [vmem:[%s53 + $0x2fc] sm:$0xf]
    %v4656 = vld [vmem:[%s53 + $0x300] sm:$0xf]
    %v4657 = vld [vmem:[%s53 + $0x304] sm:$0xf]
    %v4658 = vld [vmem:[%s53 + $0x308] sm:$0xf]
    %v4659 = vld [vmem:[%s53 + $0x30c] sm:$0xf]
    %v4660 = vld [vmem:[%s53 + $0x310] sm:$0xf]
    %v4661 = vld [vmem:[%s53 + $0x314] sm:$0xf]
    %v4662 = vld [vmem:[%s53 + $0x318] sm:$0xf]
    %v4663 = vld [vmem:[%s53 + $0x31c] sm:$0xf]
    %v4664 = vld [vmem:[%s53 + $0x320] sm:$0xf]
    %v4665 = vld [vmem:[%s53 + $0x324] sm:$0xf]
    %v4666 = vld [vmem:[%s53 + $0x328] sm:$0xf]
    %v4667 = vld [vmem:[%s53 + $0x32c] sm:$0xf]
    %v4668 = vld [vmem:[%s53 + $0x330] sm:$0xf]
    %v4669 = vld [vmem:[%s53 + $0x334] sm:$0xf]
    %v4670 = vld [vmem:[%s53 + $0x338] sm:$0xf]
    %v4671 = vld [vmem:[%s53 + $0x33c] sm:$0xf]
    %v4672 = vld [vmem:[%s53 + $0x340] sm:$0xf]
    %v4673 = vld [vmem:[%s53 + $0x344] sm:$0xf]
    %v4674 = vld [vmem:[%s53 + $0x348] sm:$0xf]
    %v4675 = vld [vmem:[%s53 + $0x34c] sm:$0xf]
    %v4676 = vld [vmem:[%s53 + $0x350] sm:$0xf]
    %v4677 = vld [vmem:[%s53 + $0x354] sm:$0xf]
    %v4678 = vld [vmem:[%s53 + $0x358] sm:$0xf]
    %v4679 = vld [vmem:[%s53 + $0x35c] sm:$0xf]
    %v4680 = vld [vmem:[%s53 + $0x360] sm:$0xf]
    %v4681 = vld [vmem:[%s53 + $0x364] sm:$0xf]
    %v4682 = vld [vmem:[%s53 + $0x368] sm:$0xf]
    %v4683 = vld [vmem:[%s53 + $0x36c] sm:$0xf]
    %v4684 = vld [vmem:[%s53 + $0x370] sm:$0xf]
    %v4685 = vld [vmem:[%s53 + $0x374] sm:$0xf]
    %v4686 = vld [vmem:[%s53 + $0x378] sm:$0xf]
    %v4687 = vld [vmem:[%s53 + $0x37c] sm:$0xf]
    %v4688 = vld [vmem:[%s53 + $0x380] sm:$0xf]
    %v4689 = vld [vmem:[%s53 + $0x384] sm:$0xf]
    %v4690 = vld [vmem:[%s53 + $0x388] sm:$0xf]
    %v4691 = vld [vmem:[%s53 + $0x38c] sm:$0xf]
    %v4692 = vld [vmem:[%s53 + $0x390] sm:$0xf]
    %v4693 = vld [vmem:[%s53 + $0x394] sm:$0xf]
    %v4694 = vld [vmem:[%s53 + $0x398] sm:$0xf]
    %v4695 = vld [vmem:[%s53 + $0x39c] sm:$0xf]
    %v4696 = vld [vmem:[%s53 + $0x3a0] sm:$0xf]
    %v4697 = vld [vmem:[%s53 + $0x3a4] sm:$0xf]
    %v4698 = vld [vmem:[%s53 + $0x3a8] sm:$0xf]
    %v4699 = vld [vmem:[%s53 + $0x3ac] sm:$0xf]
    %v4700 = vld [vmem:[%s53 + $0x3b0] sm:$0xf]
    %v4701 = vld [vmem:[%s53 + $0x3b4] sm:$0xf]
    %v4702 = vld [vmem:[%s53 + $0x3b8] sm:$0xf]
    %v4703 = vld [vmem:[%s53 + $0x3bc] sm:$0xf]
    %v4704 = vld [vmem:[%s53 + $0x3c0] sm:$0xf]
    %v4705 = vld [vmem:[%s53 + $0x3c4] sm:$0xf]
    %v4706 = vld [vmem:[%s53 + $0x3c8] sm:$0xf]
    %v4707 = vld [vmem:[%s53 + $0x3cc] sm:$0xf]
    %v4708 = vld [vmem:[%s53 + $0x3d0] sm:$0xf]
    %v4709 = vld [vmem:[%s53 + $0x3d4] sm:$0xf]
    %v4710 = vld [vmem:[%s53 + $0x3d8] sm:$0xf]
    %v4711 = vld [vmem:[%s53 + $0x3dc] sm:$0xf]
    %v4712 = vld [vmem:[%s53 + $0x3e0] sm:$0xf]
    %v4713 = vld [vmem:[%s53 + $0x3e4] sm:$0xf]
    %v4714 = vld [vmem:[%s53 + $0x3e8] sm:$0xf]
    %v4715 = vld [vmem:[%s53 + $0x3ec] sm:$0xf]
    %v4716 = vld [vmem:[%s53 + $0x3f0] sm:$0xf]
    %v4717 = vld [vmem:[%s53 + $0x3f4] sm:$0xf]
    %v4718 = vld [vmem:[%s53 + $0x3f8] sm:$0xf]
    %v4719 = vld [vmem:[%s53 + $0x3fc] sm:$0xf]
    %v4720 = vld [vmem:[%s55] sm:$0x1]
    %v4722 = vperm.slane %v4720, 0
    %v4980 = vunpack.c.l.b16 %v4464
    %v4981 = vunpack.c.l.b16 %v4465
    %v4982 = vunpack.c.l.b16 %v4466
    %v4983 = vunpack.c.l.b16 %v4467
    %v4984 = vunpack.c.l.b16 %v4468
    %v4985 = vunpack.c.l.b16 %v4469
    %v4986 = vunpack.c.l.b16 %v4470
    %v4987 = vunpack.c.l.b16 %v4471
    %v4988 = vunpack.c.l.b16 %v4472
    %v4989 = vunpack.c.l.b16 %v4473
    %v4990 = vunpack.c.l.b16 %v4474
    %v4991 = vunpack.c.l.b16 %v4475
    %v4992 = vunpack.c.l.b16 %v4476
    %v4993 = vunpack.c.l.b16 %v4477
    %v4994 = vunpack.c.l.b16 %v4478
    %v4995 = vunpack.c.l.b16 %v4479
    %v4996 = vunpack.c.l.b16 %v4480
    %v4997 = vunpack.c.l.b16 %v4481
    %v4998 = vunpack.c.l.b16 %v4482
    %v4999 = vunpack.c.l.b16 %v4483
    %v5000 = vunpack.c.l.b16 %v4484
    %v5001 = vunpack.c.l.b16 %v4485
    %v5002 = vunpack.c.l.b16 %v4486
    %v5003 = vunpack.c.l.b16 %v4487
    %v5004 = vunpack.c.l.b16 %v4488
    %v5005 = vunpack.c.l.b16 %v4489
    %v5006 = vunpack.c.l.b16 %v4490
    %v5007 = vunpack.c.l.b16 %v4491
    %v5008 = vunpack.c.l.b16 %v4492
    %v5009 = vunpack.c.l.b16 %v4493
    %v5010 = vunpack.c.l.b16 %v4494
    %v5011 = vunpack.c.l.b16 %v4495
    %v5012 = vunpack.c.l.b16 %v4496
    %v5013 = vunpack.c.l.b16 %v4497
    %v5014 = vunpack.c.l.b16 %v4498
    %v5015 = vunpack.c.l.b16 %v4499
    %v5016 = vunpack.c.l.b16 %v4500
    %v5017 = vunpack.c.l.b16 %v4501
    %v5018 = vunpack.c.l.b16 %v4502
    %v5019 = vunpack.c.l.b16 %v4503
    %v5020 = vunpack.c.l.b16 %v4504
    %v5021 = vunpack.c.l.b16 %v4505
    %v5022 = vunpack.c.l.b16 %v4506
    %v5023 = vunpack.c.l.b16 %v4507
    %v5024 = vunpack.c.l.b16 %v4508
    %v5025 = vunpack.c.l.b16 %v4509
    %v5026 = vunpack.c.l.b16 %v4510
    %v5027 = vunpack.c.l.b16 %v4511
    %v5028 = vunpack.c.l.b16 %v4512
    %v5029 = vunpack.c.l.b16 %v4513
    %v5030 = vunpack.c.l.b16 %v4514
    %v5031 = vunpack.c.l.b16 %v4515
    %v5032 = vunpack.c.l.b16 %v4516
    %v5033 = vunpack.c.l.b16 %v4517
    %v5034 = vunpack.c.l.b16 %v4518
    %v5035 = vunpack.c.l.b16 %v4519
    %v5036 = vunpack.c.l.b16 %v4520
    %v5037 = vunpack.c.l.b16 %v4521
    %v5038 = vunpack.c.l.b16 %v4522
    %v5039 = vunpack.c.l.b16 %v4523
    %v5040 = vunpack.c.l.b16 %v4524
    %v5041 = vunpack.c.l.b16 %v4525
    %v5042 = vunpack.c.l.b16 %v4526
    %v5043 = vunpack.c.l.b16 %v4527
    %v5044 = vunpack.c.l.b16 %v4528
    %v5045 = vunpack.c.l.b16 %v4529
    %v5046 = vunpack.c.l.b16 %v4530
    %v5047 = vunpack.c.l.b16 %v4531
    %v5048 = vunpack.c.l.b16 %v4532
    %v5049 = vunpack.c.l.b16 %v4533
    %v5050 = vunpack.c.l.b16 %v4534
    %v5051 = vunpack.c.l.b16 %v4535
    %v5052 = vunpack.c.l.b16 %v4536
    %v5053 = vunpack.c.l.b16 %v4537
    %v5054 = vunpack.c.l.b16 %v4538
    %v5055 = vunpack.c.l.b16 %v4539
    %v5056 = vunpack.c.l.b16 %v4540
    %v5057 = vunpack.c.l.b16 %v4541
    %v5058 = vunpack.c.l.b16 %v4542
    %v5059 = vunpack.c.l.b16 %v4543
    %v5060 = vunpack.c.l.b16 %v4544
    %v5061 = vunpack.c.l.b16 %v4545
    %v5062 = vunpack.c.l.b16 %v4546
    %v5063 = vunpack.c.l.b16 %v4547
    %v5064 = vunpack.c.l.b16 %v4548
    %v5065 = vunpack.c.l.b16 %v4549
    %v5066 = vunpack.c.l.b16 %v4550
    %v5067 = vunpack.c.l.b16 %v4551
    %v5068 = vunpack.c.l.b16 %v4552
    %v5069 = vunpack.c.l.b16 %v4553
    %v5070 = vunpack.c.l.b16 %v4554
    %v5071 = vunpack.c.l.b16 %v4555
    %v5072 = vunpack.c.l.b16 %v4556
    %v5073 = vunpack.c.l.b16 %v4557
    %v5074 = vunpack.c.l.b16 %v4558
    %v5075 = vunpack.c.l.b16 %v4559
    %v5076 = vunpack.c.l.b16 %v4560
    %v5077 = vunpack.c.l.b16 %v4561
    %v5078 = vunpack.c.l.b16 %v4562
    %v5079 = vunpack.c.l.b16 %v4563
    %v5080 = vunpack.c.l.b16 %v4564
    %v5081 = vunpack.c.l.b16 %v4565
    %v5082 = vunpack.c.l.b16 %v4566
    %v5083 = vunpack.c.l.b16 %v4567
    %v5084 = vunpack.c.l.b16 %v4568
    %v5085 = vunpack.c.l.b16 %v4569
    %v5086 = vunpack.c.l.b16 %v4570
    %v5087 = vunpack.c.l.b16 %v4571
    %v5088 = vunpack.c.l.b16 %v4572
    %v5089 = vunpack.c.l.b16 %v4573
    %v5090 = vunpack.c.l.b16 %v4574
    %v5091 = vunpack.c.l.b16 %v4575
    %v5092 = vunpack.c.l.b16 %v4576
    %v5093 = vunpack.c.l.b16 %v4577
    %v5094 = vunpack.c.l.b16 %v4578
    %v5095 = vunpack.c.l.b16 %v4579
    %v5096 = vunpack.c.l.b16 %v4580
    %v5097 = vunpack.c.l.b16 %v4581
    %v5098 = vunpack.c.l.b16 %v4582
    %v5099 = vunpack.c.l.b16 %v4583
    %v5100 = vunpack.c.l.b16 %v4584
    %v5101 = vunpack.c.l.b16 %v4585
    %v5102 = vunpack.c.l.b16 %v4586
    %v5103 = vunpack.c.l.b16 %v4587
    %v5104 = vunpack.c.l.b16 %v4588
    %v5105 = vunpack.c.l.b16 %v4589
    %v5106 = vunpack.c.l.b16 %v4590
    %v5107 = vunpack.c.l.b16 %v4591
    %v5108 = vunpack.c.l.b16 %v4592
    %v5109 = vunpack.c.l.b16 %v4593
    %v5110 = vunpack.c.l.b16 %v4594
    %v5111 = vunpack.c.l.b16 %v4595
    %v5112 = vunpack.c.l.b16 %v4596
    %v5113 = vunpack.c.l.b16 %v4597
    %v5114 = vunpack.c.l.b16 %v4598
    %v5115 = vunpack.c.l.b16 %v4599
    %v5116 = vunpack.c.l.b16 %v4600
    %v5117 = vunpack.c.l.b16 %v4601
    %v5118 = vunpack.c.l.b16 %v4602
    %v5119 = vunpack.c.l.b16 %v4603
    %v5120 = vunpack.c.l.b16 %v4604
    %v5121 = vunpack.c.l.b16 %v4605
    %v5122 = vunpack.c.l.b16 %v4606
    %v5123 = vunpack.c.l.b16 %v4607
    %v5124 = vunpack.c.l.b16 %v4608
    %v5125 = vunpack.c.l.b16 %v4609
    %v5126 = vunpack.c.l.b16 %v4610
    %v5127 = vunpack.c.l.b16 %v4611
    %v5128 = vunpack.c.l.b16 %v4612
    %v5129 = vunpack.c.l.b16 %v4613
    %v5130 = vunpack.c.l.b16 %v4614
    %v5131 = vunpack.c.l.b16 %v4615
    %v5132 = vunpack.c.l.b16 %v4616
    %v5133 = vunpack.c.l.b16 %v4617
    %v5134 = vunpack.c.l.b16 %v4618
    %v5135 = vunpack.c.l.b16 %v4619
    %v5136 = vunpack.c.l.b16 %v4620
    %v5137 = vunpack.c.l.b16 %v4621
    %v5138 = vunpack.c.l.b16 %v4622
    %v5139 = vunpack.c.l.b16 %v4623
    %v5140 = vunpack.c.l.b16 %v4624
    %v5141 = vunpack.c.l.b16 %v4625
    %v5142 = vunpack.c.l.b16 %v4626
    %v5143 = vunpack.c.l.b16 %v4627
    %v5144 = vunpack.c.l.b16 %v4628
    %v5145 = vunpack.c.l.b16 %v4629
    %v5146 = vunpack.c.l.b16 %v4630
    %v5147 = vunpack.c.l.b16 %v4631
    %v5148 = vunpack.c.l.b16 %v4632
    %v5149 = vunpack.c.l.b16 %v4633
    %v5150 = vunpack.c.l.b16 %v4634
    %v5151 = vunpack.c.l.b16 %v4635
    %v5152 = vunpack.c.l.b16 %v4636
    %v5153 = vunpack.c.l.b16 %v4637
    %v5154 = vunpack.c.l.b16 %v4638
    %v5155 = vunpack.c.l.b16 %v4639
    %v5156 = vunpack.c.l.b16 %v4640
    %v5157 = vunpack.c.l.b16 %v4641
    %v5158 = vunpack.c.l.b16 %v4642
    %v5159 = vunpack.c.l.b16 %v4643
    %v5160 = vunpack.c.l.b16 %v4644
    %v5161 = vunpack.c.l.b16 %v4645
    %v5162 = vunpack.c.l.b16 %v4646
    %v5163 = vunpack.c.l.b16 %v4647
    %v5164 = vunpack.c.l.b16 %v4648
    %v5165 = vunpack.c.l.b16 %v4649
    %v5166 = vunpack.c.l.b16 %v4650
    %v5167 = vunpack.c.l.b16 %v4651
    %v5168 = vunpack.c.l.b16 %v4652
    %v5169 = vunpack.c.l.b16 %v4653
    %v5170 = vunpack.c.l.b16 %v4654
    %v5171 = vunpack.c.l.b16 %v4655
    %v5172 = vunpack.c.l.b16 %v4656
    %v5173 = vunpack.c.l.b16 %v4657
    %v5174 = vunpack.c.l.b16 %v4658
    %v5175 = vunpack.c.l.b16 %v4659
    %v5176 = vunpack.c.l.b16 %v4660
    %v5177 = vunpack.c.l.b16 %v4661
    %v5178 = vunpack.c.l.b16 %v4662
    %v5179 = vunpack.c.l.b16 %v4663
    %v5180 = vunpack.c.l.b16 %v4664
    %v5181 = vunpack.c.l.b16 %v4665
    %v5182 = vunpack.c.l.b16 %v4666
    %v5183 = vunpack.c.l.b16 %v4667
    %v5184 = vunpack.c.l.b16 %v4668
    %v5185 = vunpack.c.l.b16 %v4669
    %v5186 = vunpack.c.l.b16 %v4670
    %v5187 = vunpack.c.l.b16 %v4671
    %v5188 = vunpack.c.l.b16 %v4672
    %v5189 = vunpack.c.l.b16 %v4673
    %v5190 = vunpack.c.l.b16 %v4674
    %v5191 = vunpack.c.l.b16 %v4675
    %v5192 = vunpack.c.l.b16 %v4676
    %v5193 = vunpack.c.l.b16 %v4677
    %v5194 = vunpack.c.l.b16 %v4678
    %v5195 = vunpack.c.l.b16 %v4679
    %v5196 = vunpack.c.l.b16 %v4680
    %v5197 = vunpack.c.l.b16 %v4681
    %v5198 = vunpack.c.l.b16 %v4682
    %v5199 = vunpack.c.l.b16 %v4683
    %v5200 = vunpack.c.l.b16 %v4684
    %v5201 = vunpack.c.l.b16 %v4685
    %v5202 = vunpack.c.l.b16 %v4686
    %v5203 = vunpack.c.l.b16 %v4687
    %v5204 = vunpack.c.l.b16 %v4688
    %v5205 = vunpack.c.l.b16 %v4689
    %v5206 = vunpack.c.l.b16 %v4690
    %v5207 = vunpack.c.l.b16 %v4691
    %v5208 = vunpack.c.l.b16 %v4692
    %v5209 = vunpack.c.l.b16 %v4693
    %v5210 = vunpack.c.l.b16 %v4694
    %v5211 = vunpack.c.l.b16 %v4695
    %v5212 = vunpack.c.l.b16 %v4696
    %v5213 = vunpack.c.l.b16 %v4697
    %v5214 = vunpack.c.l.b16 %v4698
    %v5215 = vunpack.c.l.b16 %v4699
    %v5216 = vunpack.c.l.b16 %v4700
    %v5217 = vunpack.c.l.b16 %v4701
    %v5218 = vunpack.c.l.b16 %v4702
    %v5219 = vunpack.c.l.b16 %v4703
    %v5220 = vunpack.c.l.b16 %v4704
    %v5221 = vunpack.c.l.b16 %v4705
    %v5222 = vunpack.c.l.b16 %v4706
    %v5223 = vunpack.c.l.b16 %v4707
    %v5224 = vunpack.c.l.b16 %v4708
    %v5225 = vunpack.c.l.b16 %v4709
    %v5226 = vunpack.c.l.b16 %v4710
    %v5227 = vunpack.c.l.b16 %v4711
    %v5228 = vunpack.c.l.b16 %v4712
    %v5229 = vunpack.c.l.b16 %v4713
    %v5230 = vunpack.c.l.b16 %v4714
    %v5231 = vunpack.c.l.b16 %v4715
    %v5232 = vunpack.c.l.b16 %v4716
    %v5233 = vunpack.c.l.b16 %v4717
    %v5234 = vunpack.c.l.b16 %v4718
    %v5235 = vunpack.c.l.b16 %v4719
    %v5236 = vpack.c.b16 %v4981, %v4980
    %v5237 = vpack.c.b16 %v4983, %v4982
    %v5238 = vpack.c.b16 %v4985, %v4984
    %v5239 = vpack.c.b16 %v4987, %v4986
    %v5240 = vpack.c.b16 %v4989, %v4988
    %v5241 = vpack.c.b16 %v4991, %v4990
    %v5242 = vpack.c.b16 %v4993, %v4992
    %v5243 = vpack.c.b16 %v4995, %v4994
    %v5244 = vpack.c.b16 %v4997, %v4996
    %v5245 = vpack.c.b16 %v4999, %v4998
    %v5246 = vpack.c.b16 %v5001, %v5000
    %v5247 = vpack.c.b16 %v5003, %v5002
    %v5248 = vpack.c.b16 %v5005, %v5004
    %v5249 = vpack.c.b16 %v5007, %v5006
    %v5250 = vpack.c.b16 %v5009, %v5008
    %v5251 = vpack.c.b16 %v5011, %v5010
    %v5252 = vpack.c.b16 %v5013, %v5012
    %v5253 = vpack.c.b16 %v5015, %v5014
    %v5254 = vpack.c.b16 %v5017, %v5016
    %v5255 = vpack.c.b16 %v5019, %v5018
    %v5256 = vpack.c.b16 %v5021, %v5020
    %v5257 = vpack.c.b16 %v5023, %v5022
    %v5258 = vpack.c.b16 %v5025, %v5024
    %v5259 = vpack.c.b16 %v5027, %v5026
    %v5260 = vpack.c.b16 %v5029, %v5028
    %v5261 = vpack.c.b16 %v5031, %v5030
    %v5262 = vpack.c.b16 %v5033, %v5032
    %v5263 = vpack.c.b16 %v5035, %v5034
    %v5264 = vpack.c.b16 %v5037, %v5036
    %v5265 = vpack.c.b16 %v5039, %v5038
    %v5266 = vpack.c.b16 %v5041, %v5040
    %v5267 = vpack.c.b16 %v5043, %v5042
    %v5268 = vpack.c.b16 %v5045, %v5044
    %v5269 = vpack.c.b16 %v5047, %v5046
    %v5270 = vpack.c.b16 %v5049, %v5048
    %v5271 = vpack.c.b16 %v5051, %v5050
    %v5272 = vpack.c.b16 %v5053, %v5052
    %v5273 = vpack.c.b16 %v5055, %v5054
    %v5274 = vpack.c.b16 %v5057, %v5056
    %v5275 = vpack.c.b16 %v5059, %v5058
    %v5276 = vpack.c.b16 %v5061, %v5060
    %v5277 = vpack.c.b16 %v5063, %v5062
    %v5278 = vpack.c.b16 %v5065, %v5064
    %v5279 = vpack.c.b16 %v5067, %v5066
    %v5280 = vpack.c.b16 %v5069, %v5068
    %v5281 = vpack.c.b16 %v5071, %v5070
    %v5282 = vpack.c.b16 %v5073, %v5072
    %v5283 = vpack.c.b16 %v5075, %v5074
    %v5284 = vpack.c.b16 %v5077, %v5076
    %v5285 = vpack.c.b16 %v5079, %v5078
    %v5286 = vpack.c.b16 %v5081, %v5080
    %v5287 = vpack.c.b16 %v5083, %v5082
    %v5288 = vpack.c.b16 %v5085, %v5084
    %v5289 = vpack.c.b16 %v5087, %v5086
    %v5290 = vpack.c.b16 %v5089, %v5088
    %v5291 = vpack.c.b16 %v5091, %v5090
    %v5292 = vpack.c.b16 %v5093, %v5092
    %v5293 = vpack.c.b16 %v5095, %v5094
    %v5294 = vpack.c.b16 %v5097, %v5096
    %v5295 = vpack.c.b16 %v5099, %v5098
    %v5296 = vpack.c.b16 %v5101, %v5100
    %v5297 = vpack.c.b16 %v5103, %v5102
    %v5298 = vpack.c.b16 %v5105, %v5104
    %v5299 = vpack.c.b16 %v5107, %v5106
    %v5300 = vpack.c.b16 %v5109, %v5108
    %v5301 = vpack.c.b16 %v5111, %v5110
    %v5302 = vpack.c.b16 %v5113, %v5112
    %v5303 = vpack.c.b16 %v5115, %v5114
    %v5304 = vpack.c.b16 %v5117, %v5116
    %v5305 = vpack.c.b16 %v5119, %v5118
    %v5306 = vpack.c.b16 %v5121, %v5120
    %v5307 = vpack.c.b16 %v5123, %v5122
    %v5308 = vpack.c.b16 %v5125, %v5124
    %v5309 = vpack.c.b16 %v5127, %v5126
    %v5310 = vpack.c.b16 %v5129, %v5128
    %v5311 = vpack.c.b16 %v5131, %v5130
    %v5312 = vpack.c.b16 %v5133, %v5132
    %v5313 = vpack.c.b16 %v5135, %v5134
    %v5314 = vpack.c.b16 %v5137, %v5136
    %v5315 = vpack.c.b16 %v5139, %v5138
    %v5316 = vpack.c.b16 %v5141, %v5140
    %v5317 = vpack.c.b16 %v5143, %v5142
    %v5318 = vpack.c.b16 %v5145, %v5144
    %v5319 = vpack.c.b16 %v5147, %v5146
    %v5320 = vpack.c.b16 %v5149, %v5148
    %v5321 = vpack.c.b16 %v5151, %v5150
    %v5322 = vpack.c.b16 %v5153, %v5152
    %v5323 = vpack.c.b16 %v5155, %v5154
    %v5324 = vpack.c.b16 %v5157, %v5156
    %v5325 = vpack.c.b16 %v5159, %v5158
    %v5326 = vpack.c.b16 %v5161, %v5160
    %v5327 = vpack.c.b16 %v5163, %v5162
    %v5328 = vpack.c.b16 %v5165, %v5164
    %v5329 = vpack.c.b16 %v5167, %v5166
    %v5330 = vpack.c.b16 %v5169, %v5168
    %v5331 = vpack.c.b16 %v5171, %v5170
    %v5332 = vpack.c.b16 %v5173, %v5172
    %v5333 = vpack.c.b16 %v5175, %v5174
    %v5334 = vpack.c.b16 %v5177, %v5176
    %v5335 = vpack.c.b16 %v5179, %v5178
    %v5336 = vpack.c.b16 %v5181, %v5180
    %v5337 = vpack.c.b16 %v5183, %v5182
    %v5338 = vpack.c.b16 %v5185, %v5184
    %v5339 = vpack.c.b16 %v5187, %v5186
    %v5340 = vpack.c.b16 %v5189, %v5188
    %v5341 = vpack.c.b16 %v5191, %v5190
    %v5342 = vpack.c.b16 %v5193, %v5192
    %v5343 = vpack.c.b16 %v5195, %v5194
    %v5344 = vpack.c.b16 %v5197, %v5196
    %v5345 = vpack.c.b16 %v5199, %v5198
    %v5346 = vpack.c.b16 %v5201, %v5200
    %v5347 = vpack.c.b16 %v5203, %v5202
    %v5348 = vpack.c.b16 %v5205, %v5204
    %v5349 = vpack.c.b16 %v5207, %v5206
    %v5350 = vpack.c.b16 %v5209, %v5208
    %v5351 = vpack.c.b16 %v5211, %v5210
    %v5352 = vpack.c.b16 %v5213, %v5212
    %v5353 = vpack.c.b16 %v5215, %v5214
    %v5354 = vpack.c.b16 %v5217, %v5216
    %v5355 = vpack.c.b16 %v5219, %v5218
    %v5356 = vpack.c.b16 %v5221, %v5220
    %v5357 = vpack.c.b16 %v5223, %v5222
    %v5358 = vpack.c.b16 %v5225, %v5224
    %v5359 = vpack.c.b16 %v5227, %v5226
    %v5360 = vpack.c.b16 %v5229, %v5228
    %v5361 = vpack.c.b16 %v5231, %v5230
    %v5362 = vpack.c.b16 %v5233, %v5232
    %v5363 = vpack.c.b16 %v5235, %v5234
    %5492 = vmatpush.bf16.msra.mxu0 %v5243
    %5493 = vmatpush.bf16.msra.mxu0 %v5242
    %5494 = vmatpush.bf16.msra.mxu0 %v5241
    %5495 = vmatpush.bf16.msra.mxu0 %v5240
    %5496 = vmatpush.bf16.msra.mxu0 %v5239
    %5497 = vmatpush.bf16.msra.mxu0 %v5238
    %5498 = vmatpush.bf16.msra.mxu0 %v5237
    %5499 = vmatpush.bf16.msra.mxu0 %v5236
    %5500 = vmatmul.bf16.gmra.mxu0 %v4416
    %v5501 = vpop.f32.mrf.mxu0
    %v5502 = vadd.f32 %v4722, %v5501
    %v5503 = vpop.f32.mrf.mxu0
    %5504 = vmatmul.bf16.gmra.mxu0 %v4432
    %v5505 = vpop.f32.mrf.mxu0
    %v5506 = vadd.f32 %v4722, %v5505
    %v5507 = vpop.f32.mrf.mxu0
    %5508 = vmatmul.bf16.gmra.mxu0 %v4448
    %v5509 = vpop.f32.mrf.mxu0
    %v5510 = vpop.f32.mrf.mxu0
    %5511 = vdwg.mxu0
    %5512 = vmatpush.bf16.msra.mxu0 %v5251
    %5513 = vmatpush.bf16.msra.mxu0 %v5250
    %5514 = vmatpush.bf16.msra.mxu0 %v5249
    %5515 = vmatpush.bf16.msra.mxu0 %v5248
    %5516 = vmatpush.bf16.msra.mxu0 %v5247
    %5517 = vmatpush.bf16.msra.mxu0 %v5246
    %5518 = vmatpush.bf16.msra.mxu0 %v5245
    %5519 = vmatpush.bf16.msra.mxu0 %v5244
    %5520 = vmatmul.bf16.gmra.mxu0 %v4417
    %v5521 = vpop.f32.mrf.mxu0
    %v5522 = vadd.f32 %v5502, %v5521
    %v5523 = vpop.f32.mrf.mxu0
    %5524 = vmatmul.bf16.gmra.mxu0 %v4433
    %v5525 = vpop.f32.mrf.mxu0
    %v5526 = vadd.f32 %v5506, %v5525
    %v5527 = vpop.f32.mrf.mxu0
    %5528 = vmatmul.bf16.gmra.mxu0 %v4449
    %v5529 = vpop.f32.mrf.mxu0
    %v5530 = vpop.f32.mrf.mxu0
    %5531 = vdwg.mxu0
    %5532 = vmatpush.bf16.msra.mxu0 %v5259
    %5533 = vmatpush.bf16.msra.mxu0 %v5258
    %5534 = vmatpush.bf16.msra.mxu0 %v5257
    %5535 = vmatpush.bf16.msra.mxu0 %v5256
    %5536 = vmatpush.bf16.msra.mxu0 %v5255
    %5537 = vmatpush.bf16.msra.mxu0 %v5254
    %5538 = vmatpush.bf16.msra.mxu0 %v5253
    %5539 = vmatpush.bf16.msra.mxu0 %v5252
    %5540 = vmatmul.bf16.gmra.mxu0 %v4418
    %v5541 = vpop.f32.mrf.mxu0
    %v5542 = vadd.f32 %v5522, %v5541
    %v5543 = vpop.f32.mrf.mxu0
    %5544 = vmatmul.bf16.gmra.mxu0 %v4434
    %v5545 = vpop.f32.mrf.mxu0
    %v5546 = vadd.f32 %v5526, %v5545
    %v5547 = vpop.f32.mrf.mxu0
    %5548 = vmatmul.bf16.gmra.mxu0 %v4450
    %v5549 = vpop.f32.mrf.mxu0
    %v5550 = vpop.f32.mrf.mxu0
    %5551 = vdwg.mxu0
    %5552 = vmatpush.bf16.msra.mxu0 %v5267
    %5553 = vmatpush.bf16.msra.mxu0 %v5266
    %5554 = vmatpush.bf16.msra.mxu0 %v5265
    %5555 = vmatpush.bf16.msra.mxu0 %v5264
    %5556 = vmatpush.bf16.msra.mxu0 %v5263
    %5557 = vmatpush.bf16.msra.mxu0 %v5262
    %5558 = vmatpush.bf16.msra.mxu0 %v5261
    %5559 = vmatpush.bf16.msra.mxu0 %v5260
    %5560 = vmatmul.bf16.gmra.mxu0 %v4419
    %v5561 = vpop.f32.mrf.mxu0
    %v5562 = vadd.f32 %v5542, %v5561
    %v5563 = vpop.f32.mrf.mxu0
    %5564 = vmatmul.bf16.gmra.mxu0 %v4435
    %v5565 = vpop.f32.mrf.mxu0
    %v5566 = vadd.f32 %v5546, %v5565
    %v5567 = vpop.f32.mrf.mxu0
    %5568 = vmatmul.bf16.gmra.mxu0 %v4451
    %v5569 = vpop.f32.mrf.mxu0
    %v5570 = vpop.f32.mrf.mxu0
    %5571 = vdwg.mxu0
    %5572 = vmatpush.bf16.msra.mxu0 %v5275
    %5573 = vmatpush.bf16.msra.mxu0 %v5274
    %5574 = vmatpush.bf16.msra.mxu0 %v5273
    %5575 = vmatpush.bf16.msra.mxu0 %v5272
    %5576 = vmatpush.bf16.msra.mxu0 %v5271
    %5577 = vmatpush.bf16.msra.mxu0 %v5270
    %5578 = vmatpush.bf16.msra.mxu0 %v5269
    %5579 = vmatpush.bf16.msra.mxu0 %v5268
    %5580 = vmatmul.bf16.gmra.mxu0 %v4420
    %v5581 = vpop.f32.mrf.mxu0
    %v5582 = vadd.f32 %v5562, %v5581
    %v5583 = vpop.f32.mrf.mxu0
    %5584 = vmatmul.bf16.gmra.mxu0 %v4436
    %v5585 = vpop.f32.mrf.mxu0
    %v5586 = vadd.f32 %v5566, %v5585
    %v5587 = vpop.f32.mrf.mxu0
    %5588 = vmatmul.bf16.gmra.mxu0 %v4452
    %v5589 = vpop.f32.mrf.mxu0
    %v5590 = vpop.f32.mrf.mxu0
    %5591 = vdwg.mxu0
    %5592 = vmatpush.bf16.msra.mxu0 %v5283
    %5593 = vmatpush.bf16.msra.mxu0 %v5282
    %5594 = vmatpush.bf16.msra.mxu0 %v5281
    %5595 = vmatpush.bf16.msra.mxu0 %v5280
    %5596 = vmatpush.bf16.msra.mxu0 %v5279
    %5597 = vmatpush.bf16.msra.mxu0 %v5278
    %5598 = vmatpush.bf16.msra.mxu0 %v5277
    %5599 = vmatpush.bf16.msra.mxu0 %v5276
    %5600 = vmatmul.bf16.gmra.mxu0 %v4421
    %v5601 = vpop.f32.mrf.mxu0
    %v5602 = vadd.f32 %v5582, %v5601
    %v5603 = vpop.f32.mrf.mxu0
    %5604 = vmatmul.bf16.gmra.mxu0 %v4437
    %v5605 = vpop.f32.mrf.mxu0
    %v5606 = vadd.f32 %v5586, %v5605
    %v5607 = vpop.f32.mrf.mxu0
    %5608 = vmatmul.bf16.gmra.mxu0 %v4453
    %v5609 = vpop.f32.mrf.mxu0
    %v5610 = vpop.f32.mrf.mxu0
    %5611 = vdwg.mxu0
    %5612 = vmatpush.bf16.msra.mxu0 %v5291
    %5613 = vmatpush.bf16.msra.mxu0 %v5290
    %5614 = vmatpush.bf16.msra.mxu0 %v5289
    %5615 = vmatpush.bf16.msra.mxu0 %v5288
    %5616 = vmatpush.bf16.msra.mxu0 %v5287
    %5617 = vmatpush.bf16.msra.mxu0 %v5286
    %5618 = vmatpush.bf16.msra.mxu0 %v5285
    %5619 = vmatpush.bf16.msra.mxu0 %v5284
    %5620 = vmatmul.bf16.gmra.mxu0 %v4422
    %v5621 = vpop.f32.mrf.mxu0
    %v5622 = vadd.f32 %v5602, %v5621
    %v5623 = vpop.f32.mrf.mxu0
    %5624 = vmatmul.bf16.gmra.mxu0 %v4438
    %v5625 = vpop.f32.mrf.mxu0
    %v5626 = vadd.f32 %v5606, %v5625
    %v5627 = vpop.f32.mrf.mxu0
    %5628 = vmatmul.bf16.gmra.mxu0 %v4454
    %v5629 = vpop.f32.mrf.mxu0
    %v5630 = vpop.f32.mrf.mxu0
    %5631 = vdwg.mxu0
    %5632 = vmatpush.bf16.msra.mxu0 %v5299
    %5633 = vmatpush.bf16.msra.mxu0 %v5298
    %5634 = vmatpush.bf16.msra.mxu0 %v5297
    %5635 = vmatpush.bf16.msra.mxu0 %v5296
    %5636 = vmatpush.bf16.msra.mxu0 %v5295
    %5637 = vmatpush.bf16.msra.mxu0 %v5294
    %5638 = vmatpush.bf16.msra.mxu0 %v5293
    %5639 = vmatpush.bf16.msra.mxu0 %v5292
    %5640 = vmatmul.bf16.gmra.mxu0 %v4423
    %v5641 = vpop.f32.mrf.mxu0
    %v5642 = vadd.f32 %v5622, %v5641
    %v5643 = vpop.f32.mrf.mxu0
    %5644 = vmatmul.bf16.gmra.mxu0 %v4439
    %v5645 = vpop.f32.mrf.mxu0
    %v5646 = vadd.f32 %v5626, %v5645
    %v5647 = vpop.f32.mrf.mxu0
    %5648 = vmatmul.bf16.gmra.mxu0 %v4455
    %v5649 = vpop.f32.mrf.mxu0
    %v5650 = vpop.f32.mrf.mxu0
    %5651 = vdwg.mxu0
    %5652 = vmatpush.bf16.msra.mxu0 %v5307
    %5653 = vmatpush.bf16.msra.mxu0 %v5306
    %5654 = vmatpush.bf16.msra.mxu0 %v5305
    %5655 = vmatpush.bf16.msra.mxu0 %v5304
    %5656 = vmatpush.bf16.msra.mxu0 %v5303
    %5657 = vmatpush.bf16.msra.mxu0 %v5302
    %5658 = vmatpush.bf16.msra.mxu0 %v5301
    %5659 = vmatpush.bf16.msra.mxu0 %v5300
    %5660 = vmatmul.bf16.gmra.mxu0 %v4424
    %v5661 = vpop.f32.mrf.mxu0
    %v5662 = vadd.f32 %v5642, %v5661
    %v5663 = vpop.f32.mrf.mxu0
    %5664 = vmatmul.bf16.gmra.mxu0 %v4440
    %v5665 = vpop.f32.mrf.mxu0
    %v5666 = vadd.f32 %v5646, %v5665
    %v5667 = vpop.f32.mrf.mxu0
    %5668 = vmatmul.bf16.gmra.mxu0 %v4456
    %v5669 = vpop.f32.mrf.mxu0
    %v5670 = vpop.f32.mrf.mxu0
    %5671 = vdwg.mxu0
    %5672 = vmatpush.bf16.msra.mxu0 %v5315
    %5673 = vmatpush.bf16.msra.mxu0 %v5314
    %5674 = vmatpush.bf16.msra.mxu0 %v5313
    %5675 = vmatpush.bf16.msra.mxu0 %v5312
    %5676 = vmatpush.bf16.msra.mxu0 %v5311
    %5677 = vmatpush.bf16.msra.mxu0 %v5310
    %5678 = vmatpush.bf16.msra.mxu0 %v5309
    %5679 = vmatpush.bf16.msra.mxu0 %v5308
    %5680 = vmatmul.bf16.gmra.mxu0 %v4425
    %v5681 = vpop.f32.mrf.mxu0
    %v5682 = vadd.f32 %v5662, %v5681
    %v5683 = vpop.f32.mrf.mxu0
    %5684 = vmatmul.bf16.gmra.mxu0 %v4441
    %v5685 = vpop.f32.mrf.mxu0
    %v5686 = vadd.f32 %v5666, %v5685
    %v5687 = vpop.f32.mrf.mxu0
    %5688 = vmatmul.bf16.gmra.mxu0 %v4457
    %v5689 = vpop.f32.mrf.mxu0
    %v5690 = vpop.f32.mrf.mxu0
    %5691 = vdwg.mxu0
    %5692 = vmatpush.bf16.msra.mxu0 %v5323
    %5693 = vmatpush.bf16.msra.mxu0 %v5322
    %5694 = vmatpush.bf16.msra.mxu0 %v5321
    %5695 = vmatpush.bf16.msra.mxu0 %v5320
    %5696 = vmatpush.bf16.msra.mxu0 %v5319
    %5697 = vmatpush.bf16.msra.mxu0 %v5318
    %5698 = vmatpush.bf16.msra.mxu0 %v5317
    %5699 = vmatpush.bf16.msra.mxu0 %v5316
    %5700 = vmatmul.bf16.gmra.mxu0 %v4426
    %v5701 = vpop.f32.mrf.mxu0
    %v5702 = vadd.f32 %v5682, %v5701
    %v5703 = vpop.f32.mrf.mxu0
    %5704 = vmatmul.bf16.gmra.mxu0 %v4442
    %v5705 = vpop.f32.mrf.mxu0
    %v5706 = vadd.f32 %v5686, %v5705
    %v5707 = vpop.f32.mrf.mxu0
    %5708 = vmatmul.bf16.gmra.mxu0 %v4458
    %v5709 = vpop.f32.mrf.mxu0
    %v5710 = vpop.f32.mrf.mxu0
    %5711 = vdwg.mxu0
    %5712 = vmatpush.bf16.msra.mxu0 %v5331
    %5713 = vmatpush.bf16.msra.mxu0 %v5330
    %5714 = vmatpush.bf16.msra.mxu0 %v5329
    %5715 = vmatpush.bf16.msra.mxu0 %v5328
    %5716 = vmatpush.bf16.msra.mxu0 %v5327
    %5717 = vmatpush.bf16.msra.mxu0 %v5326
    %5718 = vmatpush.bf16.msra.mxu0 %v5325
    %5719 = vmatpush.bf16.msra.mxu0 %v5324
    %5720 = vmatmul.bf16.gmra.mxu0 %v4427
    %v5721 = vpop.f32.mrf.mxu0
    %v5722 = vadd.f32 %v5702, %v5721
    %v5723 = vpop.f32.mrf.mxu0
    %5724 = vmatmul.bf16.gmra.mxu0 %v4443
    %v5725 = vpop.f32.mrf.mxu0
    %v5726 = vadd.f32 %v5706, %v5725
    %v5727 = vpop.f32.mrf.mxu0
    %5728 = vmatmul.bf16.gmra.mxu0 %v4459
    %v5729 = vpop.f32.mrf.mxu0
    %v5730 = vpop.f32.mrf.mxu0
    %5731 = vdwg.mxu0
    %5732 = vmatpush.bf16.msra.mxu0 %v5339
    %5733 = vmatpush.bf16.msra.mxu0 %v5338
    %5734 = vmatpush.bf16.msra.mxu0 %v5337
    %5735 = vmatpush.bf16.msra.mxu0 %v5336
    %5736 = vmatpush.bf16.msra.mxu0 %v5335
    %5737 = vmatpush.bf16.msra.mxu0 %v5334
    %5738 = vmatpush.bf16.msra.mxu0 %v5333
    %5739 = vmatpush.bf16.msra.mxu0 %v5332
    %5740 = vmatmul.bf16.gmra.mxu0 %v4428
    %v5741 = vpop.f32.mrf.mxu0
    %v5742 = vadd.f32 %v5722, %v5741
    %v5743 = vpop.f32.mrf.mxu0
    %5744 = vmatmul.bf16.gmra.mxu0 %v4444
    %v5745 = vpop.f32.mrf.mxu0
    %v5746 = vadd.f32 %v5726, %v5745
    %v5747 = vpop.f32.mrf.mxu0
    %5748 = vmatmul.bf16.gmra.mxu0 %v4460
    %v5749 = vpop.f32.mrf.mxu0
    %v5750 = vpop.f32.mrf.mxu0
    %5751 = vdwg.mxu0
    %5752 = vmatpush.bf16.msra.mxu0 %v5347
    %5753 = vmatpush.bf16.msra.mxu0 %v5346
    %5754 = vmatpush.bf16.msra.mxu0 %v5345
    %5755 = vmatpush.bf16.msra.mxu0 %v5344
    %5756 = vmatpush.bf16.msra.mxu0 %v5343
    %5757 = vmatpush.bf16.msra.mxu0 %v5342
    %5758 = vmatpush.bf16.msra.mxu0 %v5341
    %5759 = vmatpush.bf16.msra.mxu0 %v5340
    %5760 = vmatmul.bf16.gmra.mxu0 %v4429
    %v5761 = vpop.f32.mrf.mxu0
    %v5762 = vadd.f32 %v5742, %v5761
    %v5763 = vpop.f32.mrf.mxu0
    %5764 = vmatmul.bf16.gmra.mxu0 %v4445
    %v5765 = vpop.f32.mrf.mxu0
    %v5766 = vadd.f32 %v5746, %v5765
    %v5767 = vpop.f32.mrf.mxu0
    %5768 = vmatmul.bf16.gmra.mxu0 %v4461
    %v5769 = vpop.f32.mrf.mxu0
    %v5770 = vpop.f32.mrf.mxu0
    %5771 = vdwg.mxu0
    %5772 = vmatpush.bf16.msra.mxu0 %v5355
    %5773 = vmatpush.bf16.msra.mxu0 %v5354
    %5774 = vmatpush.bf16.msra.mxu0 %v5353
    %5775 = vmatpush.bf16.msra.mxu0 %v5352
    %5776 = vmatpush.bf16.msra.mxu0 %v5351
    %5777 = vmatpush.bf16.msra.mxu0 %v5350
    %5778 = vmatpush.bf16.msra.mxu0 %v5349
    %5779 = vmatpush.bf16.msra.mxu0 %v5348
    %5780 = vmatmul.bf16.gmra.mxu0 %v4430
    %v5781 = vpop.f32.mrf.mxu0
    %v5782 = vadd.f32 %v5762, %v5781
    %v5783 = vpop.f32.mrf.mxu0
    %5784 = vmatmul.bf16.gmra.mxu0 %v4446
    %v5785 = vpop.f32.mrf.mxu0
    %v5786 = vadd.f32 %v5766, %v5785
    %v5787 = vpop.f32.mrf.mxu0
    %5788 = vmatmul.bf16.gmra.mxu0 %v4462
    %v5789 = vpop.f32.mrf.mxu0
    %v5790 = vpop.f32.mrf.mxu0
    %5791 = vdwg.mxu0
    %5792 = vmatpush.bf16.msra.mxu0 %v5363
    %5793 = vmatpush.bf16.msra.mxu0 %v5362
    %5794 = vmatpush.bf16.msra.mxu0 %v5361
    %5795 = vmatpush.bf16.msra.mxu0 %v5360
    %5796 = vmatpush.bf16.msra.mxu0 %v5359
    %5797 = vmatpush.bf16.msra.mxu0 %v5358
    %5798 = vmatpush.bf16.msra.mxu0 %v5357
    %5799 = vmatpush.bf16.msra.mxu0 %v5356
    %5800 = vmatmul.bf16.gmra.mxu0 %v4431
    %v5801 = vpop.f32.mrf.mxu0
    %v5802 = vadd.f32 %v5782, %v5801
    %v5803 = vpop.f32.mrf.mxu0
    %5804 = vmatmul.bf16.gmra.mxu0 %v4447
    %v5805 = vpop.f32.mrf.mxu0
    %v5806 = vadd.f32 %v5786, %v5805
    %v5807 = vpop.f32.mrf.mxu0
    %5808 = vmatmul.bf16.gmra.mxu0 %v4463
    %v5809 = vpop.f32.mrf.mxu0
    %v5810 = vpop.f32.mrf.mxu0
    %5811 = vdwg.mxu0
    %v5812 = vadd.f32 %v3723, %v5802
    %v5813 = vadd.f32 %v3725, %v5806
    %v5814 = vld [vmem:[%s57] sm:$0x1]
    %v5815 = vld [vmem:[%s59] sm:$0x1]
    %v5816 = vsel %vm227, %v5812, 0.0
    %5817 = vadd.xlane.f32.xlu0 %v5816
    %v5818 = vpop.xlane.xlu0 %5817
    %v5819 = vsel %vm227, %v5813, 0.0
    %5820 = vadd.xlane.f32.xlu0 %v5819
    %v5821 = vpop.xlane.xlu0 %5820
    %v5822 = vmul.f32 %v5818, %v736
    %v5823 = vmul.f32 %v5821, %v736
    %v5824 = vsub.f32 %v5812, %v5822
    %v5825 = vsub.f32 %v5813, %v5823
    %v5826 = vmul.f32 %v5824, %v5824
    %v5827 = vmul.f32 %v5825, %v5825
    %v5828 = vsel %vm227, %v5826, 0.0
    %5829 = vadd.xlane.f32.xlu0 %v5828
    %v5830 = vpop.xlane.xlu0 %5829
    %v5831 = vsel %vm227, %v5827, 0.0
    %5832 = vadd.xlane.f32.xlu0 %v5831
    %v5833 = vpop.xlane.xlu0 %5832
    %v5834 = vmul.f32 %v5830, %v736
    %v5835 = vmul.f32 %v5833, %v736
    %v5836 = vadd.f32 %v5834, 1e-05
    %v5837 = vadd.f32 %v5835, 1e-05
    %v5838 = vrsqrt.pop %v5836
    %v5839 = vmul.f32 %v5838, %v5836
    %v5840 = vmul.f32 %v5839, %v5838
    %v5841 = vmul.f32 0.5, %v5840
    %v5842 = vsub.f32 1.5, %v5841
    %v5843 = vmul.f32 %v5838, %v5842
    %vm5844 = vweird.f32 %v5836
    %vm5845 = vweird.f32 %v5838
    %vm5846 = vmor %vm5844, %vm5845
    %v5847 = vsel %vm5846, %v5838, %v5843
    %v5848 = vrsqrt.pop %v5837
    %v5849 = vmul.f32 %v5848, %v5837
    %v5850 = vmul.f32 %v5849, %v5848
    %v5851 = vmul.f32 0.5, %v5850
    %v5852 = vsub.f32 1.5, %v5851
    %v5853 = vmul.f32 %v5848, %v5852
    %vm5854 = vweird.f32 %v5837
    %vm5855 = vweird.f32 %v5848
    %vm5856 = vmor %vm5854, %vm5855
    %v5857 = vsel %vm5856, %v5848, %v5853
    %v5858 = vmul.f32 %v5824, %v5847
    %v5859 = vmul.f32 %v5825, %v5857
    %v5861 = vperm.slane %v5814, 0
    %v5863 = vmul.f32 %v5858, %v5861
    %v5864 = vmul.f32 %v5859, %v5861
    %v5866 = vperm.slane %v5815, 0
    %v5868 = vadd.f32 %v5863, %v5866
    %v5869 = vadd.f32 %v5864, %v5866
    %v5870 = vsel %vm278, %v5868, %v5869
    %v5871 = vld [vmem:[%s61] sm:$0x1]
    %v5872 = vld [vmem:[%s63] sm:$0x1]
    %v5873 = vsel %vm726, %v5870, 0.0
    %5874 = vadd.xlane.f32.xlu0 %v5873
    %v5875 = vpop.xlane.xlu0 %5874
    %v5876 = vmul.f32 %v5875, %v736
    %v5877 = vsub.f32 %v5870, %v5876
    %v5878 = vmul.f32 %v5877, %v5877
    %v5879 = vsel %vm726, %v5878, 0.0
    %5880 = vadd.xlane.f32.xlu0 %v5879
    %v5881 = vpop.xlane.xlu0 %5880
    %v5882 = vmul.f32 %v5881, %v736
    %v5883 = vadd.f32 %v5882, 1e-05
    %v5884 = vrsqrt.pop %v5883
    %v5885 = vmul.f32 %v5884, %v5883
    %v5886 = vmul.f32 %v5885, %v5884
    %v5887 = vmul.f32 0.5, %v5886
    %v5888 = vsub.f32 1.5, %v5887
    %v5889 = vmul.f32 %v5884, %v5888
    %vm5890 = vweird.f32 %v5883
    %vm5891 = vweird.f32 %v5884
    %vm5892 = vmor %vm5890, %vm5891
    %v5893 = vsel %vm5892, %v5884, %v5889
    %v5894 = vmul.f32 %v5877, %v5893
    %v5896 = vperm.slane %v5871, 0
    %v5898 = vmul.f32 %v5894, %v5896
    %v5900 = vperm.slane %v5872, 0
    %v5902 = vadd.f32 %v5898, %v5900
    %v5903 = vld [vmem:[%s65] sm:$0xff]
    %v5904 = vld [vmem:[%s65 + $0x8] sm:$0xff]
    %v5905 = vld [vmem:[%s65 + $0x10] sm:$0xff]
    %v5906 = vld [vmem:[%s65 + $0x18] sm:$0xff]
    %v5907 = vld [vmem:[%s67] sm:$0x1]
    %v5909 = vperm.slane %v5907, 0
    %v5912 = vsel %vm227, %v5902, 0
    %5914 = vmatpush.msra.mxu0 0.0
    %5915 = vmatpush.msra.mxu0 0.0
    %5916 = vmatpush.msra.mxu0 0.0
    %5917 = vmatpush.msra.mxu0 0.0
    %5918 = vmatpush.msra.mxu0 0.0
    %5919 = vmatpush.msra.mxu0 0.0
    %5920 = vmatpush.msra.mxu0 0.0
    %5921 = vmatpush.msra.mxu0 0.0
    %5922 = vmatpush.msra.mxu0 0.0
    %5923 = vmatpush.msra.mxu0 0.0
    %5924 = vmatpush.msra.mxu0 0.0
    %5925 = vmatpush.msra.mxu0 0.0
    %5926 = vmatpush.msra.mxu0 %v5906
    %5927 = vmatpush.msra.mxu0 %v5905
    %5928 = vmatpush.msra.mxu0 %v5904
    %5929 = vmatpush.msra.mxu0 %v5903
    %5930 = vmatmul.f32.gmra.mxu0 %v5912
    %v5931 = vpop.f32.mrf.mxu0
    %v5932 = vadd.f32 %v5909, %v5931
    %5933 = vdwg.mxu0
    %vm5934 = vcmask 74752
    %5935 = vst.msk [vmem:[#allocation2] sm:$0x3] %vm5934, %v5932
    // Predicated region
    $region138: #{vit_forward.1} parent=1 // pred_check
      _
    $region139: #{vit_forward.1} parent=1 // pred_check_branch
      %5937 = sbr.rel (0) target = $region141
    $region140: #{vit_forward.1} parent=1 // pred_region
      %5939 = vsyncadd [#allocation3], 0
      %s5941 = sshll.u32 [#allocation2], 4
      %s5942 = int_to_ptr.vmem [resolvable:$true] %s5941
      %s5943 = sshll.u32 %s69, 4
      %s5944 = int_to_ptr.hbm [resolvable:$true] %s5943
      %5946 = dma.vmem_to_hbm [thread:$0]  %s5942, 32, %s5944, [#allocation3]
    $region141: #{vit_forward.1} parent=1 // pred_fallthru
      _
    // Predicated region
    $region142: #{vit_forward.1} parent=1 // pred_check
      _
    $region143: #{vit_forward.1} parent=1 // pred_check_branch
      %5948 = sbr.rel (0) target = $region145
    $region144: #{vit_forward.1} parent=1 // pred_region
      %5950 = dma.done [#allocation3], 32
    $region145: #{vit_forward.1} parent=1 // pred_fallthru
      _
    %5951 = vsyncpa [#allocation3], 1

</llo_original>
